<compile_context>
chip_gen: v7x
topology: tpu7x:2x2x1
jax: 0.10.0
libtpu: 0.0.40
codegen_flags: <defaults>
</compile_context>

<pallas_src>
import functools

import jax
import jax.numpy as jnp
import numpy as np
from jax.experimental import pallas as pl
from jax.experimental.pallas import tpu as pltpu


# ---------------------------------------------------------------------------
# helpers
# ---------------------------------------------------------------------------
def _lstm_nonlin(gates, c, nh):
    """PyTorch gate order i, f, g, o; gate blocks are nh wide."""
    i = jax.nn.sigmoid(gates[:, 0 * nh:1 * nh])
    f = jax.nn.sigmoid(gates[:, 1 * nh:2 * nh])
    g = jnp.tanh(gates[:, 2 * nh:3 * nh])
    o = jax.nn.sigmoid(gates[:, 3 * nh:4 * nh])
    c_new = f * c + i * g
    return o * jnp.tanh(c_new), c_new


def _interleave_gates(wf, wr, hid):
    """[i f g o] blocks of fwd/rev -> [i_f i_r f_f f_r g_f g_r o_f o_r]."""
    parts = []
    for g in range(4):
        parts.append(wf[..., g * hid:(g + 1) * hid])
        parts.append(wr[..., g * hid:(g + 1) * hid])
    return jnp.concatenate(parts, axis=-1)


# ---------------------------------------------------------------------------
# Pallas kernel: fused bidirectional LSTM encoder + attention LSTMCell decoder
# + batched generator projection, all resident in VMEM (shapes are small).
# ---------------------------------------------------------------------------
def recognizer_kernel(feat_comb_ref, oh_ref,
                      wih_comb_ref, whh_comb_ref, b_comb_ref,
                      wi2h_ref, bh2h_ref, wscore_ref,
                      wcih_feat_ref, wcih_oh_ref, bc_ref,
                      wh_comb_ref, wgen_ref, bgen_ref,
                      probs_ref, enc_ref,
                      *, B, T):
    f32 = jnp.float32
    D = wi2h_ref.shape[0]            # encoder output width = 2 * hid
    H = wi2h_ref.shape[1]            # decoder hidden size
    hid = D // 2
    S = oh_ref.shape[0] // B         # num_steps

    # -------------------- biLSTM encoder (fwd + rev fused) --------------------
    # Carry-independent input projection for BOTH directions, hoisted out of
    # the recurrence (one matmul, biases folded in).  Gate columns are
    # interleaved [i_f i_r | f_f f_r | g_f g_r | o_f o_r].
    in_gates = (jnp.dot(feat_comb_ref[...], wih_comb_ref[...],
                        preferred_element_type=f32)
                + b_comb_ref[...])                           # (B*T, 8*hid)
    whh_comb = whh_comb_ref[...]                             # (2*hid, 8*hid)

    h_fr = jnp.zeros((T, 2 * hid), f32)                      # [h_f | h_r]
    c_fr = jnp.zeros((T, 2 * hid), f32)
    # B is the time extent of the (no-batch_first) nn.LSTM; fully unrolled.
    for s in range(B):
        g = in_gates[s * T:(s + 1) * T, :] + jnp.dot(
            h_fr, whh_comb, preferred_element_type=f32)      # (T, 8*hid)
        h_fr, c_fr = _lstm_nonlin(g, c_fr, 2 * hid)
        # fwd half belongs to time s, rev half to time B-1-s.
        enc_ref[s * T:(s + 1) * T, 0:hid] = h_fr[:, 0:hid]
        tr = B - 1 - s
        enc_ref[tr * T:(tr + 1) * T, hid:D] = h_fr[:, hid:2 * hid]

    feat_enc = enc_ref[...]                                  # (B*T, D)

    # -------------------- hoisted decoder precomputes -------------------------
    # b_h2h folded into feat_proj (constant inside tanh across steps).
    feat_proj = (jnp.dot(feat_enc, wi2h_ref[...], preferred_element_type=f32)
                 + bh2h_ref[...]).reshape(B, T, H)           # (B, T, H)
    # feat_enc @ w_c_ih[:, :D].T  -> per-step context gates become a small
    # batched matmul against alpha (MXU), no per-step big VPU reduce.
    feat_gates = jnp.dot(feat_enc, wcih_feat_ref[...],
                         preferred_element_type=f32).reshape(B, T, 4 * H)
    # onehot contribution (+ LSTMCell biases) for all steps at once.
    oh_gates = (jnp.dot(oh_ref[...], wcih_oh_ref[...],
                        preferred_element_type=f32) + bc_ref[...])  # (S*B, 4H)
    # loop-invariant broadcasts hoisted (JAX does not CSE broadcast_in_dim).
    wscore_b = jnp.broadcast_to(wscore_ref[...].reshape(1, 1, H), (B, T, H))
    wh_comb = wh_comb_ref[...]                               # (H, 5H) = [w_c_hh.T | w_h2h.T]

    # -------------------- attention decoder (fully unrolled) ------------------
    h = jnp.zeros((B, H), f32)
    c = jnp.zeros((B, H), f32)
    h_steps = []
    for i in range(S):
        # single recurrent matmul per step: LSTMCell h-gates and h2h proj fused
        hh = jnp.dot(h, wh_comb, preferred_element_type=f32)  # (B, 5H)
        gates_hh = hh[:, :4 * H]
        prev_proj = hh[:, 4 * H:]
        tanh_in = jnp.tanh(feat_proj + prev_proj[:, None, :])  # (B, T, H)
        # score projection (width 1) as multiply + lane reduce
        e = jnp.sum(tanh_in * wscore_b, axis=-1)               # (B, T)
        e_max = jnp.max(e, axis=-1, keepdims=True)
        pexp = jnp.exp(e - e_max)
        alpha = pexp / jnp.sum(pexp, axis=-1, keepdims=True)   # (B, T) exact softmax
        # context gates via batched matmul (MXU is otherwise idle here)
        ctx_gates = jnp.einsum('bqt,btg->bqg', alpha[:, None, :], feat_gates,
                               preferred_element_type=f32)[:, 0, :]   # (B, 4H)
        gates = ctx_gates + oh_gates[i * B:(i + 1) * B, :] + gates_hh
        h, c = _lstm_nonlin(gates, c, H)
        h_steps.append(h)

    # batched generator: one matmul + one contiguous store (off the carry path)
    h_all = jnp.concatenate(h_steps, axis=0)                   # (S*B, H)
    probs_ref[...] = (jnp.dot(h_all, wgen_ref[...], preferred_element_type=f32)
                      + bgen_ref[...])                         # (S*B, n_class)


# ---------------------------------------------------------------------------
# parameter init (deterministic, synthetic)
# ---------------------------------------------------------------------------
def init_params(key, input_size, hidden_size, n_class):
    D, H = input_size, hidden_size
    hid = D // 2
    ks = jax.random.split(key, 18)

    def u(k, shape, fan_in):
        bound = 1.0 / float(np.sqrt(fan_in))
        return jax.random.uniform(k, shape, jnp.float32, -bound, bound)

    return dict(
        # bilstm forward direction
        w_ih_f=u(ks[0], (4 * hid, D), D),
        w_hh_f=u(ks[1], (4 * hid, hid), hid),
        b_ih_f=u(ks[2], (4 * hid,), hid),
        b_hh_f=u(ks[3], (4 * hid,), hid),
        # bilstm reverse direction
        w_ih_r=u(ks[4], (4 * hid, D), D),
        w_hh_r=u(ks[5], (4 * hid, hid), hid),
        b_ih_r=u(ks[6], (4 * hid,), hid),
        b_hh_r=u(ks[7], (4 * hid,), hid),
        # attention cell
        w_i2h=u(ks[8], (H, D), D),                       # Linear(D, H, bias=False)
        w_h2h=u(ks[9], (H, H), H),                       # Linear(H, H)
        b_h2h=u(ks[10], (H,), H),
        w_score=u(ks[11], (1, H), H),                    # Linear(H, 1, bias=False)
        w_c_ih=u(ks[12], (4 * H, D + n_class), D + n_class),   # LSTMCell
        w_c_hh=u(ks[13], (4 * H, H), H),
        b_c_ih=u(ks[14], (4 * H,), H),
        b_c_hh=u(ks[15], (4 * H,), H),
        # generator
        w_gen=u(ks[16], (n_class, H), H),
        b_gen=u(ks[17], (n_class,), H),
    )


# ---------------------------------------------------------------------------
# wrapper: glue (one-hot, reshapes, weight fusion/interleaving) in plain JAX,
# compute in the Pallas kernel.
# ---------------------------------------------------------------------------
@functools.partial(jax.jit, static_argnames=("max_len", "n_class"))
def recognizer_forward(feat_ct, text, params, *, max_len, n_class):
    B, T, D = feat_ct.shape            # biLSTM time axis = axis 0 (= B), batch = T
    hid = D // 2
    num_steps = max_len + 1
    f32 = jnp.float32
    p = params

    feat_ct = feat_ct.astype(f32)

    # one-hot of teacher-forcing tokens, step-major -> (S*B, n_class)
    onehots = jax.nn.one_hot(text[:, :num_steps], n_class, dtype=f32)    # (B, S, nc)
    onehots = jnp.transpose(onehots, (1, 0, 2)).reshape(num_steps * B, n_class)

    # fused fwd/rev biLSTM weights: gate columns [i_f i_r f_f f_r g_f g_r o_f o_r]
    zih = jnp.zeros((D, 4 * hid), f32)
    wih_comb = jnp.concatenate(
        [_interleave_gates(p["w_ih_f"].T, zih, hid),
         _interleave_gates(zih, p["w_ih_r"].T, hid)], axis=0)            # (2D, 8*hid)
    zhh = jnp.zeros((hid, 4 * hid), f32)
    whh_comb = jnp.concatenate(
        [_interleave_gates(p["w_hh_f"].T, zhh, hid),
         _interleave_gates(zhh, p["w_hh_r"].T, hid)], axis=0)            # (2*hid, 8*hid)
    b_comb = _interleave_gates((p["b_ih_f"] + p["b_hh_f"])[None, :],
                               (p["b_ih_r"] + p["b_hh_r"])[None, :], hid)  # (1, 8*hid)

    # reverse direction consumes the time-reversed (axis-0) sequence
    # NOTE: T should be a multiple of 8 for perfectly aligned per-step slices.
    feat_f = feat_ct.reshape(B * T, D)
    feat_r = jnp.flip(feat_ct, axis=0).reshape(B * T, D)
    feat_comb = jnp.concatenate([feat_f, feat_r], axis=1)                # (B*T, 2D)

    # decoder: fused recurrent weight slab [w_c_hh.T | w_h2h.T]
    wh_comb = jnp.concatenate([p["w_c_hh"].T, p["w_h2h"].T], axis=1)     # (H, 5H)

    args = (
        feat_comb, onehots,
        wih_comb, whh_comb, b_comb,
        p["w_i2h"].T, p["b_h2h"][None, :], p["w_score"],
        p["w_c_ih"].T[:D, :], p["w_c_ih"].T[D:, :],
        (p["b_c_ih"] + p["b_c_hh"])[None, :],
        wh_comb,
        p["w_gen"].T, p["b_gen"][None, :],
    )

    vmem = pl.BlockSpec(memory_space=pltpu.MemorySpace.VMEM)
    probs2d = pl.pallas_call(
        functools.partial(recognizer_kernel, B=B, T=T),
        out_shape=jax.ShapeDtypeStruct((num_steps * B, n_class), f32),
        in_specs=[vmem] * len(args),
        out_specs=vmem,
        scratch_shapes=[pltpu.VMEM((B * T, D), f32)],     # feat_enc scratch
    )(*args)

    # step-major (S*B, nc) -> (B, S, nc); free at the XLA boundary.
    return jnp.transpose(probs2d.reshape(num_steps, B, n_class), (1, 0, 2))


# ---------------------------------------------------------------------------
# pure-JAX reference (mirrors the PyTorch forward, is_train=True)
# ---------------------------------------------------------------------------
def recognizer_reference(feat_ct, text, p, *, max_len, n_class):
    B, T, D = feat_ct.shape
    hid = D // 2
    H = p["w_h2h"].shape[0]
    num_steps = max_len + 1

    def cell(x, h, c, w_ih, w_hh, b_ih, b_hh):
        gates = x @ w_ih.T + b_ih + h @ w_hh.T + b_hh
        hd = h.shape[-1]
        i = jax.nn.sigmoid(gates[:, :hd])
        f = jax.nn.sigmoid(gates[:, hd:2 * hd])
        g = jnp.tanh(gates[:, 2 * hd:3 * hd])
        o = jax.nn.sigmoid(gates[:, 3 * hd:])
        c = f * c + i * g
        return o * jnp.tanh(c), c

    # biLSTM over axis 0 (PyTorch default: no batch_first)
    hF = jnp.zeros((T, hid)); cF = jnp.zeros((T, hid))
    fwd = []
    for t in range(B):
        hF, cF = cell(feat_ct[t], hF, cF, p["w_ih_f"], p["w_hh_f"],
                      p["b_ih_f"], p["b_hh_f"])
        fwd.append(hF)
    hR = jnp.zeros((T, hid)); cR = jnp.zeros((T, hid))
    rev = [None] * B
    for t in range(B - 1, -1, -1):
        hR, cR = cell(feat_ct[t], hR, cR, p["w_ih_r"], p["w_hh_r"],
                      p["b_ih_r"], p["b_hh_r"])
        rev[t] = hR
    feat_enc = jnp.concatenate([jnp.stack(fwd), jnp.stack(rev)], axis=-1)

    h = jnp.zeros((B, H)); c = jnp.zeros((B, H))
    probs = []
    for i in range(num_steps):
        oh = jax.nn.one_hot(text[:, i], n_class, dtype=jnp.float32)
        fp = feat_enc @ p["w_i2h"].T                                  # (B,T,H)
        pp = h @ p["w_h2h"].T + p["b_h2h"]                            # (B,H)
        e = jnp.tanh(fp + pp[:, None, :]) @ p["w_score"].T            # (B,T,1)
        alpha = jax.nn.softmax(e, axis=1)
        ctx = jnp.sum(alpha * feat_enc, axis=1)                       # (B,D)
        concat = jnp.concatenate([ctx, oh], axis=1)
        h, c = cell(concat, h, c, p["w_c_ih"], p["w_c_hh"],
                    p["b_c_ih"], p["b_c_hh"])
        probs.append(h @ p["w_gen"].T + p["b_gen"])
    return jnp.stack(probs, axis=1)


if __name__ == "__main__":
    # small shapes consistent with the module (scaled-down Recognizer)
    B, T = 2, 8               # batch, num encoder steps
    input_size = 32           # D (must be even: bilstm hidden = D // 2)
    hidden_size = 32          # H
    n_class = 16
    max_len = 7               # num_steps = max_len + 1 = 8

    key = jax.random.PRNGKey(0)
    k_feat, k_text, k_par = jax.random.split(key, 3)

    feat_ct = jax.random.normal(k_feat, (B, T, input_size), jnp.float32)
    text = jax.random.randint(k_text, (B, max_len + 1), 0, n_class, jnp.int32)
    params = init_params(k_par, input_size, hidden_size, n_class)

    probs = recognizer_forward(feat_ct, text, params,
                               max_len=max_len, n_class=n_class)
    probs = jax.block_until_ready(probs)

    ref = recognizer_reference(feat_ct, text, params,
                               max_len=max_len, n_class=n_class)
    np.testing.assert_allclose(np.asarray(probs), np.asarray(ref),
                               rtol=2e-3, atol=2e-3)
    assert probs.shape == (B, max_len + 1, n_class)

    print("KERNEL_OK")
</pallas_src>

<mosaic_0001>
module attributes {stable_mosaic.version = 11 : i64} {
  func.func @recognizer_kernel(%arg0: memref<16x64xf32, #tpu.memory_space<vmem>>, %arg1: memref<16x16xf32, #tpu.memory_space<vmem>>, %arg2: memref<64x128xf32, #tpu.memory_space<vmem>>, %arg3: memref<32x128xf32, #tpu.memory_space<vmem>>, %arg4: memref<1x128xf32, #tpu.memory_space<vmem>>, %arg5: memref<32x32xf32, #tpu.memory_space<vmem>>, %arg6: memref<1x32xf32, #tpu.memory_space<vmem>>, %arg7: memref<1x32xf32, #tpu.memory_space<vmem>>, %arg8: memref<32x128xf32, #tpu.memory_space<vmem>>, %arg9: memref<16x128xf32, #tpu.memory_space<vmem>>, %arg10: memref<1x128xf32, #tpu.memory_space<vmem>>, %arg11: memref<32x160xf32, #tpu.memory_space<vmem>>, %arg12: memref<32x16xf32, #tpu.memory_space<vmem>>, %arg13: memref<1x16xf32, #tpu.memory_space<vmem>>, %arg14: memref<16x16xf32, #tpu.memory_space<vmem>>, %arg15: memref<16x32xf32, #tpu.memory_space<vmem>>) attributes {dimension_semantics = [], scalar_prefetch = 0 : i64, scratch_operands = 1 : i64, tpu.core_type = #tpu.core_type<tc>} {
    %c0 = arith.constant 0 : index
    %c0_0 = arith.constant 0 : index
    %0 = vector.load %arg0[%c0, %c0_0] : memref<16x64xf32, #tpu.memory_space<vmem>>, vector<16x64xf32>
    %c0_1 = arith.constant 0 : index
    %c0_2 = arith.constant 0 : index
    %1 = vector.load %arg2[%c0_1, %c0_2] : memref<64x128xf32, #tpu.memory_space<vmem>>, vector<64x128xf32>
    %cst = arith.constant dense<0.000000e+00> : vector<16x128xf32>
    %2 = tpu.matmul %0, %1, %cst {dimension_numbers = #tpu.dot_dimension_numbers<[1], [0], [0], [1], [0, 0, 1, 1], [], []>} : vector<16x64xf32>, vector<64x128xf32>, vector<16x128xf32> -> vector<16x128xf32>
    %c0_3 = arith.constant 0 : index
    %c0_4 = arith.constant 0 : index
    %3 = vector.load %arg4[%c0_3, %c0_4] : memref<1x128xf32, #tpu.memory_space<vmem>>, vector<1x128xf32>
    %4 = vector.broadcast %3 : vector<1x128xf32> to vector<16x128xf32>
    %5 = arith.addf %2, %4 : vector<16x128xf32>
    %c0_5 = arith.constant 0 : index
    %c0_6 = arith.constant 0 : index
    %6 = vector.load %arg3[%c0_5, %c0_6] : memref<32x128xf32, #tpu.memory_space<vmem>>, vector<32x128xf32>
    %cst_7 = arith.constant 0.000000e+00 : f32
    %7 = vector.broadcast %cst_7 : f32 to vector<8x32xf32>
    %cst_8 = arith.constant 0.000000e+00 : f32
    %8 = vector.broadcast %cst_8 : f32 to vector<8x32xf32>
    %9 = vector.extract_strided_slice %5 {offsets = [0, 0], sizes = [8, 128], strides = [1, 1]} : vector<16x128xf32> to vector<8x128xf32>
    %cst_9 = arith.constant dense<0.000000e+00> : vector<8x128xf32>
    %10 = tpu.matmul %7, %6, %cst_9 {dimension_numbers = #tpu.dot_dimension_numbers<[1], [0], [0], [1], [0, 0, 1, 1], [], []>} : vector<8x32xf32>, vector<32x128xf32>, vector<8x128xf32> -> vector<8x128xf32>
    %11 = arith.addf %9, %10 : vector<8x128xf32>
    %12 = vector.extract_strided_slice %11 {offsets = [0, 0], sizes = [8, 32], strides = [1, 1]} : vector<8x128xf32> to vector<8x32xf32>
    %13 = arith.negf %12 : vector<8x32xf32>
    %14 = math.exp %13 : vector<8x32xf32>
    %cst_10 = arith.constant 1.000000e+00 : f32
    %15 = vector.broadcast %cst_10 : f32 to vector<8x32xf32>
    %16 = arith.addf %15, %14 : vector<8x32xf32>
    %17 = arith.divf %15, %16 : vector<8x32xf32>
    %18 = vector.extract_strided_slice %11 {offsets = [0, 32], sizes = [8, 32], strides = [1, 1]} : vector<8x128xf32> to vector<8x32xf32>
    %19 = arith.negf %18 : vector<8x32xf32>
    %20 = math.exp %19 : vector<8x32xf32>
    %cst_11 = arith.constant 1.000000e+00 : f32
    %21 = vector.broadcast %cst_11 : f32 to vector<8x32xf32>
    %22 = arith.addf %21, %20 : vector<8x32xf32>
    %23 = arith.divf %21, %22 : vector<8x32xf32>
    %24 = vector.extract_strided_slice %11 {offsets = [0, 64], sizes = [8, 32], strides = [1, 1]} : vector<8x128xf32> to vector<8x32xf32>
    %25 = math.tanh %24 : vector<8x32xf32>
    %26 = vector.extract_strided_slice %11 {offsets = [0, 96], sizes = [8, 32], strides = [1, 1]} : vector<8x128xf32> to vector<8x32xf32>
    %27 = arith.negf %26 : vector<8x32xf32>
    %28 = math.exp %27 : vector<8x32xf32>
    %cst_12 = arith.constant 1.000000e+00 : f32
    %29 = vector.broadcast %cst_12 : f32 to vector<8x32xf32>
    %30 = arith.addf %29, %28 : vector<8x32xf32>
    %31 = arith.divf %29, %30 : vector<8x32xf32>
    %32 = arith.mulf %23, %8 : vector<8x32xf32>
    %33 = arith.mulf %17, %25 : vector<8x32xf32>
    %34 = arith.addf %32, %33 : vector<8x32xf32>
    %35 = math.tanh %34 : vector<8x32xf32>
    %36 = arith.mulf %31, %35 : vector<8x32xf32>
    %37 = vector.extract_strided_slice %36 {offsets = [0, 0], sizes = [8, 16], strides = [1, 1]} : vector<8x32xf32> to vector<8x16xf32>
    %c0_13 = arith.constant 0 : index
    %c0_14 = arith.constant 0 : index
    %38 = vector.load %arg15[%c0_13, %c0_14] : memref<16x32xf32, #tpu.memory_space<vmem>>, vector<8x16xf32>
    tpu.vector_store %arg15[%c0_13, %c0_14], %37 {strides = array<i32>} : memref<16x32xf32, #tpu.memory_space<vmem>>, vector<8x16xf32>,
    %39 = vector.extract_strided_slice %36 {offsets = [0, 16], sizes = [8, 16], strides = [1, 1]} : vector<8x32xf32> to vector<8x16xf32>
    %c8 = arith.constant 8 : index
    %c16 = arith.constant 16 : index
    %40 = vector.load %arg15[%c8, %c16] : memref<16x32xf32, #tpu.memory_space<vmem>>, vector<8x16xf32>
    tpu.vector_store %arg15[%c8, %c16], %39 {strides = array<i32>} : memref<16x32xf32, #tpu.memory_space<vmem>>, vector<8x16xf32>,
    %41 = vector.extract_strided_slice %5 {offsets = [8, 0], sizes = [8, 128], strides = [1, 1]} : vector<16x128xf32> to vector<8x128xf32>
    %cst_15 = arith.constant dense<0.000000e+00> : vector<8x128xf32>
    %42 = tpu.matmul %36, %6, %cst_15 {dimension_numbers = #tpu.dot_dimension_numbers<[1], [0], [0], [1], [0, 0, 1, 1], [], []>} : vector<8x32xf32>, vector<32x128xf32>, vector<8x128xf32> -> vector<8x128xf32>
    %43 = arith.addf %41, %42 : vector<8x128xf32>
    %44 = vector.extract_strided_slice %43 {offsets = [0, 0], sizes = [8, 32], strides = [1, 1]} : vector<8x128xf32> to vector<8x32xf32>
    %45 = arith.negf %44 : vector<8x32xf32>
    %46 = math.exp %45 : vector<8x32xf32>
    %cst_16 = arith.constant 1.000000e+00 : f32
    %47 = vector.broadcast %cst_16 : f32 to vector<8x32xf32>
    %48 = arith.addf %47, %46 : vector<8x32xf32>
    %49 = arith.divf %47, %48 : vector<8x32xf32>
    %50 = vector.extract_strided_slice %43 {offsets = [0, 32], sizes = [8, 32], strides = [1, 1]} : vector<8x128xf32> to vector<8x32xf32>
    %51 = arith.negf %50 : vector<8x32xf32>
    %52 = math.exp %51 : vector<8x32xf32>
    %cst_17 = arith.constant 1.000000e+00 : f32
    %53 = vector.broadcast %cst_17 : f32 to vector<8x32xf32>
    %54 = arith.addf %53, %52 : vector<8x32xf32>
    %55 = arith.divf %53, %54 : vector<8x32xf32>
    %56 = vector.extract_strided_slice %43 {offsets = [0, 64], sizes = [8, 32], strides = [1, 1]} : vector<8x128xf32> to vector<8x32xf32>
    %57 = math.tanh %56 : vector<8x32xf32>
    %58 = vector.extract_strided_slice %43 {offsets = [0, 96], sizes = [8, 32], strides = [1, 1]} : vector<8x128xf32> to vector<8x32xf32>
    %59 = arith.negf %58 : vector<8x32xf32>
    %60 = math.exp %59 : vector<8x32xf32>
    %cst_18 = arith.constant 1.000000e+00 : f32
    %61 = vector.broadcast %cst_18 : f32 to vector<8x32xf32>
    %62 = arith.addf %61, %60 : vector<8x32xf32>
    %63 = arith.divf %61, %62 : vector<8x32xf32>
    %64 = arith.mulf %55, %34 : vector<8x32xf32>
    %65 = arith.mulf %49, %57 : vector<8x32xf32>
    %66 = arith.addf %64, %65 : vector<8x32xf32>
    %67 = math.tanh %66 : vector<8x32xf32>
    %68 = arith.mulf %63, %67 : vector<8x32xf32>
    %69 = vector.extract_strided_slice %68 {offsets = [0, 0], sizes = [8, 16], strides = [1, 1]} : vector<8x32xf32> to vector<8x16xf32>
    %c8_19 = arith.constant 8 : index
    %c0_20 = arith.constant 0 : index
    %70 = vector.load %arg15[%c8_19, %c0_20] : memref<16x32xf32, #tpu.memory_space<vmem>>, vector<8x16xf32>
    tpu.vector_store %arg15[%c8_19, %c0_20], %69 {strides = array<i32>} : memref<16x32xf32, #tpu.memory_space<vmem>>, vector<8x16xf32>,
    %71 = vector.extract_strided_slice %68 {offsets = [0, 16], sizes = [8, 16], strides = [1, 1]} : vector<8x32xf32> to vector<8x16xf32>
    %c0_21 = arith.constant 0 : index
    %c16_22 = arith.constant 16 : index
    %72 = vector.load %arg15[%c0_21, %c16_22] : memref<16x32xf32, #tpu.memory_space<vmem>>, vector<8x16xf32>
    tpu.vector_store %arg15[%c0_21, %c16_22], %71 {strides = array<i32>} : memref<16x32xf32, #tpu.memory_space<vmem>>, vector<8x16xf32>,
    %c0_23 = arith.constant 0 : index
    %c0_24 = arith.constant 0 : index
    %73 = vector.load %arg15[%c0_23, %c0_24] : memref<16x32xf32, #tpu.memory_space<vmem>>, vector<16x32xf32>
    %c0_25 = arith.constant 0 : index
    %c0_26 = arith.constant 0 : index
    %74 = vector.load %arg5[%c0_25, %c0_26] : memref<32x32xf32, #tpu.memory_space<vmem>>, vector<32x32xf32>
    %cst_27 = arith.constant dense<0.000000e+00> : vector<16x32xf32>
    %75 = tpu.matmul %73, %74, %cst_27 {dimension_numbers = #tpu.dot_dimension_numbers<[1], [0], [0], [1], [0, 0, 1, 1], [], []>} : vector<16x32xf32>, vector<32x32xf32>, vector<16x32xf32> -> vector<16x32xf32>
    %c0_28 = arith.constant 0 : index
    %c0_29 = arith.constant 0 : index
    %76 = vector.load %arg6[%c0_28, %c0_29] : memref<1x32xf32, #tpu.memory_space<vmem>>, vector<1x32xf32>
    %77 = vector.broadcast %76 : vector<1x32xf32> to vector<16x32xf32>
    %78 = arith.addf %75, %77 : vector<16x32xf32>
    %79 = vector.shape_cast %78 : vector<16x32xf32> to vector<2x8x32xf32>
    %c0_30 = arith.constant 0 : index
    %c0_31 = arith.constant 0 : index
    %80 = vector.load %arg8[%c0_30, %c0_31] : memref<32x128xf32, #tpu.memory_space<vmem>>, vector<32x128xf32>
    %cst_32 = arith.constant dense<0.000000e+00> : vector<16x128xf32>
    %81 = tpu.matmul %73, %80, %cst_32 {dimension_numbers = #tpu.dot_dimension_numbers<[1], [0], [0], [1], [0, 0, 1, 1], [], []>} : vector<16x32xf32>, vector<32x128xf32>, vector<16x128xf32> -> vector<16x128xf32>
    %82 = vector.shape_cast %81 : vector<16x128xf32> to vector<2x8x128xf32>
    %c0_33 = arith.constant 0 : index
    %c0_34 = arith.constant 0 : index
    %83 = vector.load %arg1[%c0_33, %c0_34] : memref<16x16xf32, #tpu.memory_space<vmem>>, vector<16x16xf32>
    %c0_35 = arith.constant 0 : index
    %c0_36 = arith.constant 0 : index
    %84 = vector.load %arg9[%c0_35, %c0_36] : memref<16x128xf32, #tpu.memory_space<vmem>>, vector<16x128xf32>
    %cst_37 = arith.constant dense<0.000000e+00> : vector<16x128xf32>
    %85 = tpu.matmul %83, %84, %cst_37 {dimension_numbers = #tpu.dot_dimension_numbers<[1], [0], [0], [1], [0, 0, 1, 1], [], []>} : vector<16x16xf32>, vector<16x128xf32>, vector<16x128xf32> -> vector<16x128xf32>
    %c0_38 = arith.constant 0 : index
    %c0_39 = arith.constant 0 : index
    %86 = vector.load %arg10[%c0_38, %c0_39] : memref<1x128xf32, #tpu.memory_space<vmem>>, vector<1x128xf32>
    %87 = vector.broadcast %86 : vector<1x128xf32> to vector<16x128xf32>
    %88 = arith.addf %85, %87 : vector<16x128xf32>
    %c0_40 = arith.constant 0 : index
    %c0_41 = arith.constant 0 : index
    %89 = vector.load %arg7[%c0_40, %c0_41] : memref<1x32xf32, #tpu.memory_space<vmem>>, vector<1x32xf32>
    %90 = vector.shape_cast %89 : vector<1x32xf32> to vector<1x1x32xf32>
    %91 = vector.shape_cast %90 : vector<1x1x32xf32> to vector<1x1x32xf32>
    %92 = vector.broadcast %91 : vector<1x1x32xf32> to vector<2x8x32xf32>
    %c0_42 = arith.constant 0 : index
    %c0_43 = arith.constant 0 : index
    %93 = vector.load %arg11[%c0_42, %c0_43] : memref<32x160xf32, #tpu.memory_space<vmem>>, vector<32x160xf32>
    %cst_44 = arith.constant 0.000000e+00 : f32
    %94 = vector.broadcast %cst_44 : f32 to vector<2x32xf32>
    %cst_45 = arith.constant 0.000000e+00 : f32
    %95 = vector.broadcast %cst_45 : f32 to vector<2x32xf32>
    %cst_46 = arith.constant dense<0.000000e+00> : vector<2x160xf32>
    %96 = tpu.matmul %94, %93, %cst_46 {dimension_numbers = #tpu.dot_dimension_numbers<[1], [0], [0], [1], [0, 0, 1, 1], [], []>} : vector<2x32xf32>, vector<32x160xf32>, vector<2x160xf32> -> vector<2x160xf32>
    %97 = vector.extract_strided_slice %96 {offsets = [0, 0], sizes = [2, 128], strides = [1, 1]} : vector<2x160xf32> to vector<2x128xf32>
    %98 = vector.extract_strided_slice %96 {offsets = [0, 128], sizes = [2, 32], strides = [1, 1]} : vector<2x160xf32> to vector<2x32xf32>
    %99 = vector.shape_cast %98 : vector<2x32xf32> to vector<2x1x32xf32>
    %100 = vector.broadcast %99 : vector<2x1x32xf32> to vector<2x8x32xf32>
    %101 = arith.addf %79, %100 : vector<2x8x32xf32>
    %102 = math.tanh %101 : vector<2x8x32xf32>
    %103 = arith.mulf %102, %92 : vector<2x8x32xf32>
    %cst_47 = arith.constant dense<0.000000e+00> : vector<2x8xf32>
    %104 = vector.multi_reduction <add>, %103, %cst_47 [2] : vector<2x8x32xf32> to vector<2x8xf32>
    %cst_48 = arith.constant dense<0xFF800000> : vector<2xf32>
    %105 = vector.multi_reduction <maximumf>, %104, %cst_48 [1] : vector<2x8xf32> to vector<2xf32>
    %106 = vector.shape_cast %105 : vector<2xf32> to vector<2x1xf32>
    %107 = vector.broadcast %106 : vector<2x1xf32> to vector<2x8xf32>
    %108 = arith.subf %104, %107 : vector<2x8xf32>
    %109 = math.exp %108 : vector<2x8xf32>
    %cst_49 = arith.constant dense<0.000000e+00> : vector<2xf32>
    %110 = vector.multi_reduction <add>, %109, %cst_49 [1] : vector<2x8xf32> to vector<2xf32>
    %111 = vector.shape_cast %110 : vector<2xf32> to vector<2x1xf32>
    %112 = vector.broadcast %111 : vector<2x1xf32> to vector<2x8xf32>
    %113 = arith.divf %109, %112 : vector<2x8xf32>
    %114 = vector.shape_cast %113 : vector<2x8xf32> to vector<2x1x8xf32>
    "tpu.trace_start"() <{level = 10 : i32, message = "bqt,btg->bqg"}> : () -> ()
    %cst_50 = arith.constant dense<0.000000e+00> : vector<2x1x128xf32>
    %115 = tpu.matmul %114, %82, %cst_50 {dimension_numbers = #tpu.dot_dimension_numbers<[2], [1], [1], [2], [0, 0, 0, 1, 1, 2], [0], [0]>} : vector<2x1x8xf32>, vector<2x8x128xf32>, vector<2x1x128xf32> -> vector<2x1x128xf32>
    "tpu.trace_stop"() : () -> ()
    %116 = vector.shape_cast %115 : vector<2x1x128xf32> to vector<2x128xf32>
    %117 = vector.extract_strided_slice %88 {offsets = [0, 0], sizes = [2, 128], strides = [1, 1]} : vector<16x128xf32> to vector<2x128xf32>
    %118 = arith.addf %116, %117 : vector<2x128xf32>
    %119 = arith.addf %118, %97 : vector<2x128xf32>
    %120 = vector.extract_strided_slice %119 {offsets = [0, 0], sizes = [2, 32], strides = [1, 1]} : vector<2x128xf32> to vector<2x32xf32>
    %121 = arith.negf %120 : vector<2x32xf32>
    %122 = math.exp %121 : vector<2x32xf32>
    %cst_51 = arith.constant 1.000000e+00 : f32
    %123 = vector.broadcast %cst_51 : f32 to vector<2x32xf32>
    %124 = arith.addf %123, %122 : vector<2x32xf32>
    %125 = arith.divf %123, %124 : vector<2x32xf32>
    %126 = vector.extract_strided_slice %119 {offsets = [0, 32], sizes = [2, 32], strides = [1, 1]} : vector<2x128xf32> to vector<2x32xf32>
    %127 = arith.negf %126 : vector<2x32xf32>
    %128 = math.exp %127 : vector<2x32xf32>
    %cst_52 = arith.constant 1.000000e+00 : f32
    %129 = vector.broadcast %cst_52 : f32 to vector<2x32xf32>
    %130 = arith.addf %129, %128 : vector<2x32xf32>
    %131 = arith.divf %129, %130 : vector<2x32xf32>
    %132 = vector.extract_strided_slice %119 {offsets = [0, 64], sizes = [2, 32], strides = [1, 1]} : vector<2x128xf32> to vector<2x32xf32>
    %133 = math.tanh %132 : vector<2x32xf32>
    %134 = vector.extract_strided_slice %119 {offsets = [0, 96], sizes = [2, 32], strides = [1, 1]} : vector<2x128xf32> to vector<2x32xf32>
    %135 = arith.negf %134 : vector<2x32xf32>
    %136 = math.exp %135 : vector<2x32xf32>
    %cst_53 = arith.constant 1.000000e+00 : f32
    %137 = vector.broadcast %cst_53 : f32 to vector<2x32xf32>
    %138 = arith.addf %137, %136 : vector<2x32xf32>
    %139 = arith.divf %137, %138 : vector<2x32xf32>
    %140 = arith.mulf %131, %95 : vector<2x32xf32>
    %141 = arith.mulf %125, %133 : vector<2x32xf32>
    %142 = arith.addf %140, %141 : vector<2x32xf32>
    %143 = math.tanh %142 : vector<2x32xf32>
    %144 = arith.mulf %139, %143 : vector<2x32xf32>
    %cst_54 = arith.constant dense<0.000000e+00> : vector<2x160xf32>
    %145 = tpu.matmul %144, %93, %cst_54 {dimension_numbers = #tpu.dot_dimension_numbers<[1], [0], [0], [1], [0, 0, 1, 1], [], []>} : vector<2x32xf32>, vector<32x160xf32>, vector<2x160xf32> -> vector<2x160xf32>
    %146 = vector.extract_strided_slice %145 {offsets = [0, 0], sizes = [2, 128], strides = [1, 1]} : vector<2x160xf32> to vector<2x128xf32>
    %147 = vector.extract_strided_slice %145 {offsets = [0, 128], sizes = [2, 32], strides = [1, 1]} : vector<2x160xf32> to vector<2x32xf32>
    %148 = vector.shape_cast %147 : vector<2x32xf32> to vector<2x1x32xf32>
    %149 = vector.broadcast %148 : vector<2x1x32xf32> to vector<2x8x32xf32>
    %150 = arith.addf %79, %149 : vector<2x8x32xf32>
    %151 = math.tanh %150 : vector<2x8x32xf32>
    %152 = arith.mulf %151, %92 : vector<2x8x32xf32>
    %cst_55 = arith.constant dense<0.000000e+00> : vector<2x8xf32>
    %153 = vector.multi_reduction <add>, %152, %cst_55 [2] : vector<2x8x32xf32> to vector<2x8xf32>
    %cst_56 = arith.constant dense<0xFF800000> : vector<2xf32>
    %154 = vector.multi_reduction <maximumf>, %153, %cst_56 [1] : vector<2x8xf32> to vector<2xf32>
    %155 = vector.shape_cast %154 : vector<2xf32> to vector<2x1xf32>
    %156 = vector.broadcast %155 : vector<2x1xf32> to vector<2x8xf32>
    %157 = arith.subf %153, %156 : vector<2x8xf32>
    %158 = math.exp %157 : vector<2x8xf32>
    %cst_57 = arith.constant dense<0.000000e+00> : vector<2xf32>
    %159 = vector.multi_reduction <add>, %158, %cst_57 [1] : vector<2x8xf32> to vector<2xf32>
    %160 = vector.shape_cast %159 : vector<2xf32> to vector<2x1xf32>
    %161 = vector.broadcast %160 : vector<2x1xf32> to vector<2x8xf32>
    %162 = arith.divf %158, %161 : vector<2x8xf32>
    %163 = vector.shape_cast %162 : vector<2x8xf32> to vector<2x1x8xf32>
    "tpu.trace_start"() <{level = 10 : i32, message = "bqt,btg->bqg"}> : () -> ()
    %cst_58 = arith.constant dense<0.000000e+00> : vector<2x1x128xf32>
    %164 = tpu.matmul %163, %82, %cst_58 {dimension_numbers = #tpu.dot_dimension_numbers<[2], [1], [1], [2], [0, 0, 0, 1, 1, 2], [0], [0]>} : vector<2x1x8xf32>, vector<2x8x128xf32>, vector<2x1x128xf32> -> vector<2x1x128xf32>
    "tpu.trace_stop"() : () -> ()
    %165 = vector.shape_cast %164 : vector<2x1x128xf32> to vector<2x128xf32>
    %166 = vector.extract_strided_slice %88 {offsets = [2, 0], sizes = [2, 128], strides = [1, 1]} : vector<16x128xf32> to vector<2x128xf32>
    %167 = arith.addf %165, %166 : vector<2x128xf32>
    %168 = arith.addf %167, %146 : vector<2x128xf32>
    %169 = vector.extract_strided_slice %168 {offsets = [0, 0], sizes = [2, 32], strides = [1, 1]} : vector<2x128xf32> to vector<2x32xf32>
    %170 = arith.negf %169 : vector<2x32xf32>
    %171 = math.exp %170 : vector<2x32xf32>
    %cst_59 = arith.constant 1.000000e+00 : f32
    %172 = vector.broadcast %cst_59 : f32 to vector<2x32xf32>
    %173 = arith.addf %172, %171 : vector<2x32xf32>
    %174 = arith.divf %172, %173 : vector<2x32xf32>
    %175 = vector.extract_strided_slice %168 {offsets = [0, 32], sizes = [2, 32], strides = [1, 1]} : vector<2x128xf32> to vector<2x32xf32>
    %176 = arith.negf %175 : vector<2x32xf32>
    %177 = math.exp %176 : vector<2x32xf32>
    %cst_60 = arith.constant 1.000000e+00 : f32
    %178 = vector.broadcast %cst_60 : f32 to vector<2x32xf32>
    %179 = arith.addf %178, %177 : vector<2x32xf32>
    %180 = arith.divf %178, %179 : vector<2x32xf32>
    %181 = vector.extract_strided_slice %168 {offsets = [0, 64], sizes = [2, 32], strides = [1, 1]} : vector<2x128xf32> to vector<2x32xf32>
    %182 = math.tanh %181 : vector<2x32xf32>
    %183 = vector.extract_strided_slice %168 {offsets = [0, 96], sizes = [2, 32], strides = [1, 1]} : vector<2x128xf32> to vector<2x32xf32>
    %184 = arith.negf %183 : vector<2x32xf32>
    %185 = math.exp %184 : vector<2x32xf32>
    %cst_61 = arith.constant 1.000000e+00 : f32
    %186 = vector.broadcast %cst_61 : f32 to vector<2x32xf32>
    %187 = arith.addf %186, %185 : vector<2x32xf32>
    %188 = arith.divf %186, %187 : vector<2x32xf32>
    %189 = arith.mulf %180, %142 : vector<2x32xf32>
    %190 = arith.mulf %174, %182 : vector<2x32xf32>
    %191 = arith.addf %189, %190 : vector<2x32xf32>
    %192 = math.tanh %191 : vector<2x32xf32>
    %193 = arith.mulf %188, %192 : vector<2x32xf32>
    %cst_62 = arith.constant dense<0.000000e+00> : vector<2x160xf32>
    %194 = tpu.matmul %193, %93, %cst_62 {dimension_numbers = #tpu.dot_dimension_numbers<[1], [0], [0], [1], [0, 0, 1, 1], [], []>} : vector<2x32xf32>, vector<32x160xf32>, vector<2x160xf32> -> vector<2x160xf32>
    %195 = vector.extract_strided_slice %194 {offsets = [0, 0], sizes = [2, 128], strides = [1, 1]} : vector<2x160xf32> to vector<2x128xf32>
    %196 = vector.extract_strided_slice %194 {offsets = [0, 128], sizes = [2, 32], strides = [1, 1]} : vector<2x160xf32> to vector<2x32xf32>
    %197 = vector.shape_cast %196 : vector<2x32xf32> to vector<2x1x32xf32>
    %198 = vector.broadcast %197 : vector<2x1x32xf32> to vector<2x8x32xf32>
    %199 = arith.addf %79, %198 : vector<2x8x32xf32>
    %200 = math.tanh %199 : vector<2x8x32xf32>
    %201 = arith.mulf %200, %92 : vector<2x8x32xf32>
    %cst_63 = arith.constant dense<0.000000e+00> : vector<2x8xf32>
    %202 = vector.multi_reduction <add>, %201, %cst_63 [2] : vector<2x8x32xf32> to vector<2x8xf32>
    %cst_64 = arith.constant dense<0xFF800000> : vector<2xf32>
    %203 = vector.multi_reduction <maximumf>, %202, %cst_64 [1] : vector<2x8xf32> to vector<2xf32>
    %204 = vector.shape_cast %203 : vector<2xf32> to vector<2x1xf32>
    %205 = vector.broadcast %204 : vector<2x1xf32> to vector<2x8xf32>
    %206 = arith.subf %202, %205 : vector<2x8xf32>
    %207 = math.exp %206 : vector<2x8xf32>
    %cst_65 = arith.constant dense<0.000000e+00> : vector<2xf32>
    %208 = vector.multi_reduction <add>, %207, %cst_65 [1] : vector<2x8xf32> to vector<2xf32>
    %209 = vector.shape_cast %208 : vector<2xf32> to vector<2x1xf32>
    %210 = vector.broadcast %209 : vector<2x1xf32> to vector<2x8xf32>
    %211 = arith.divf %207, %210 : vector<2x8xf32>
    %212 = vector.shape_cast %211 : vector<2x8xf32> to vector<2x1x8xf32>
    "tpu.trace_start"() <{level = 10 : i32, message = "bqt,btg->bqg"}> : () -> ()
    %cst_66 = arith.constant dense<0.000000e+00> : vector<2x1x128xf32>
    %213 = tpu.matmul %212, %82, %cst_66 {dimension_numbers = #tpu.dot_dimension_numbers<[2], [1], [1], [2], [0, 0, 0, 1, 1, 2], [0], [0]>} : vector<2x1x8xf32>, vector<2x8x128xf32>, vector<2x1x128xf32> -> vector<2x1x128xf32>
    "tpu.trace_stop"() : () -> ()
    %214 = vector.shape_cast %213 : vector<2x1x128xf32> to vector<2x128xf32>
    %215 = vector.extract_strided_slice %88 {offsets = [4, 0], sizes = [2, 128], strides = [1, 1]} : vector<16x128xf32> to vector<2x128xf32>
    %216 = arith.addf %214, %215 : vector<2x128xf32>
    %217 = arith.addf %216, %195 : vector<2x128xf32>
    %218 = vector.extract_strided_slice %217 {offsets = [0, 0], sizes = [2, 32], strides = [1, 1]} : vector<2x128xf32> to vector<2x32xf32>
    %219 = arith.negf %218 : vector<2x32xf32>
    %220 = math.exp %219 : vector<2x32xf32>
    %cst_67 = arith.constant 1.000000e+00 : f32
    %221 = vector.broadcast %cst_67 : f32 to vector<2x32xf32>
    %222 = arith.addf %221, %220 : vector<2x32xf32>
    %223 = arith.divf %221, %222 : vector<2x32xf32>
    %224 = vector.extract_strided_slice %217 {offsets = [0, 32], sizes = [2, 32], strides = [1, 1]} : vector<2x128xf32> to vector<2x32xf32>
    %225 = arith.negf %224 : vector<2x32xf32>
    %226 = math.exp %225 : vector<2x32xf32>
    %cst_68 = arith.constant 1.000000e+00 : f32
    %227 = vector.broadcast %cst_68 : f32 to vector<2x32xf32>
    %228 = arith.addf %227, %226 : vector<2x32xf32>
    %229 = arith.divf %227, %228 : vector<2x32xf32>
    %230 = vector.extract_strided_slice %217 {offsets = [0, 64], sizes = [2, 32], strides = [1, 1]} : vector<2x128xf32> to vector<2x32xf32>
    %231 = math.tanh %230 : vector<2x32xf32>
    %232 = vector.extract_strided_slice %217 {offsets = [0, 96], sizes = [2, 32], strides = [1, 1]} : vector<2x128xf32> to vector<2x32xf32>
    %233 = arith.negf %232 : vector<2x32xf32>
    %234 = math.exp %233 : vector<2x32xf32>
    %cst_69 = arith.constant 1.000000e+00 : f32
    %235 = vector.broadcast %cst_69 : f32 to vector<2x32xf32>
    %236 = arith.addf %235, %234 : vector<2x32xf32>
    %237 = arith.divf %235, %236 : vector<2x32xf32>
    %238 = arith.mulf %229, %191 : vector<2x32xf32>
    %239 = arith.mulf %223, %231 : vector<2x32xf32>
    %240 = arith.addf %238, %239 : vector<2x32xf32>
    %241 = math.tanh %240 : vector<2x32xf32>
    %242 = arith.mulf %237, %241 : vector<2x32xf32>
    %cst_70 = arith.constant dense<0.000000e+00> : vector<2x160xf32>
    %243 = tpu.matmul %242, %93, %cst_70 {dimension_numbers = #tpu.dot_dimension_numbers<[1], [0], [0], [1], [0, 0, 1, 1], [], []>} : vector<2x32xf32>, vector<32x160xf32>, vector<2x160xf32> -> vector<2x160xf32>
    %244 = vector.extract_strided_slice %243 {offsets = [0, 0], sizes = [2, 128], strides = [1, 1]} : vector<2x160xf32> to vector<2x128xf32>
    %245 = vector.extract_strided_slice %243 {offsets = [0, 128], sizes = [2, 32], strides = [1, 1]} : vector<2x160xf32> to vector<2x32xf32>
    %246 = vector.shape_cast %245 : vector<2x32xf32> to vector<2x1x32xf32>
    %247 = vector.broadcast %246 : vector<2x1x32xf32> to vector<2x8x32xf32>
    %248 = arith.addf %79, %247 : vector<2x8x32xf32>
    %249 = math.tanh %248 : vector<2x8x32xf32>
    %250 = arith.mulf %249, %92 : vector<2x8x32xf32>
    %cst_71 = arith.constant dense<0.000000e+00> : vector<2x8xf32>
    %251 = vector.multi_reduction <add>, %250, %cst_71 [2] : vector<2x8x32xf32> to vector<2x8xf32>
    %cst_72 = arith.constant dense<0xFF800000> : vector<2xf32>
    %252 = vector.multi_reduction <maximumf>, %251, %cst_72 [1] : vector<2x8xf32> to vector<2xf32>
    %253 = vector.shape_cast %252 : vector<2xf32> to vector<2x1xf32>
    %254 = vector.broadcast %253 : vector<2x1xf32> to vector<2x8xf32>
    %255 = arith.subf %251, %254 : vector<2x8xf32>
    %256 = math.exp %255 : vector<2x8xf32>
    %cst_73 = arith.constant dense<0.000000e+00> : vector<2xf32>
    %257 = vector.multi_reduction <add>, %256, %cst_73 [1] : vector<2x8xf32> to vector<2xf32>
    %258 = vector.shape_cast %257 : vector<2xf32> to vector<2x1xf32>
    %259 = vector.broadcast %258 : vector<2x1xf32> to vector<2x8xf32>
    %260 = arith.divf %256, %259 : vector<2x8xf32>
    %261 = vector.shape_cast %260 : vector<2x8xf32> to vector<2x1x8xf32>
    "tpu.trace_start"() <{level = 10 : i32, message = "bqt,btg->bqg"}> : () -> ()
    %cst_74 = arith.constant dense<0.000000e+00> : vector<2x1x128xf32>
    %262 = tpu.matmul %261, %82, %cst_74 {dimension_numbers = #tpu.dot_dimension_numbers<[2], [1], [1], [2], [0, 0, 0, 1, 1, 2], [0], [0]>} : vector<2x1x8xf32>, vector<2x8x128xf32>, vector<2x1x128xf32> -> vector<2x1x128xf32>
    "tpu.trace_stop"() : () -> ()
    %263 = vector.shape_cast %262 : vector<2x1x128xf32> to vector<2x128xf32>
    %264 = vector.extract_strided_slice %88 {offsets = [6, 0], sizes = [2, 128], strides = [1, 1]} : vector<16x128xf32> to vector<2x128xf32>
    %265 = arith.addf %263, %264 : vector<2x128xf32>
    %266 = arith.addf %265, %244 : vector<2x128xf32>
    %267 = vector.extract_strided_slice %266 {offsets = [0, 0], sizes = [2, 32], strides = [1, 1]} : vector<2x128xf32> to vector<2x32xf32>
    %268 = arith.negf %267 : vector<2x32xf32>
    %269 = math.exp %268 : vector<2x32xf32>
    %cst_75 = arith.constant 1.000000e+00 : f32
    %270 = vector.broadcast %cst_75 : f32 to vector<2x32xf32>
    %271 = arith.addf %270, %269 : vector<2x32xf32>
    %272 = arith.divf %270, %271 : vector<2x32xf32>
    %273 = vector.extract_strided_slice %266 {offsets = [0, 32], sizes = [2, 32], strides = [1, 1]} : vector<2x128xf32> to vector<2x32xf32>
    %274 = arith.negf %273 : vector<2x32xf32>
    %275 = math.exp %274 : vector<2x32xf32>
    %cst_76 = arith.constant 1.000000e+00 : f32
    %276 = vector.broadcast %cst_76 : f32 to vector<2x32xf32>
    %277 = arith.addf %276, %275 : vector<2x32xf32>
    %278 = arith.divf %276, %277 : vector<2x32xf32>
    %279 = vector.extract_strided_slice %266 {offsets = [0, 64], sizes = [2, 32], strides = [1, 1]} : vector<2x128xf32> to vector<2x32xf32>
    %280 = math.tanh %279 : vector<2x32xf32>
    %281 = vector.extract_strided_slice %266 {offsets = [0, 96], sizes = [2, 32], strides = [1, 1]} : vector<2x128xf32> to vector<2x32xf32>
    %282 = arith.negf %281 : vector<2x32xf32>
    %283 = math.exp %282 : vector<2x32xf32>
    %cst_77 = arith.constant 1.000000e+00 : f32
    %284 = vector.broadcast %cst_77 : f32 to vector<2x32xf32>
    %285 = arith.addf %284, %283 : vector<2x32xf32>
    %286 = arith.divf %284, %285 : vector<2x32xf32>
    %287 = arith.mulf %278, %240 : vector<2x32xf32>
    %288 = arith.mulf %272, %280 : vector<2x32xf32>
    %289 = arith.addf %287, %288 : vector<2x32xf32>
    %290 = math.tanh %289 : vector<2x32xf32>
    %291 = arith.mulf %286, %290 : vector<2x32xf32>
    %cst_78 = arith.constant dense<0.000000e+00> : vector<2x160xf32>
    %292 = tpu.matmul %291, %93, %cst_78 {dimension_numbers = #tpu.dot_dimension_numbers<[1], [0], [0], [1], [0, 0, 1, 1], [], []>} : vector<2x32xf32>, vector<32x160xf32>, vector<2x160xf32> -> vector<2x160xf32>
    %293 = vector.extract_strided_slice %292 {offsets = [0, 0], sizes = [2, 128], strides = [1, 1]} : vector<2x160xf32> to vector<2x128xf32>
    %294 = vector.extract_strided_slice %292 {offsets = [0, 128], sizes = [2, 32], strides = [1, 1]} : vector<2x160xf32> to vector<2x32xf32>
    %295 = vector.shape_cast %294 : vector<2x32xf32> to vector<2x1x32xf32>
    %296 = vector.broadcast %295 : vector<2x1x32xf32> to vector<2x8x32xf32>
    %297 = arith.addf %79, %296 : vector<2x8x32xf32>
    %298 = math.tanh %297 : vector<2x8x32xf32>
    %299 = arith.mulf %298, %92 : vector<2x8x32xf32>
    %cst_79 = arith.constant dense<0.000000e+00> : vector<2x8xf32>
    %300 = vector.multi_reduction <add>, %299, %cst_79 [2] : vector<2x8x32xf32> to vector<2x8xf32>
    %cst_80 = arith.constant dense<0xFF800000> : vector<2xf32>
    %301 = vector.multi_reduction <maximumf>, %300, %cst_80 [1] : vector<2x8xf32> to vector<2xf32>
    %302 = vector.shape_cast %301 : vector<2xf32> to vector<2x1xf32>
    %303 = vector.broadcast %302 : vector<2x1xf32> to vector<2x8xf32>
    %304 = arith.subf %300, %303 : vector<2x8xf32>
    %305 = math.exp %304 : vector<2x8xf32>
    %cst_81 = arith.constant dense<0.000000e+00> : vector<2xf32>
    %306 = vector.multi_reduction <add>, %305, %cst_81 [1] : vector<2x8xf32> to vector<2xf32>
    %307 = vector.shape_cast %306 : vector<2xf32> to vector<2x1xf32>
    %308 = vector.broadcast %307 : vector<2x1xf32> to vector<2x8xf32>
    %309 = arith.divf %305, %308 : vector<2x8xf32>
    %310 = vector.shape_cast %309 : vector<2x8xf32> to vector<2x1x8xf32>
    "tpu.trace_start"() <{level = 10 : i32, message = "bqt,btg->bqg"}> : () -> ()
    %cst_82 = arith.constant dense<0.000000e+00> : vector<2x1x128xf32>
    %311 = tpu.matmul %310, %82, %cst_82 {dimension_numbers = #tpu.dot_dimension_numbers<[2], [1], [1], [2], [0, 0, 0, 1, 1, 2], [0], [0]>} : vector<2x1x8xf32>, vector<2x8x128xf32>, vector<2x1x128xf32> -> vector<2x1x128xf32>
    "tpu.trace_stop"() : () -> ()
    %312 = vector.shape_cast %311 : vector<2x1x128xf32> to vector<2x128xf32>
    %313 = vector.extract_strided_slice %88 {offsets = [8, 0], sizes = [2, 128], strides = [1, 1]} : vector<16x128xf32> to vector<2x128xf32>
    %314 = arith.addf %312, %313 : vector<2x128xf32>
    %315 = arith.addf %314, %293 : vector<2x128xf32>
    %316 = vector.extract_strided_slice %315 {offsets = [0, 0], sizes = [2, 32], strides = [1, 1]} : vector<2x128xf32> to vector<2x32xf32>
    %317 = arith.negf %316 : vector<2x32xf32>
    %318 = math.exp %317 : vector<2x32xf32>
    %cst_83 = arith.constant 1.000000e+00 : f32
    %319 = vector.broadcast %cst_83 : f32 to vector<2x32xf32>
    %320 = arith.addf %319, %318 : vector<2x32xf32>
    %321 = arith.divf %319, %320 : vector<2x32xf32>
    %322 = vector.extract_strided_slice %315 {offsets = [0, 32], sizes = [2, 32], strides = [1, 1]} : vector<2x128xf32> to vector<2x32xf32>
    %323 = arith.negf %322 : vector<2x32xf32>
    %324 = math.exp %323 : vector<2x32xf32>
    %cst_84 = arith.constant 1.000000e+00 : f32
    %325 = vector.broadcast %cst_84 : f32 to vector<2x32xf32>
    %326 = arith.addf %325, %324 : vector<2x32xf32>
    %327 = arith.divf %325, %326 : vector<2x32xf32>
    %328 = vector.extract_strided_slice %315 {offsets = [0, 64], sizes = [2, 32], strides = [1, 1]} : vector<2x128xf32> to vector<2x32xf32>
    %329 = math.tanh %328 : vector<2x32xf32>
    %330 = vector.extract_strided_slice %315 {offsets = [0, 96], sizes = [2, 32], strides = [1, 1]} : vector<2x128xf32> to vector<2x32xf32>
    %331 = arith.negf %330 : vector<2x32xf32>
    %332 = math.exp %331 : vector<2x32xf32>
    %cst_85 = arith.constant 1.000000e+00 : f32
    %333 = vector.broadcast %cst_85 : f32 to vector<2x32xf32>
    %334 = arith.addf %333, %332 : vector<2x32xf32>
    %335 = arith.divf %333, %334 : vector<2x32xf32>
    %336 = arith.mulf %327, %289 : vector<2x32xf32>
    %337 = arith.mulf %321, %329 : vector<2x32xf32>
    %338 = arith.addf %336, %337 : vector<2x32xf32>
    %339 = math.tanh %338 : vector<2x32xf32>
    %340 = arith.mulf %335, %339 : vector<2x32xf32>
    %cst_86 = arith.constant dense<0.000000e+00> : vector<2x160xf32>
    %341 = tpu.matmul %340, %93, %cst_86 {dimension_numbers = #tpu.dot_dimension_numbers<[1], [0], [0], [1], [0, 0, 1, 1], [], []>} : vector<2x32xf32>, vector<32x160xf32>, vector<2x160xf32> -> vector<2x160xf32>
    %342 = vector.extract_strided_slice %341 {offsets = [0, 0], sizes = [2, 128], strides = [1, 1]} : vector<2x160xf32> to vector<2x128xf32>
    %343 = vector.extract_strided_slice %341 {offsets = [0, 128], sizes = [2, 32], strides = [1, 1]} : vector<2x160xf32> to vector<2x32xf32>
    %344 = vector.shape_cast %343 : vector<2x32xf32> to vector<2x1x32xf32>
    %345 = vector.broadcast %344 : vector<2x1x32xf32> to vector<2x8x32xf32>
    %346 = arith.addf %79, %345 : vector<2x8x32xf32>
    %347 = math.tanh %346 : vector<2x8x32xf32>
    %348 = arith.mulf %347, %92 : vector<2x8x32xf32>
    %cst_87 = arith.constant dense<0.000000e+00> : vector<2x8xf32>
    %349 = vector.multi_reduction <add>, %348, %cst_87 [2] : vector<2x8x32xf32> to vector<2x8xf32>
    %cst_88 = arith.constant dense<0xFF800000> : vector<2xf32>
    %350 = vector.multi_reduction <maximumf>, %349, %cst_88 [1] : vector<2x8xf32> to vector<2xf32>
    %351 = vector.shape_cast %350 : vector<2xf32> to vector<2x1xf32>
    %352 = vector.broadcast %351 : vector<2x1xf32> to vector<2x8xf32>
    %353 = arith.subf %349, %352 : vector<2x8xf32>
    %354 = math.exp %353 : vector<2x8xf32>
    %cst_89 = arith.constant dense<0.000000e+00> : vector<2xf32>
    %355 = vector.multi_reduction <add>, %354, %cst_89 [1] : vector<2x8xf32> to vector<2xf32>
    %356 = vector.shape_cast %355 : vector<2xf32> to vector<2x1xf32>
    %357 = vector.broadcast %356 : vector<2x1xf32> to vector<2x8xf32>
    %358 = arith.divf %354, %357 : vector<2x8xf32>
    %359 = vector.shape_cast %358 : vector<2x8xf32> to vector<2x1x8xf32>
    "tpu.trace_start"() <{level = 10 : i32, message = "bqt,btg->bqg"}> : () -> ()
    %cst_90 = arith.constant dense<0.000000e+00> : vector<2x1x128xf32>
    %360 = tpu.matmul %359, %82, %cst_90 {dimension_numbers = #tpu.dot_dimension_numbers<[2], [1], [1], [2], [0, 0, 0, 1, 1, 2], [0], [0]>} : vector<2x1x8xf32>, vector<2x8x128xf32>, vector<2x1x128xf32> -> vector<2x1x128xf32>
    "tpu.trace_stop"() : () -> ()
    %361 = vector.shape_cast %360 : vector<2x1x128xf32> to vector<2x128xf32>
    %362 = vector.extract_strided_slice %88 {offsets = [10, 0], sizes = [2, 128], strides = [1, 1]} : vector<16x128xf32> to vector<2x128xf32>
    %363 = arith.addf %361, %362 : vector<2x128xf32>
    %364 = arith.addf %363, %342 : vector<2x128xf32>
    %365 = vector.extract_strided_slice %364 {offsets = [0, 0], sizes = [2, 32], strides = [1, 1]} : vector<2x128xf32> to vector<2x32xf32>
    %366 = arith.negf %365 : vector<2x32xf32>
    %367 = math.exp %366 : vector<2x32xf32>
    %cst_91 = arith.constant 1.000000e+00 : f32
    %368 = vector.broadcast %cst_91 : f32 to vector<2x32xf32>
    %369 = arith.addf %368, %367 : vector<2x32xf32>
    %370 = arith.divf %368, %369 : vector<2x32xf32>
    %371 = vector.extract_strided_slice %364 {offsets = [0, 32], sizes = [2, 32], strides = [1, 1]} : vector<2x128xf32> to vector<2x32xf32>
    %372 = arith.negf %371 : vector<2x32xf32>
    %373 = math.exp %372 : vector<2x32xf32>
    %cst_92 = arith.constant 1.000000e+00 : f32
    %374 = vector.broadcast %cst_92 : f32 to vector<2x32xf32>
    %375 = arith.addf %374, %373 : vector<2x32xf32>
    %376 = arith.divf %374, %375 : vector<2x32xf32>
    %377 = vector.extract_strided_slice %364 {offsets = [0, 64], sizes = [2, 32], strides = [1, 1]} : vector<2x128xf32> to vector<2x32xf32>
    %378 = math.tanh %377 : vector<2x32xf32>
    %379 = vector.extract_strided_slice %364 {offsets = [0, 96], sizes = [2, 32], strides = [1, 1]} : vector<2x128xf32> to vector<2x32xf32>
    %380 = arith.negf %379 : vector<2x32xf32>
    %381 = math.exp %380 : vector<2x32xf32>
    %cst_93 = arith.constant 1.000000e+00 : f32
    %382 = vector.broadcast %cst_93 : f32 to vector<2x32xf32>
    %383 = arith.addf %382, %381 : vector<2x32xf32>
    %384 = arith.divf %382, %383 : vector<2x32xf32>
    %385 = arith.mulf %376, %338 : vector<2x32xf32>
    %386 = arith.mulf %370, %378 : vector<2x32xf32>
    %387 = arith.addf %385, %386 : vector<2x32xf32>
    %388 = math.tanh %387 : vector<2x32xf32>
    %389 = arith.mulf %384, %388 : vector<2x32xf32>
    %cst_94 = arith.constant dense<0.000000e+00> : vector<2x160xf32>
    %390 = tpu.matmul %389, %93, %cst_94 {dimension_numbers = #tpu.dot_dimension_numbers<[1], [0], [0], [1], [0, 0, 1, 1], [], []>} : vector<2x32xf32>, vector<32x160xf32>, vector<2x160xf32> -> vector<2x160xf32>
    %391 = vector.extract_strided_slice %390 {offsets = [0, 0], sizes = [2, 128], strides = [1, 1]} : vector<2x160xf32> to vector<2x128xf32>
    %392 = vector.extract_strided_slice %390 {offsets = [0, 128], sizes = [2, 32], strides = [1, 1]} : vector<2x160xf32> to vector<2x32xf32>
    %393 = vector.shape_cast %392 : vector<2x32xf32> to vector<2x1x32xf32>
    %394 = vector.broadcast %393 : vector<2x1x32xf32> to vector<2x8x32xf32>
    %395 = arith.addf %79, %394 : vector<2x8x32xf32>
    %396 = math.tanh %395 : vector<2x8x32xf32>
    %397 = arith.mulf %396, %92 : vector<2x8x32xf32>
    %cst_95 = arith.constant dense<0.000000e+00> : vector<2x8xf32>
    %398 = vector.multi_reduction <add>, %397, %cst_95 [2] : vector<2x8x32xf32> to vector<2x8xf32>
    %cst_96 = arith.constant dense<0xFF800000> : vector<2xf32>
    %399 = vector.multi_reduction <maximumf>, %398, %cst_96 [1] : vector<2x8xf32> to vector<2xf32>
    %400 = vector.shape_cast %399 : vector<2xf32> to vector<2x1xf32>
    %401 = vector.broadcast %400 : vector<2x1xf32> to vector<2x8xf32>
    %402 = arith.subf %398, %401 : vector<2x8xf32>
    %403 = math.exp %402 : vector<2x8xf32>
    %cst_97 = arith.constant dense<0.000000e+00> : vector<2xf32>
    %404 = vector.multi_reduction <add>, %403, %cst_97 [1] : vector<2x8xf32> to vector<2xf32>
    %405 = vector.shape_cast %404 : vector<2xf32> to vector<2x1xf32>
    %406 = vector.broadcast %405 : vector<2x1xf32> to vector<2x8xf32>
    %407 = arith.divf %403, %406 : vector<2x8xf32>
    %408 = vector.shape_cast %407 : vector<2x8xf32> to vector<2x1x8xf32>
    "tpu.trace_start"() <{level = 10 : i32, message = "bqt,btg->bqg"}> : () -> ()
    %cst_98 = arith.constant dense<0.000000e+00> : vector<2x1x128xf32>
    %409 = tpu.matmul %408, %82, %cst_98 {dimension_numbers = #tpu.dot_dimension_numbers<[2], [1], [1], [2], [0, 0, 0, 1, 1, 2], [0], [0]>} : vector<2x1x8xf32>, vector<2x8x128xf32>, vector<2x1x128xf32> -> vector<2x1x128xf32>
    "tpu.trace_stop"() : () -> ()
    %410 = vector.shape_cast %409 : vector<2x1x128xf32> to vector<2x128xf32>
    %411 = vector.extract_strided_slice %88 {offsets = [12, 0], sizes = [2, 128], strides = [1, 1]} : vector<16x128xf32> to vector<2x128xf32>
    %412 = arith.addf %410, %411 : vector<2x128xf32>
    %413 = arith.addf %412, %391 : vector<2x128xf32>
    %414 = vector.extract_strided_slice %413 {offsets = [0, 0], sizes = [2, 32], strides = [1, 1]} : vector<2x128xf32> to vector<2x32xf32>
    %415 = arith.negf %414 : vector<2x32xf32>
    %416 = math.exp %415 : vector<2x32xf32>
    %cst_99 = arith.constant 1.000000e+00 : f32
    %417 = vector.broadcast %cst_99 : f32 to vector<2x32xf32>
    %418 = arith.addf %417, %416 : vector<2x32xf32>
    %419 = arith.divf %417, %418 : vector<2x32xf32>
    %420 = vector.extract_strided_slice %413 {offsets = [0, 32], sizes = [2, 32], strides = [1, 1]} : vector<2x128xf32> to vector<2x32xf32>
    %421 = arith.negf %420 : vector<2x32xf32>
    %422 = math.exp %421 : vector<2x32xf32>
    %cst_100 = arith.constant 1.000000e+00 : f32
    %423 = vector.broadcast %cst_100 : f32 to vector<2x32xf32>
    %424 = arith.addf %423, %422 : vector<2x32xf32>
    %425 = arith.divf %423, %424 : vector<2x32xf32>
    %426 = vector.extract_strided_slice %413 {offsets = [0, 64], sizes = [2, 32], strides = [1, 1]} : vector<2x128xf32> to vector<2x32xf32>
    %427 = math.tanh %426 : vector<2x32xf32>
    %428 = vector.extract_strided_slice %413 {offsets = [0, 96], sizes = [2, 32], strides = [1, 1]} : vector<2x128xf32> to vector<2x32xf32>
    %429 = arith.negf %428 : vector<2x32xf32>
    %430 = math.exp %429 : vector<2x32xf32>
    %cst_101 = arith.constant 1.000000e+00 : f32
    %431 = vector.broadcast %cst_101 : f32 to vector<2x32xf32>
    %432 = arith.addf %431, %430 : vector<2x32xf32>
    %433 = arith.divf %431, %432 : vector<2x32xf32>
    %434 = arith.mulf %425, %387 : vector<2x32xf32>
    %435 = arith.mulf %419, %427 : vector<2x32xf32>
    %436 = arith.addf %434, %435 : vector<2x32xf32>
    %437 = math.tanh %436 : vector<2x32xf32>
    %438 = arith.mulf %433, %437 : vector<2x32xf32>
    %cst_102 = arith.constant dense<0.000000e+00> : vector<2x160xf32>
    %439 = tpu.matmul %438, %93, %cst_102 {dimension_numbers = #tpu.dot_dimension_numbers<[1], [0], [0], [1], [0, 0, 1, 1], [], []>} : vector<2x32xf32>, vector<32x160xf32>, vector<2x160xf32> -> vector<2x160xf32>
    %440 = vector.extract_strided_slice %439 {offsets = [0, 0], sizes = [2, 128], strides = [1, 1]} : vector<2x160xf32> to vector<2x128xf32>
    %441 = vector.extract_strided_slice %439 {offsets = [0, 128], sizes = [2, 32], strides = [1, 1]} : vector<2x160xf32> to vector<2x32xf32>
    %442 = vector.shape_cast %441 : vector<2x32xf32> to vector<2x1x32xf32>
    %443 = vector.broadcast %442 : vector<2x1x32xf32> to vector<2x8x32xf32>
    %444 = arith.addf %79, %443 : vector<2x8x32xf32>
    %445 = math.tanh %444 : vector<2x8x32xf32>
    %446 = arith.mulf %445, %92 : vector<2x8x32xf32>
    %cst_103 = arith.constant dense<0.000000e+00> : vector<2x8xf32>
    %447 = vector.multi_reduction <add>, %446, %cst_103 [2] : vector<2x8x32xf32> to vector<2x8xf32>
    %cst_104 = arith.constant dense<0xFF800000> : vector<2xf32>
    %448 = vector.multi_reduction <maximumf>, %447, %cst_104 [1] : vector<2x8xf32> to vector<2xf32>
    %449 = vector.shape_cast %448 : vector<2xf32> to vector<2x1xf32>
    %450 = vector.broadcast %449 : vector<2x1xf32> to vector<2x8xf32>
    %451 = arith.subf %447, %450 : vector<2x8xf32>
    %452 = math.exp %451 : vector<2x8xf32>
    %cst_105 = arith.constant dense<0.000000e+00> : vector<2xf32>
    %453 = vector.multi_reduction <add>, %452, %cst_105 [1] : vector<2x8xf32> to vector<2xf32>
    %454 = vector.shape_cast %453 : vector<2xf32> to vector<2x1xf32>
    %455 = vector.broadcast %454 : vector<2x1xf32> to vector<2x8xf32>
    %456 = arith.divf %452, %455 : vector<2x8xf32>
    %457 = vector.shape_cast %456 : vector<2x8xf32> to vector<2x1x8xf32>
    "tpu.trace_start"() <{level = 10 : i32, message = "bqt,btg->bqg"}> : () -> ()
    %cst_106 = arith.constant dense<0.000000e+00> : vector<2x1x128xf32>
    %458 = tpu.matmul %457, %82, %cst_106 {dimension_numbers = #tpu.dot_dimension_numbers<[2], [1], [1], [2], [0, 0, 0, 1, 1, 2], [0], [0]>} : vector<2x1x8xf32>, vector<2x8x128xf32>, vector<2x1x128xf32> -> vector<2x1x128xf32>
    "tpu.trace_stop"() : () -> ()
    %459 = vector.shape_cast %458 : vector<2x1x128xf32> to vector<2x128xf32>
    %460 = vector.extract_strided_slice %88 {offsets = [14, 0], sizes = [2, 128], strides = [1, 1]} : vector<16x128xf32> to vector<2x128xf32>
    %461 = arith.addf %459, %460 : vector<2x128xf32>
    %462 = arith.addf %461, %440 : vector<2x128xf32>
    %463 = vector.extract_strided_slice %462 {offsets = [0, 0], sizes = [2, 32], strides = [1, 1]} : vector<2x128xf32> to vector<2x32xf32>
    %464 = arith.negf %463 : vector<2x32xf32>
    %465 = math.exp %464 : vector<2x32xf32>
    %cst_107 = arith.constant 1.000000e+00 : f32
    %466 = vector.broadcast %cst_107 : f32 to vector<2x32xf32>
    %467 = arith.addf %466, %465 : vector<2x32xf32>
    %468 = arith.divf %466, %467 : vector<2x32xf32>
    %469 = vector.extract_strided_slice %462 {offsets = [0, 32], sizes = [2, 32], strides = [1, 1]} : vector<2x128xf32> to vector<2x32xf32>
    %470 = arith.negf %469 : vector<2x32xf32>
    %471 = math.exp %470 : vector<2x32xf32>
    %cst_108 = arith.constant 1.000000e+00 : f32
    %472 = vector.broadcast %cst_108 : f32 to vector<2x32xf32>
    %473 = arith.addf %472, %471 : vector<2x32xf32>
    %474 = arith.divf %472, %473 : vector<2x32xf32>
    %475 = vector.extract_strided_slice %462 {offsets = [0, 64], sizes = [2, 32], strides = [1, 1]} : vector<2x128xf32> to vector<2x32xf32>
    %476 = math.tanh %475 : vector<2x32xf32>
    %477 = vector.extract_strided_slice %462 {offsets = [0, 96], sizes = [2, 32], strides = [1, 1]} : vector<2x128xf32> to vector<2x32xf32>
    %478 = arith.negf %477 : vector<2x32xf32>
    %479 = math.exp %478 : vector<2x32xf32>
    %cst_109 = arith.constant 1.000000e+00 : f32
    %480 = vector.broadcast %cst_109 : f32 to vector<2x32xf32>
    %481 = arith.addf %480, %479 : vector<2x32xf32>
    %482 = arith.divf %480, %481 : vector<2x32xf32>
    %483 = arith.mulf %474, %436 : vector<2x32xf32>
    %484 = arith.mulf %468, %476 : vector<2x32xf32>
    %485 = arith.addf %483, %484 : vector<2x32xf32>
    %486 = math.tanh %485 : vector<2x32xf32>
    %487 = arith.mulf %482, %486 : vector<2x32xf32>
    %488 = tpu.concatenate %144, %193, %242, %291, %340, %389, %438, %487 in 0 : vector<2x32xf32>, vector<2x32xf32>, vector<2x32xf32>, vector<2x32xf32>, vector<2x32xf32>, vector<2x32xf32>, vector<2x32xf32>, vector<2x32xf32> -> vector<16x32xf32>
    %c0_110 = arith.constant 0 : index
    %c0_111 = arith.constant 0 : index
    %489 = vector.load %arg12[%c0_110, %c0_111] : memref<32x16xf32, #tpu.memory_space<vmem>>, vector<32x16xf32>
    %cst_112 = arith.constant dense<0.000000e+00> : vector<16x16xf32>
    %490 = tpu.matmul %488, %489, %cst_112 {dimension_numbers = #tpu.dot_dimension_numbers<[1], [0], [0], [1], [0, 0, 1, 1], [], []>} : vector<16x32xf32>, vector<32x16xf32>, vector<16x16xf32> -> vector<16x16xf32>
    %c0_113 = arith.constant 0 : index
    %c0_114 = arith.constant 0 : index
    %491 = vector.load %arg13[%c0_113, %c0_114] : memref<1x16xf32, #tpu.memory_space<vmem>>, vector<1x16xf32>
    %492 = vector.broadcast %491 : vector<1x16xf32> to vector<16x16xf32>
    %493 = arith.addf %490, %492 : vector<16x16xf32>
    %c0_115 = arith.constant 0 : index
    %c0_116 = arith.constant 0 : index
    %494 = vector.load %arg14[%c0_115, %c0_116] : memref<16x16xf32, #tpu.memory_space<vmem>>, vector<16x16xf32>
    tpu.vector_store %arg14[%c0_115, %c0_116], %493 {strides = array<i32>} : memref<16x16xf32, #tpu.memory_space<vmem>>, vector<16x16xf32>,
    return
  }
}

</mosaic_0001>

<llo_original>
// kernel: recognizer_forward.1
$region0: #{recognizer_forward.1}
  #allocation0 [shape = 'u32[]', space=smem, size = 0x4, offset = 0x4, fixed_abs, tag = 'smem constant byte address 0x4 - core index']
  #allocation1 [shape = 'u32[144,128]{1,0:T(1,128)}', space=vmem, size = 0x12000, scoped, tag = 'internal scratch']
  #allocation2 [shape = 'f32[16,32]{1,0:T(8,128)}', space=vmem, size = 0x2000, scoped, tag = 'scratch operand']
  %s0 = inlined_call_operand.vmem [shape: f32[16,64], index: 0, kind: input, shape index: {}]
  %s1 = inlined_call_operand.vmem [shape: f32[16,16], index: 1, kind: input, shape index: {}]
  %s2 = inlined_call_operand.vmem [shape: f32[64,128], index: 2, kind: input, shape index: {}]
  %s3 = inlined_call_operand.vmem [shape: f32[32,128], index: 3, kind: input, shape index: {}]
  %s4 = inlined_call_operand.vmem [shape: f32[1,128], index: 4, kind: input, shape index: {}]
  %s5 = inlined_call_operand.vmem [shape: f32[32,32], index: 5, kind: input, shape index: {}]
  %s6 = inlined_call_operand.vmem [shape: f32[1,32], index: 6, kind: input, shape index: {}]
  %s7 = inlined_call_operand.vmem [shape: f32[1,32], index: 7, kind: input, shape index: {}]
  %s8 = inlined_call_operand.vmem [shape: f32[32,128], index: 8, kind: input, shape index: {}]
  %s9 = inlined_call_operand.vmem [shape: f32[16,128], index: 9, kind: input, shape index: {}]
  %s10 = inlined_call_operand.vmem [shape: f32[1,128], index: 10, kind: input, shape index: {}]
  %s11 = inlined_call_operand.vmem [shape: f32[32,160], index: 11, kind: input, shape index: {}]
  %s12 = inlined_call_operand.vmem [shape: f32[32,16], index: 12, kind: input, shape index: {}]
  %s13 = inlined_call_operand.vmem [shape: f32[1,16], index: 13, kind: input, shape index: {}]
  %s14 = inlined_call_operand.vmem [shape: f32[16,16], index: 14, kind: output, shape index: {}]
  %s15 = sld [smem:[#allocation0]]
  $region66: #{recognizer_forward.1} parent=0
    _
  %s17 = ssub.s32 1, %s15
  %s18 = scalar_select 0, %s17, %s15
  // Predicated region
  $region2: #{recognizer_forward.1} parent=0 // pred_check
    _
  $region3: #{recognizer_forward.1} parent=0 // pred_check_branch
    %20 = sbr.rel (0) target = $region5
  $region4: #{recognizer_forward.1} parent=0 // pred_region
    _
  $region5: #{recognizer_forward.1} parent=0 // pred_fallthru
    _
  // Predicated region
  $region6: #{recognizer_forward.1} parent=0 // pred_check
    _
  $region7: #{recognizer_forward.1} parent=0 // pred_check_branch
    %22 = sbr.rel (0) target = $region9
  $region8: #{recognizer_forward.1} parent=0 // pred_region
    _
  $region9: #{recognizer_forward.1} parent=0 // pred_fallthru
    _
  // Predicated region
  $region10: #{recognizer_forward.1} parent=0 // pred_check
    _
  $region11: #{recognizer_forward.1} parent=0 // pred_check_branch
    %24 = sbr.rel (0) target = $region13
  $region12: #{recognizer_forward.1} parent=0 // pred_region
    _
  $region13: #{recognizer_forward.1} parent=0 // pred_fallthru
    _
  // Predicated region
  $region14: #{recognizer_forward.1} parent=0 // pred_check
    _
  $region15: #{recognizer_forward.1} parent=0 // pred_check_branch
    %26 = sbr.rel (0) target = $region17
  $region16: #{recognizer_forward.1} parent=0 // pred_region
    _
  $region17: #{recognizer_forward.1} parent=0 // pred_fallthru
    _
  // Predicated region
  $region18: #{recognizer_forward.1} parent=0 // pred_check
    _
  $region19: #{recognizer_forward.1} parent=0 // pred_check_branch
    %28 = sbr.rel (0) target = $region21
  $region20: #{recognizer_forward.1} parent=0 // pred_region
    _
  $region21: #{recognizer_forward.1} parent=0 // pred_fallthru
    _
  // Predicated region
  $region22: #{recognizer_forward.1} parent=0 // pred_check
    _
  $region23: #{recognizer_forward.1} parent=0 // pred_check_branch
    %30 = sbr.rel (0) target = $region25
  $region24: #{recognizer_forward.1} parent=0 // pred_region
    _
  $region25: #{recognizer_forward.1} parent=0 // pred_fallthru
    _
  // Predicated region
  $region26: #{recognizer_forward.1} parent=0 // pred_check
    _
  $region27: #{recognizer_forward.1} parent=0 // pred_check_branch
    %32 = sbr.rel (0) target = $region29
  $region28: #{recognizer_forward.1} parent=0 // pred_region
    _
  $region29: #{recognizer_forward.1} parent=0 // pred_fallthru
    _
  // Predicated region
  $region30: #{recognizer_forward.1} parent=0 // pred_check
    _
  $region31: #{recognizer_forward.1} parent=0 // pred_check_branch
    %34 = sbr.rel (0) target = $region33
  $region32: #{recognizer_forward.1} parent=0 // pred_region
    _
  $region33: #{recognizer_forward.1} parent=0 // pred_fallthru
    _
  // Predicated region
  $region34: #{recognizer_forward.1} parent=0 // pred_check
    _
  $region35: #{recognizer_forward.1} parent=0 // pred_check_branch
    %36 = sbr.rel (0) target = $region37
  $region36: #{recognizer_forward.1} parent=0 // pred_region
    _
  $region37: #{recognizer_forward.1} parent=0 // pred_fallthru
    _
  // Predicated region
  $region38: #{recognizer_forward.1} parent=0 // pred_check
    _
  $region39: #{recognizer_forward.1} parent=0 // pred_check_branch
    %38 = sbr.rel (0) target = $region41
  $region40: #{recognizer_forward.1} parent=0 // pred_region
    _
  $region41: #{recognizer_forward.1} parent=0 // pred_fallthru
    _
  // Predicated region
  $region42: #{recognizer_forward.1} parent=0 // pred_check
    _
  $region43: #{recognizer_forward.1} parent=0 // pred_check_branch
    %40 = sbr.rel (0) target = $region45
  $region44: #{recognizer_forward.1} parent=0 // pred_region
    _
  $region45: #{recognizer_forward.1} parent=0 // pred_fallthru
    _
  // Predicated region
  $region46: #{recognizer_forward.1} parent=0 // pred_check
    _
  $region47: #{recognizer_forward.1} parent=0 // pred_check_branch
    %42 = sbr.rel (0) target = $region49
  $region48: #{recognizer_forward.1} parent=0 // pred_region
    _
  $region49: #{recognizer_forward.1} parent=0 // pred_fallthru
    _
  // Predicated region
  $region50: #{recognizer_forward.1} parent=0 // pred_check
    _
  $region51: #{recognizer_forward.1} parent=0 // pred_check_branch
    %44 = sbr.rel (0) target = $region53
  $region52: #{recognizer_forward.1} parent=0 // pred_region
    _
  $region53: #{recognizer_forward.1} parent=0 // pred_fallthru
    _
  // Predicated region
  $region54: #{recognizer_forward.1} parent=0 // pred_check
    _
  $region55: #{recognizer_forward.1} parent=0 // pred_check_branch
    %46 = sbr.rel (0) target = $region57
  $region56: #{recognizer_forward.1} parent=0 // pred_region
    _
  $region57: #{recognizer_forward.1} parent=0 // pred_fallthru
    _
  %v47 = vld [vmem:[%s0] sm:$0xff]
  %v48 = vld [vmem:[%s0 + $0x8] sm:$0xff]
  %v49 = vld [vmem:[%s2] sm:$0xff]
  %v50 = vld [vmem:[%s2 + $0x8] sm:$0xff]
  %v51 = vld [vmem:[%s2 + $0x10] sm:$0xff]
  %v52 = vld [vmem:[%s2 + $0x18] sm:$0xff]
  %v53 = vld [vmem:[%s2 + $0x20] sm:$0xff]
  %v54 = vld [vmem:[%s2 + $0x28] sm:$0xff]
  %v55 = vld [vmem:[%s2 + $0x30] sm:$0xff]
  %v56 = vld [vmem:[%s2 + $0x38] sm:$0xff]
  %v57 = vld [vmem:[%s4] sm:$0x1]
  %v59 = vlaneseq
  %v60 = vshrl.u32 %v59, 7
  %v61 = vsub.s32 0, %v60
  %v62 = vrot.slane %v57, %v61
  %vm64 = vcmask 523264
  %v66 = vsel %vm64, %v47, 0
  %v69 = vsel %vm64, %v48, 0
  %71 = vmatprep.subr.mxu0 0.0
  %72 = vmatpush1.msra.mxu0 %v49
  %73 = vmatprep.subr.mxu0 0.0
  %74 = vmatpush1.msra.mxu0 %v50
  %75 = vmatprep.subr.mxu0 0.0
  %76 = vmatpush1.msra.mxu0 %v51
  %77 = vmatprep.subr.mxu0 0.0
  %78 = vmatpush1.msra.mxu0 %v52
  %79 = vmatprep.subr.mxu0 0.0
  %80 = vmatpush1.msra.mxu0 %v53
  %81 = vmatprep.subr.mxu0 0.0
  %82 = vmatpush1.msra.mxu0 %v54
  %83 = vmatprep.subr.mxu0 0.0
  %84 = vmatpush1.msra.mxu0 %v55
  %85 = vmatprep.subr.mxu0 0.0
  %86 = vmatpush1.msra.mxu0 %v56
  %87 = vmatprep.subr.mxu0 0.0
  %88 = vmatpush1.msra.mxu0 0.0
  %89 = vmatprep.subr.mxu0 0.0
  %90 = vmatpush1.msra.mxu0 0.0
  %91 = vmatprep.subr.mxu0 0.0
  %92 = vmatpush1.msra.mxu0 0.0
  %93 = vmatprep.subr.mxu0 0.0
  %94 = vmatpush1.msra.mxu0 0.0
  %95 = vmatprep.subr.mxu0 0.0
  %96 = vmatpush1.msra.mxu0 0.0
  %97 = vmatprep.subr.mxu0 0.0
  %98 = vmatpush1.msra.mxu0 0.0
  %99 = vmatprep.subr.mxu0 0.0
  %100 = vmatpush1.msra.mxu0 0.0
  %101 = vmatprep.subr.mxu0 0.0
  %102 = vmatpush1.msra.mxu0 0.0
  %103 = vmatprep.subr.mxu0 0.0
  %104 = vmatpush1.msra.mxu0 0.0
  %105 = vmatprep.subr.mxu0 0.0
  %106 = vmatpush1.msra.mxu0 0.0
  %107 = vmatprep.subr.mxu0 0.0
  %108 = vmatpush1.msra.mxu0 0.0
  %109 = vmatprep.subr.mxu0 0.0
  %110 = vmatpush1.msra.mxu0 0.0
  %111 = vmatprep.subr.mxu0 0.0
  %112 = vmatpush1.msra.mxu0 0.0
  %113 = vmatprep.subr.mxu0 0.0
  %114 = vmatpush1.msra.mxu0 0.0
  %115 = vmatprep.subr.mxu0 0.0
  %116 = vmatpush1.msra.mxu0 0.0
  %117 = vmatprep.subr.mxu0 0.0
  %118 = vmatpush1.msra.mxu0 0.0
  %119 = vmatprep.subr.mxu0 0.0
  %120 = vmatpush1.msra.mxu0 0.0
  %121 = vmatprep.subr.mxu0 0.0
  %122 = vmatpush1.msra.mxu0 0.0
  %123 = vmatprep.subr.mxu0 0.0
  %124 = vmatpush1.msra.mxu0 0.0
  %125 = vmatprep.subr.mxu0 0.0
  %126 = vmatpush1.msra.mxu0 0.0
  %127 = vmatprep.subr.mxu0 0.0
  %128 = vmatpush1.msra.mxu0 0.0
  %129 = vmatprep.subr.mxu0 0.0
  %130 = vmatpush1.msra.mxu0 0.0
  %131 = vmatprep.subr.mxu0 0.0
  %132 = vmatpush1.msra.mxu0 0.0
  %133 = vmatprep.subr.mxu0 0.0
  %134 = vmatpush1.msra.mxu0 0.0
  %135 = vmatprep.mubr.f32.mxu0 0.0
  %136 = vmatmul.mubr.f32.gmra.mrb[0].mxu0 %v66
  %v137 = vpop.f32.mrb[0].mxu0
  %v138 = vadd.f32 %v62, %v137
  %v139 = vpop.f32.mrb[0].mxu0
  %140 = vmatprep.mubr.f32.mxu0 0.0
  %141 = vmatmul.mubr.f32.gmra.mrb[0].mxu0 %v69
  %v142 = vpop.f32.mrb[0].mxu0
  %v143 = vadd.f32 %v62, %v142
  %v144 = vpop.f32.mrb[0].mxu0
  %145 = vdwg.mxu0
  %v146 = vld [vmem:[%s3] sm:$0xff]
  %v147 = vld [vmem:[%s3 + $0x8] sm:$0xff]
  %v148 = vld [vmem:[%s3 + $0x10] sm:$0xff]
  %v149 = vld [vmem:[%s3 + $0x18] sm:$0xff]
  %vm150 = vcmask 261120
  %v152 = vsel %vm150, 0.0, 0
  %154 = vmatprep.subr.mxu0 0.0
  %155 = vmatpush1.msra.mxu0 %v146
  %156 = vmatprep.subr.mxu0 0.0
  %157 = vmatpush1.msra.mxu0 %v147
  %158 = vmatprep.subr.mxu0 0.0
  %159 = vmatpush1.msra.mxu0 %v148
  %160 = vmatprep.subr.mxu0 0.0
  %161 = vmatpush1.msra.mxu0 %v149
  %162 = vmatprep.subr.mxu0 0.0
  %163 = vmatpush1.msra.mxu0 0.0
  %164 = vmatprep.subr.mxu0 0.0
  %165 = vmatpush1.msra.mxu0 0.0
  %166 = vmatprep.subr.mxu0 0.0
  %167 = vmatpush1.msra.mxu0 0.0
  %168 = vmatprep.subr.mxu0 0.0
  %169 = vmatpush1.msra.mxu0 0.0
  %170 = vmatprep.subr.mxu0 0.0
  %171 = vmatpush1.msra.mxu0 0.0
  %172 = vmatprep.subr.mxu0 0.0
  %173 = vmatpush1.msra.mxu0 0.0
  %174 = vmatprep.subr.mxu0 0.0
  %175 = vmatpush1.msra.mxu0 0.0
  %176 = vmatprep.subr.mxu0 0.0
  %177 = vmatpush1.msra.mxu0 0.0
  %178 = vmatprep.subr.mxu0 0.0
  %179 = vmatpush1.msra.mxu0 0.0
  %180 = vmatprep.subr.mxu0 0.0
  %181 = vmatpush1.msra.mxu0 0.0
  %182 = vmatprep.subr.mxu0 0.0
  %183 = vmatpush1.msra.mxu0 0.0
  %184 = vmatprep.subr.mxu0 0.0
  %185 = vmatpush1.msra.mxu0 0.0
  %186 = vmatprep.subr.mxu0 0.0
  %187 = vmatpush1.msra.mxu0 0.0
  %188 = vmatprep.subr.mxu0 0.0
  %189 = vmatpush1.msra.mxu0 0.0
  %190 = vmatprep.subr.mxu0 0.0
  %191 = vmatpush1.msra.mxu0 0.0
  %192 = vmatprep.subr.mxu0 0.0
  %193 = vmatpush1.msra.mxu0 0.0
  %194 = vmatprep.subr.mxu0 0.0
  %195 = vmatpush1.msra.mxu0 0.0
  %196 = vmatprep.subr.mxu0 0.0
  %197 = vmatpush1.msra.mxu0 0.0
  %198 = vmatprep.subr.mxu0 0.0
  %199 = vmatpush1.msra.mxu0 0.0
  %200 = vmatprep.subr.mxu0 0.0
  %201 = vmatpush1.msra.mxu0 0.0
  %202 = vmatprep.subr.mxu0 0.0
  %203 = vmatpush1.msra.mxu0 0.0
  %204 = vmatprep.subr.mxu0 0.0
  %205 = vmatpush1.msra.mxu0 0.0
  %206 = vmatprep.subr.mxu0 0.0
  %207 = vmatpush1.msra.mxu0 0.0
  %208 = vmatprep.subr.mxu0 0.0
  %209 = vmatpush1.msra.mxu0 0.0
  %210 = vmatprep.subr.mxu0 0.0
  %211 = vmatpush1.msra.mxu0 0.0
  %212 = vmatprep.subr.mxu0 0.0
  %213 = vmatpush1.msra.mxu0 0.0
  %214 = vmatprep.subr.mxu0 0.0
  %215 = vmatpush1.msra.mxu0 0.0
  %216 = vmatprep.subr.mxu0 0.0
  %217 = vmatpush1.msra.mxu0 0.0
  %218 = vmatprep.mubr.f32.mxu0 0.0
  %219 = vmatmul.mubr.f32.gmra.mrb[0].mxu0 %v152
  %v220 = vpop.f32.mrb[0].mxu0
  %v221 = vadd.f32 0.0, %v220
  %v222 = vpop.f32.mrb[0].mxu0
  %223 = vdwg.mxu0
  %v224 = vadd.f32 %v138, %v221
  %v225 = vxor.u32 %v224, 2147483648
  %v226 = vmul.f32 %v225, 1.442695
  %v227 = vpow.pop %v226
  %v228 = vadd.f32 %v227, 1.0
  %v229 = vrcp.pop %v228
  %v230 = vmul.f32 1.0, %v229
  %v231 = vtanh.pop %v224
  %v232 = vmul.f32 %v230, 0.0
  %234 = vrot.lane.b32.xlu0 %v231, 64
  %v235 = vpop.permute.xlu0 %234
  %v237 = vmul.f32 %v230, %v235
  %239 = vrot.lane.b32.xlu0 %v237, 32
  %v240 = vpop.permute.xlu0 %239
  %v242 = vadd.f32 %v232, %v240
  %v243 = vtanh.pop %v242
  %245 = vrot.lane.b32.xlu0 %v243, 64
  %v246 = vpop.permute.xlu0 %245
  %v248 = vmul.f32 %v230, %v246
  %250 = vrot.lane.b32.xlu0 %v248, 32
  %v251 = vpop.permute.xlu0 %250
  %vm253 = vcmask 130048
  %254 = vst.msk [vmem:[#allocation2] sm:$0xff] %vm253, %v251
  %vm255 = vcmask 261248
  %256 = vst.msk [vmem:[#allocation2 + $0x8] sm:$0xff] %vm255, %v251
  %v257 = vsel %vm150, %v251, 0
  %259 = vmatprep.subr.mxu0 0.0
  %260 = vmatpush1.msra.mxu0 %v146
  %261 = vmatprep.subr.mxu0 0.0
  %262 = vmatpush1.msra.mxu0 %v147
  %263 = vmatprep.subr.mxu0 0.0
  %264 = vmatpush1.msra.mxu0 %v148
  %265 = vmatprep.subr.mxu0 0.0
  %266 = vmatpush1.msra.mxu0 %v149
  %267 = vmatprep.subr.mxu0 0.0
  %268 = vmatpush1.msra.mxu0 0.0
  %269 = vmatprep.subr.mxu0 0.0
  %270 = vmatpush1.msra.mxu0 0.0
  %271 = vmatprep.subr.mxu0 0.0
  %272 = vmatpush1.msra.mxu0 0.0
  %273 = vmatprep.subr.mxu0 0.0
  %274 = vmatpush1.msra.mxu0 0.0
  %275 = vmatprep.subr.mxu0 0.0
  %276 = vmatpush1.msra.mxu0 0.0
  %277 = vmatprep.subr.mxu0 0.0
  %278 = vmatpush1.msra.mxu0 0.0
  %279 = vmatprep.subr.mxu0 0.0
  %280 = vmatpush1.msra.mxu0 0.0
  %281 = vmatprep.subr.mxu0 0.0
  %282 = vmatpush1.msra.mxu0 0.0
  %283 = vmatprep.subr.mxu0 0.0
  %284 = vmatpush1.msra.mxu0 0.0
  %285 = vmatprep.subr.mxu0 0.0
  %286 = vmatpush1.msra.mxu0 0.0
  %287 = vmatprep.subr.mxu0 0.0
  %288 = vmatpush1.msra.mxu0 0.0
  %289 = vmatprep.subr.mxu0 0.0
  %290 = vmatpush1.msra.mxu0 0.0
  %291 = vmatprep.subr.mxu0 0.0
  %292 = vmatpush1.msra.mxu0 0.0
  %293 = vmatprep.subr.mxu0 0.0
  %294 = vmatpush1.msra.mxu0 0.0
  %295 = vmatprep.subr.mxu0 0.0
  %296 = vmatpush1.msra.mxu0 0.0
  %297 = vmatprep.subr.mxu0 0.0
  %298 = vmatpush1.msra.mxu0 0.0
  %299 = vmatprep.subr.mxu0 0.0
  %300 = vmatpush1.msra.mxu0 0.0
  %301 = vmatprep.subr.mxu0 0.0
  %302 = vmatpush1.msra.mxu0 0.0
  %303 = vmatprep.subr.mxu0 0.0
  %304 = vmatpush1.msra.mxu0 0.0
  %305 = vmatprep.subr.mxu0 0.0
  %306 = vmatpush1.msra.mxu0 0.0
  %307 = vmatprep.subr.mxu0 0.0
  %308 = vmatpush1.msra.mxu0 0.0
  %309 = vmatprep.subr.mxu0 0.0
  %310 = vmatpush1.msra.mxu0 0.0
  %311 = vmatprep.subr.mxu0 0.0
  %312 = vmatpush1.msra.mxu0 0.0
  %313 = vmatprep.subr.mxu0 0.0
  %314 = vmatpush1.msra.mxu0 0.0
  %315 = vmatprep.subr.mxu0 0.0
  %316 = vmatpush1.msra.mxu0 0.0
  %317 = vmatprep.subr.mxu0 0.0
  %318 = vmatpush1.msra.mxu0 0.0
  %319 = vmatprep.subr.mxu0 0.0
  %320 = vmatpush1.msra.mxu0 0.0
  %321 = vmatprep.subr.mxu0 0.0
  %322 = vmatpush1.msra.mxu0 0.0
  %323 = vmatprep.mubr.f32.mxu0 0.0
  %324 = vmatmul.mubr.f32.gmra.mrb[0].mxu0 %v257
  %v325 = vpop.f32.mrb[0].mxu0
  %v326 = vadd.f32 0.0, %v325
  %v327 = vpop.f32.mrb[0].mxu0
  %328 = vdwg.mxu0
  %v329 = vadd.f32 %v143, %v326
  %v330 = vxor.u32 %v329, 2147483648
  %v331 = vmul.f32 %v330, 1.442695
  %v332 = vpow.pop %v331
  %v333 = vadd.f32 %v332, 1.0
  %v334 = vrcp.pop %v333
  %v335 = vmul.f32 1.0, %v334
  %v336 = vtanh.pop %v329
  %v337 = vmul.f32 %v335, %v242
  %339 = vrot.lane.b32.xlu0 %v336, 64
  %v340 = vpop.permute.xlu0 %339
  %v342 = vmul.f32 %v335, %v340
  %344 = vrot.lane.b32.xlu0 %v342, 32
  %v345 = vpop.permute.xlu0 %344
  %v347 = vadd.f32 %v337, %v345
  %v348 = vtanh.pop %v347
  %350 = vrot.lane.b32.xlu0 %v348, 64
  %v351 = vpop.permute.xlu0 %350
  %v353 = vmul.f32 %v335, %v351
  %355 = vrot.lane.b32.xlu0 %v353, 32
  %v356 = vpop.permute.xlu0 %355
  %358 = vst.msk [vmem:[#allocation2 + $0x8] sm:$0xff] %vm253, %v356
  %359 = vst.msk [vmem:[#allocation2] sm:$0xff] %vm255, %v356
  %v360 = vld [vmem:[#allocation2] sm:$0xff]
  %v361 = vld [vmem:[#allocation2 + $0x8] sm:$0xff]
  %v362 = vld [vmem:[%s5] sm:$0xff]
  %v363 = vld [vmem:[%s5 + $0x8] sm:$0xff]
  %v364 = vld [vmem:[%s5 + $0x10] sm:$0xff]
  %v365 = vld [vmem:[%s5 + $0x18] sm:$0xff]
  %v366 = vld [vmem:[%s6] sm:$0x1]
  %v368 = vlaneseq
  %v369 = vshrl.u32 %v368, 7
  %v370 = vsub.s32 0, %v369
  %v371 = vrot.slane %v366, %v370
  %v374 = vsel %vm150, %v360, 0
  %v377 = vsel %vm150, %v361, 0
  %379 = vmatprep.subr.mxu0 0.0
  %380 = vmatpush1.msra.mxu0 %v362
  %381 = vmatprep.subr.mxu0 0.0
  %382 = vmatpush1.msra.mxu0 %v363
  %383 = vmatprep.subr.mxu0 0.0
  %384 = vmatpush1.msra.mxu0 %v364
  %385 = vmatprep.subr.mxu0 0.0
  %386 = vmatpush1.msra.mxu0 %v365
  %387 = vmatprep.subr.mxu0 0.0
  %388 = vmatpush1.msra.mxu0 0.0
  %389 = vmatprep.subr.mxu0 0.0
  %390 = vmatpush1.msra.mxu0 0.0
  %391 = vmatprep.subr.mxu0 0.0
  %392 = vmatpush1.msra.mxu0 0.0
  %393 = vmatprep.subr.mxu0 0.0
  %394 = vmatpush1.msra.mxu0 0.0
  %395 = vmatprep.subr.mxu0 0.0
  %396 = vmatpush1.msra.mxu0 0.0
  %397 = vmatprep.subr.mxu0 0.0
  %398 = vmatpush1.msra.mxu0 0.0
  %399 = vmatprep.subr.mxu0 0.0
  %400 = vmatpush1.msra.mxu0 0.0
  %401 = vmatprep.subr.mxu0 0.0
  %402 = vmatpush1.msra.mxu0 0.0
  %403 = vmatprep.subr.mxu0 0.0
  %404 = vmatpush1.msra.mxu0 0.0
  %405 = vmatprep.subr.mxu0 0.0
  %406 = vmatpush1.msra.mxu0 0.0
  %407 = vmatprep.subr.mxu0 0.0
  %408 = vmatpush1.msra.mxu0 0.0
  %409 = vmatprep.subr.mxu0 0.0
  %410 = vmatpush1.msra.mxu0 0.0
  %411 = vmatprep.subr.mxu0 0.0
  %412 = vmatpush1.msra.mxu0 0.0
  %413 = vmatprep.subr.mxu0 0.0
  %414 = vmatpush1.msra.mxu0 0.0
  %415 = vmatprep.subr.mxu0 0.0
  %416 = vmatpush1.msra.mxu0 0.0
  %417 = vmatprep.subr.mxu0 0.0
  %418 = vmatpush1.msra.mxu0 0.0
  %419 = vmatprep.subr.mxu0 0.0
  %420 = vmatpush1.msra.mxu0 0.0
  %421 = vmatprep.subr.mxu0 0.0
  %422 = vmatpush1.msra.mxu0 0.0
  %423 = vmatprep.subr.mxu0 0.0
  %424 = vmatpush1.msra.mxu0 0.0
  %425 = vmatprep.subr.mxu0 0.0
  %426 = vmatpush1.msra.mxu0 0.0
  %427 = vmatprep.subr.mxu0 0.0
  %428 = vmatpush1.msra.mxu0 0.0
  %429 = vmatprep.subr.mxu0 0.0
  %430 = vmatpush1.msra.mxu0 0.0
  %431 = vmatprep.subr.mxu0 0.0
  %432 = vmatpush1.msra.mxu0 0.0
  %433 = vmatprep.subr.mxu0 0.0
  %434 = vmatpush1.msra.mxu0 0.0
  %435 = vmatprep.subr.mxu0 0.0
  %436 = vmatpush1.msra.mxu0 0.0
  %437 = vmatprep.subr.mxu0 0.0
  %438 = vmatpush1.msra.mxu0 0.0
  %439 = vmatprep.subr.mxu0 0.0
  %440 = vmatpush1.msra.mxu0 0.0
  %441 = vmatprep.subr.mxu0 0.0
  %442 = vmatpush1.msra.mxu0 0.0
  %443 = vmatprep.mubr.f32.mxu0 0.0
  %444 = vmatmul.mubr.f32.gmra.mrb[0].mxu0 %v374
  %v445 = vpop.f32.mrb[0].mxu0
  %v446 = vadd.f32 %v371, %v445
  %v447 = vpop.f32.mrb[0].mxu0
  %448 = vmatprep.mubr.f32.mxu0 0.0
  %449 = vmatmul.mubr.f32.gmra.mrb[0].mxu0 %v377
  %v450 = vpop.f32.mrb[0].mxu0
  %v451 = vadd.f32 %v371, %v450
  %v452 = vpop.f32.mrb[0].mxu0
  %453 = vdwg.mxu0
  %v454 = vld [vmem:[%s8] sm:$0xff]
  %v455 = vld [vmem:[%s8 + $0x8] sm:$0xff]
  %v456 = vld [vmem:[%s8 + $0x10] sm:$0xff]
  %v457 = vld [vmem:[%s8 + $0x18] sm:$0xff]
  %458 = vmatprep.subr.mxu0 0.0
  %459 = vmatpush1.msra.mxu0 %v454
  %460 = vmatprep.subr.mxu0 0.0
  %461 = vmatpush1.msra.mxu0 %v455
  %462 = vmatprep.subr.mxu0 0.0
  %463 = vmatpush1.msra.mxu0 %v456
  %464 = vmatprep.subr.mxu0 0.0
  %465 = vmatpush1.msra.mxu0 %v457
  %466 = vmatprep.subr.mxu0 0.0
  %467 = vmatpush1.msra.mxu0 0.0
  %468 = vmatprep.subr.mxu0 0.0
  %469 = vmatpush1.msra.mxu0 0.0
  %470 = vmatprep.subr.mxu0 0.0
  %471 = vmatpush1.msra.mxu0 0.0
  %472 = vmatprep.subr.mxu0 0.0
  %473 = vmatpush1.msra.mxu0 0.0
  %474 = vmatprep.subr.mxu0 0.0
  %475 = vmatpush1.msra.mxu0 0.0
  %476 = vmatprep.subr.mxu0 0.0
  %477 = vmatpush1.msra.mxu0 0.0
  %478 = vmatprep.subr.mxu0 0.0
  %479 = vmatpush1.msra.mxu0 0.0
  %480 = vmatprep.subr.mxu0 0.0
  %481 = vmatpush1.msra.mxu0 0.0
  %482 = vmatprep.subr.mxu0 0.0
  %483 = vmatpush1.msra.mxu0 0.0
  %484 = vmatprep.subr.mxu0 0.0
  %485 = vmatpush1.msra.mxu0 0.0
  %486 = vmatprep.subr.mxu0 0.0
  %487 = vmatpush1.msra.mxu0 0.0
  %488 = vmatprep.subr.mxu0 0.0
  %489 = vmatpush1.msra.mxu0 0.0
  %490 = vmatprep.subr.mxu0 0.0
  %491 = vmatpush1.msra.mxu0 0.0
  %492 = vmatprep.subr.mxu0 0.0
  %493 = vmatpush1.msra.mxu0 0.0
  %494 = vmatprep.subr.mxu0 0.0
  %495 = vmatpush1.msra.mxu0 0.0
  %496 = vmatprep.subr.mxu0 0.0
  %497 = vmatpush1.msra.mxu0 0.0
  %498 = vmatprep.subr.mxu0 0.0
  %499 = vmatpush1.msra.mxu0 0.0
  %500 = vmatprep.subr.mxu0 0.0
  %501 = vmatpush1.msra.mxu0 0.0
  %502 = vmatprep.subr.mxu0 0.0
  %503 = vmatpush1.msra.mxu0 0.0
  %504 = vmatprep.subr.mxu0 0.0
  %505 = vmatpush1.msra.mxu0 0.0
  %506 = vmatprep.subr.mxu0 0.0
  %507 = vmatpush1.msra.mxu0 0.0
  %508 = vmatprep.subr.mxu0 0.0
  %509 = vmatpush1.msra.mxu0 0.0
  %510 = vmatprep.subr.mxu0 0.0
  %511 = vmatpush1.msra.mxu0 0.0
  %512 = vmatprep.subr.mxu0 0.0
  %513 = vmatpush1.msra.mxu0 0.0
  %514 = vmatprep.subr.mxu0 0.0
  %515 = vmatpush1.msra.mxu0 0.0
  %516 = vmatprep.subr.mxu0 0.0
  %517 = vmatpush1.msra.mxu0 0.0
  %518 = vmatprep.subr.mxu0 0.0
  %519 = vmatpush1.msra.mxu0 0.0
  %520 = vmatprep.subr.mxu0 0.0
  %521 = vmatpush1.msra.mxu0 0.0
  %522 = vmatprep.mubr.f32.mxu0 0.0
  %523 = vmatmul.mubr.f32.gmra.mrb[0].mxu0 %v374
  %v524 = vpop.f32.mrb[0].mxu0
  %v525 = vadd.f32 0.0, %v524
  %v526 = vpop.f32.mrb[0].mxu0
  %527 = vmatprep.mubr.f32.mxu0 0.0
  %528 = vmatmul.mubr.f32.gmra.mrb[0].mxu0 %v377
  %v529 = vpop.f32.mrb[0].mxu0
  %v530 = vadd.f32 0.0, %v529
  %v531 = vpop.f32.mrb[0].mxu0
  %532 = vdwg.mxu0
  %v533 = vld [vmem:[%s1] sm:$0xff]
  %v534 = vld [vmem:[%s1 + $0x8] sm:$0xff]
  %v535 = vld [vmem:[%s9] sm:$0xff]
  %v536 = vld [vmem:[%s9 + $0x8] sm:$0xff]
  %v537 = vld [vmem:[%s10] sm:$0x1]
  %v539 = vlaneseq
  %v540 = vshrl.u32 %v539, 7
  %v541 = vsub.s32 0, %v540
  %v542 = vrot.slane %v537, %v541
  %v545 = vsel %vm253, %v533, 0
  %v548 = vsel %vm253, %v534, 0
  %550 = vmatprep.subr.mxu0 0.0
  %551 = vmatpush1.msra.mxu0 %v535
  %552 = vmatprep.subr.mxu0 0.0
  %553 = vmatpush1.msra.mxu0 %v536
  %554 = vmatprep.subr.mxu0 0.0
  %555 = vmatpush1.msra.mxu0 0.0
  %556 = vmatprep.subr.mxu0 0.0
  %557 = vmatpush1.msra.mxu0 0.0
  %558 = vmatprep.subr.mxu0 0.0
  %559 = vmatpush1.msra.mxu0 0.0
  %560 = vmatprep.subr.mxu0 0.0
  %561 = vmatpush1.msra.mxu0 0.0
  %562 = vmatprep.subr.mxu0 0.0
  %563 = vmatpush1.msra.mxu0 0.0
  %564 = vmatprep.subr.mxu0 0.0
  %565 = vmatpush1.msra.mxu0 0.0
  %566 = vmatprep.subr.mxu0 0.0
  %567 = vmatpush1.msra.mxu0 0.0
  %568 = vmatprep.subr.mxu0 0.0
  %569 = vmatpush1.msra.mxu0 0.0
  %570 = vmatprep.subr.mxu0 0.0
  %571 = vmatpush1.msra.mxu0 0.0
  %572 = vmatprep.subr.mxu0 0.0
  %573 = vmatpush1.msra.mxu0 0.0
  %574 = vmatprep.subr.mxu0 0.0
  %575 = vmatpush1.msra.mxu0 0.0
  %576 = vmatprep.subr.mxu0 0.0
  %577 = vmatpush1.msra.mxu0 0.0
  %578 = vmatprep.subr.mxu0 0.0
  %579 = vmatpush1.msra.mxu0 0.0
  %580 = vmatprep.subr.mxu0 0.0
  %581 = vmatpush1.msra.mxu0 0.0
  %582 = vmatprep.subr.mxu0 0.0
  %583 = vmatpush1.msra.mxu0 0.0
  %584 = vmatprep.subr.mxu0 0.0
  %585 = vmatpush1.msra.mxu0 0.0
  %586 = vmatprep.subr.mxu0 0.0
  %587 = vmatpush1.msra.mxu0 0.0
  %588 = vmatprep.subr.mxu0 0.0
  %589 = vmatpush1.msra.mxu0 0.0
  %590 = vmatprep.subr.mxu0 0.0
  %591 = vmatpush1.msra.mxu0 0.0
  %592 = vmatprep.subr.mxu0 0.0
  %593 = vmatpush1.msra.mxu0 0.0
  %594 = vmatprep.subr.mxu0 0.0
  %595 = vmatpush1.msra.mxu0 0.0
  %596 = vmatprep.subr.mxu0 0.0
  %597 = vmatpush1.msra.mxu0 0.0
  %598 = vmatprep.subr.mxu0 0.0
  %599 = vmatpush1.msra.mxu0 0.0
  %600 = vmatprep.subr.mxu0 0.0
  %601 = vmatpush1.msra.mxu0 0.0
  %602 = vmatprep.subr.mxu0 0.0
  %603 = vmatpush1.msra.mxu0 0.0
  %604 = vmatprep.subr.mxu0 0.0
  %605 = vmatpush1.msra.mxu0 0.0
  %606 = vmatprep.subr.mxu0 0.0
  %607 = vmatpush1.msra.mxu0 0.0
  %608 = vmatprep.subr.mxu0 0.0
  %609 = vmatpush1.msra.mxu0 0.0
  %610 = vmatprep.subr.mxu0 0.0
  %611 = vmatpush1.msra.mxu0 0.0
  %612 = vmatprep.subr.mxu0 0.0
  %613 = vmatpush1.msra.mxu0 0.0
  %614 = vmatprep.mubr.f32.mxu0 0.0
  %615 = vmatmul.mubr.f32.gmra.mrb[0].mxu0 %v545
  %v616 = vpop.f32.mrb[0].mxu0
  %v617 = vadd.f32 %v542, %v616
  %v618 = vpop.f32.mrb[0].mxu0
  %619 = vmatprep.mubr.f32.mxu0 0.0
  %620 = vmatmul.mubr.f32.gmra.mrb[0].mxu0 %v548
  %v621 = vpop.f32.mrb[0].mxu0
  %v622 = vadd.f32 %v542, %v621
  %v623 = vpop.f32.mrb[0].mxu0
  %624 = vdwg.mxu0
  %v625 = vld [vmem:[%s7] sm:$0x1]
  %v627 = vlaneseq
  %v628 = vshrl.u32 %v627, 7
  %v629 = vsub.s32 0, %v628
  %v630 = vrot.slane %v625, %v629
  %v632 = vld [vmem:[%s11] sm:$0xff]
  %v633 = vld [vmem:[%s11 + $0x8] sm:$0xff]
  %v634 = vld [vmem:[%s11 + $0x10] sm:$0xff]
  %v635 = vld [vmem:[%s11 + $0x18] sm:$0xff]
  %v636 = vld [vmem:[%s11 + $0x20] sm:$0xff]
  %v637 = vld [vmem:[%s11 + $0x28] sm:$0xff]
  %v638 = vld [vmem:[%s11 + $0x30] sm:$0xff]
  %v639 = vld [vmem:[%s11 + $0x38] sm:$0xff]
  %640 = vmatprep.subr.mxu0 %v633
  %641 = vmatpush1.msra.mxu0 %v632
  %642 = vmatprep.subr.mxu0 %v635
  %643 = vmatpush1.msra.mxu0 %v634
  %644 = vmatprep.subr.mxu0 %v637
  %645 = vmatpush1.msra.mxu0 %v636
  %646 = vmatprep.subr.mxu0 %v639
  %647 = vmatpush1.msra.mxu0 %v638
  %648 = vmatprep.subr.mxu0 0.0
  %649 = vmatpush1.msra.mxu0 0.0
  %650 = vmatprep.subr.mxu0 0.0
  %651 = vmatpush1.msra.mxu0 0.0
  %652 = vmatprep.subr.mxu0 0.0
  %653 = vmatpush1.msra.mxu0 0.0
  %654 = vmatprep.subr.mxu0 0.0
  %655 = vmatpush1.msra.mxu0 0.0
  %656 = vmatprep.subr.mxu0 0.0
  %657 = vmatpush1.msra.mxu0 0.0
  %658 = vmatprep.subr.mxu0 0.0
  %659 = vmatpush1.msra.mxu0 0.0
  %660 = vmatprep.subr.mxu0 0.0
  %661 = vmatpush1.msra.mxu0 0.0
  %662 = vmatprep.subr.mxu0 0.0
  %663 = vmatpush1.msra.mxu0 0.0
  %664 = vmatprep.subr.mxu0 0.0
  %665 = vmatpush1.msra.mxu0 0.0
  %666 = vmatprep.subr.mxu0 0.0
  %667 = vmatpush1.msra.mxu0 0.0
  %668 = vmatprep.subr.mxu0 0.0
  %669 = vmatpush1.msra.mxu0 0.0
  %670 = vmatprep.subr.mxu0 0.0
  %671 = vmatpush1.msra.mxu0 0.0
  %672 = vmatprep.subr.mxu0 0.0
  %673 = vmatpush1.msra.mxu0 0.0
  %674 = vmatprep.subr.mxu0 0.0
  %675 = vmatpush1.msra.mxu0 0.0
  %676 = vmatprep.subr.mxu0 0.0
  %677 = vmatpush1.msra.mxu0 0.0
  %678 = vmatprep.subr.mxu0 0.0
  %679 = vmatpush1.msra.mxu0 0.0
  %680 = vmatprep.subr.mxu0 0.0
  %681 = vmatpush1.msra.mxu0 0.0
  %682 = vmatprep.subr.mxu0 0.0
  %683 = vmatpush1.msra.mxu0 0.0
  %684 = vmatprep.subr.mxu0 0.0
  %685 = vmatpush1.msra.mxu0 0.0
  %686 = vmatprep.subr.mxu0 0.0
  %687 = vmatpush1.msra.mxu0 0.0
  %688 = vmatprep.subr.mxu0 0.0
  %689 = vmatpush1.msra.mxu0 0.0
  %690 = vmatprep.subr.mxu0 0.0
  %691 = vmatpush1.msra.mxu0 0.0
  %692 = vmatprep.subr.mxu0 0.0
  %693 = vmatpush1.msra.mxu0 0.0
  %694 = vmatprep.subr.mxu0 0.0
  %695 = vmatpush1.msra.mxu0 0.0
  %696 = vmatprep.subr.mxu0 0.0
  %697 = vmatpush1.msra.mxu0 0.0
  %698 = vmatprep.subr.mxu0 0.0
  %699 = vmatpush1.msra.mxu0 0.0
  %700 = vmatprep.subr.mxu0 0.0
  %701 = vmatpush1.msra.mxu0 0.0
  %702 = vmatprep.subr.mxu0 0.0
  %703 = vmatpush1.msra.mxu0 0.0
  %704 = vmatprep.mubr.f32.mxu0 0.0
  %705 = vmatmul.mubr.f32.gmra.mrb[0].mxu0 %v152
  %v706 = vpop.f32.mrb[0].mxu0
  %v707 = vadd.f32 0.0, %v706
  %v708 = vpop.f32.mrb[0].mxu0
  %v709 = vadd.f32 0.0, %v708
  %710 = vdwg.mxu0
  %v713 = vunpack.c.l.s4 1966171168
  %v714 = vunpack.c.0.s8 %v713
  %v715 = vlaneseq
  %v716 = vshrl.u32 %v715, 7
  %v717 = vsub.s32 %v714, %v716
  %v718 = vrot.slane %v709, %v717
  %v719 = vcombine.high %v718, %v718
  %v721 = vunpack.c.l.s4 1966171168
  %v722 = vunpack.c.0.s8 %v721
  %v723 = vlaneseq
  %v724 = vshrl.u32 %v723, 7
  %v725 = vsub.s32 %v722, %v724
  %v726 = vrot.slane %v718, %v725
  %v728 = vunpack.c.l.s4 1966171168
  %v729 = vunpack.c.0.s8 %v728
  %v730 = vlaneseq
  %v731 = vshrl.u32 %v730, 7
  %v732 = vsub.s32 %v729, %v731
  %v733 = vrot.slane %v719, %v732
  %v734 = vlaneseq
  %v735 = vshrl.u32 %v734, 7
  %v736 = vsub.s32 0, %v735
  %v737 = vrot.slane %v726, %v736
  %v738 = vlaneseq
  %v739 = vshrl.u32 %v738, 7
  %v740 = vsub.s32 0, %v739
  %v741 = vrot.slane %v733, %v740
  %v744 = vadd.f32 %v446, %v737
  %v745 = vadd.f32 %v451, %v741
  %v746 = vtanh.pop %v744
  %v747 = vtanh.pop %v745
  %v748 = vmul.f32 %v746, %v630
  %v749 = vmul.f32 %v747, %v630
  %v750 = vsel %vm150, %v748, 0.0
  %751 = vadd.xlane.f32.xlu0 %v750
  %v752 = vpop.xlane.xlu0 %751
  %v753 = vsel %vm150, %v749, 0.0
  %754 = vadd.xlane.f32.xlu0 %v753
  %v755 = vpop.xlane.xlu0 %754
  %v758 = vlaneseq
  %v759 = vand.u32 %v758, 127
  %v760 = vlaneseq
  %v761 = vshrl.u32 %v760, 7
  %v762 = vsub.s32 %v759, %v761
  %v763 = vrot.slane %v752, %v762
  %v764 = vlaneseq
  %v765 = vshrl.u32 %v764, 7
  %v766 = vsub.s32 %v759, %v765
  %v767 = vrot.slane %v755, %v766
  %vm768 = vcmask 1041409
  %v769 = vsel %vm768, %v767, %v763
  %vm771 = vcmask 58368
  %v772 = vsel %vm771, %v769, -inf
  %773 = vmax.xlane.f32.xlu0 %v772
  %v774 = vpop.xlane.xlu0 %773
  %v776 = vlaneseq
  %v777 = vshrl.u32 %v776, 7
  %v778 = vsub.s32 0, %v777
  %v779 = vrot.slane %v774, %v778
  %v780 = vlaneseq
  %v781 = vshrl.u32 %v780, 7
  %v782 = vsub.s32 1, %v781
  %v783 = vrot.slane %v774, %v782
  %v786 = vsub.f32 %v752, %v779
  %v787 = vsub.f32 %v755, %v783
  %v788 = vmul.f32 %v786, 1.442695
  %v789 = vpow.pop %v788
  %v790 = vmul.f32 %v787, 1.442695
  %v791 = vpow.pop %v790
  %794 = vset.pattern.permute.xlu0 0
  %795 = vperm.xlu0 %794, %v789
  %v796 = vpop.permute.xlu0 %795
  %797 = vset.pattern.permute.xlu0 0
  %798 = vperm.xlu0 %797, %v791
  %v799 = vpop.permute.xlu0 %798
  %v800 = vlaneseq
  %v801 = vshrl.u32 %v800, 7
  %v802 = vsub.s32 %v759, %v801
  %v803 = vrot.slane %v796, %v802
  %v804 = vlaneseq
  %v805 = vshrl.u32 %v804, 7
  %v806 = vsub.s32 %v759, %v805
  %v807 = vrot.slane %v799, %v806
  %v808 = vsel %vm768, %v807, %v803
  %v810 = vsel %vm771, %v808, 0.0
  %811 = vadd.xlane.f32.xlu0 %v810
  %v812 = vpop.xlane.xlu0 %811
  %v814 = vlaneseq
  %v815 = vshrl.u32 %v814, 7
  %v816 = vsub.s32 0, %v815
  %v817 = vrot.slane %v812, %v816
  %v818 = vlaneseq
  %v819 = vshrl.u32 %v818, 7
  %v820 = vsub.s32 1, %v819
  %v821 = vrot.slane %v812, %v820
  %v824 = vrcp.pop %v817
  %v825 = vmul.f32 %v789, %v824
  %v826 = vrcp.pop %v821
  %v827 = vmul.f32 %v791, %v826
  %829 = vset.pattern.permute.xlu0 0
  %830 = vperm.xlu0 %829, %v825
  %v831 = vpop.permute.xlu0 %830
  %v832 = vlaneseq
  %v833 = vshrl.u32 %v832, 7
  %v834 = vsub.s32 %v759, %v833
  %v835 = vrot.slane %v831, %v834
  %vm836 = vcmask 64512
  %v837 = vsel %vm836, %v835, 0
  %839 = vmatprep.subr.mxu0 0.0
  %840 = vmatpush1.msra.mxu0 %v525
  %841 = vmatprep.subr.mxu0 0.0
  %842 = vmatpush1.msra.mxu0 0.0
  %843 = vmatprep.subr.mxu0 0.0
  %844 = vmatpush1.msra.mxu0 0.0
  %845 = vmatprep.subr.mxu0 0.0
  %846 = vmatpush1.msra.mxu0 0.0
  %847 = vmatprep.subr.mxu0 0.0
  %848 = vmatpush1.msra.mxu0 0.0
  %849 = vmatprep.subr.mxu0 0.0
  %850 = vmatpush1.msra.mxu0 0.0
  %851 = vmatprep.subr.mxu0 0.0
  %852 = vmatpush1.msra.mxu0 0.0
  %853 = vmatprep.subr.mxu0 0.0
  %854 = vmatpush1.msra.mxu0 0.0
  %855 = vmatprep.subr.mxu0 0.0
  %856 = vmatpush1.msra.mxu0 0.0
  %857 = vmatprep.subr.mxu0 0.0
  %858 = vmatpush1.msra.mxu0 0.0
  %859 = vmatprep.subr.mxu0 0.0
  %860 = vmatpush1.msra.mxu0 0.0
  %861 = vmatprep.subr.mxu0 0.0
  %862 = vmatpush1.msra.mxu0 0.0
  %863 = vmatprep.subr.mxu0 0.0
  %864 = vmatpush1.msra.mxu0 0.0
  %865 = vmatprep.subr.mxu0 0.0
  %866 = vmatpush1.msra.mxu0 0.0
  %867 = vmatprep.subr.mxu0 0.0
  %868 = vmatpush1.msra.mxu0 0.0
  %869 = vmatprep.subr.mxu0 0.0
  %870 = vmatpush1.msra.mxu0 0.0
  %871 = vmatprep.subr.mxu0 0.0
  %872 = vmatpush1.msra.mxu0 0.0
  %873 = vmatprep.subr.mxu0 0.0
  %874 = vmatpush1.msra.mxu0 0.0
  %875 = vmatprep.subr.mxu0 0.0
  %876 = vmatpush1.msra.mxu0 0.0
  %877 = vmatprep.subr.mxu0 0.0
  %878 = vmatpush1.msra.mxu0 0.0
  %879 = vmatprep.subr.mxu0 0.0
  %880 = vmatpush1.msra.mxu0 0.0
  %881 = vmatprep.subr.mxu0 0.0
  %882 = vmatpush1.msra.mxu0 0.0
  %883 = vmatprep.subr.mxu0 0.0
  %884 = vmatpush1.msra.mxu0 0.0
  %885 = vmatprep.subr.mxu0 0.0
  %886 = vmatpush1.msra.mxu0 0.0
  %887 = vmatprep.subr.mxu0 0.0
  %888 = vmatpush1.msra.mxu0 0.0
  %889 = vmatprep.subr.mxu0 0.0
  %890 = vmatpush1.msra.mxu0 0.0
  %891 = vmatprep.subr.mxu0 0.0
  %892 = vmatpush1.msra.mxu0 0.0
  %893 = vmatprep.subr.mxu0 0.0
  %894 = vmatpush1.msra.mxu0 0.0
  %895 = vmatprep.subr.mxu0 0.0
  %896 = vmatpush1.msra.mxu0 0.0
  %897 = vmatprep.subr.mxu0 0.0
  %898 = vmatpush1.msra.mxu0 0.0
  %899 = vmatprep.subr.mxu0 0.0
  %900 = vmatpush1.msra.mxu0 0.0
  %901 = vmatprep.subr.mxu0 0.0
  %902 = vmatpush1.msra.mxu0 0.0
  %903 = vmatprep.mubr.f32.mxu0 0.0
  %904 = vmatmul.mubr.f32.gmra.mrb[0].mxu0 %v837
  %v905 = vpop.f32.mrb[0].mxu0
  %v906 = vadd.f32 0.0, %v905
  %v907 = vpop.f32.mrb[0].mxu0
  %908 = vdwg.mxu0
  %910 = vset.pattern.permute.xlu0 0
  %911 = vperm.xlu0 %910, %v827
  %v912 = vpop.permute.xlu0 %911
  %v913 = vlaneseq
  %v914 = vshrl.u32 %v913, 7
  %v915 = vsub.s32 %v759, %v914
  %v916 = vrot.slane %v912, %v915
  %v917 = vsel %vm836, %v916, 0
  %919 = vmatprep.subr.mxu0 0.0
  %920 = vmatpush1.msra.mxu0 %v530
  %921 = vmatprep.subr.mxu0 0.0
  %922 = vmatpush1.msra.mxu0 0.0
  %923 = vmatprep.subr.mxu0 0.0
  %924 = vmatpush1.msra.mxu0 0.0
  %925 = vmatprep.subr.mxu0 0.0
  %926 = vmatpush1.msra.mxu0 0.0
  %927 = vmatprep.subr.mxu0 0.0
  %928 = vmatpush1.msra.mxu0 0.0
  %929 = vmatprep.subr.mxu0 0.0
  %930 = vmatpush1.msra.mxu0 0.0
  %931 = vmatprep.subr.mxu0 0.0
  %932 = vmatpush1.msra.mxu0 0.0
  %933 = vmatprep.subr.mxu0 0.0
  %934 = vmatpush1.msra.mxu0 0.0
  %935 = vmatprep.subr.mxu0 0.0
  %936 = vmatpush1.msra.mxu0 0.0
  %937 = vmatprep.subr.mxu0 0.0
  %938 = vmatpush1.msra.mxu0 0.0
  %939 = vmatprep.subr.mxu0 0.0
  %940 = vmatpush1.msra.mxu0 0.0
  %941 = vmatprep.subr.mxu0 0.0
  %942 = vmatpush1.msra.mxu0 0.0
  %943 = vmatprep.subr.mxu0 0.0
  %944 = vmatpush1.msra.mxu0 0.0
  %945 = vmatprep.subr.mxu0 0.0
  %946 = vmatpush1.msra.mxu0 0.0
  %947 = vmatprep.subr.mxu0 0.0
  %948 = vmatpush1.msra.mxu0 0.0
  %949 = vmatprep.subr.mxu0 0.0
  %950 = vmatpush1.msra.mxu0 0.0
  %951 = vmatprep.subr.mxu0 0.0
  %952 = vmatpush1.msra.mxu0 0.0
  %953 = vmatprep.subr.mxu0 0.0
  %954 = vmatpush1.msra.mxu0 0.0
  %955 = vmatprep.subr.mxu0 0.0
  %956 = vmatpush1.msra.mxu0 0.0
  %957 = vmatprep.subr.mxu0 0.0
  %958 = vmatpush1.msra.mxu0 0.0
  %959 = vmatprep.subr.mxu0 0.0
  %960 = vmatpush1.msra.mxu0 0.0
  %961 = vmatprep.subr.mxu0 0.0
  %962 = vmatpush1.msra.mxu0 0.0
  %963 = vmatprep.subr.mxu0 0.0
  %964 = vmatpush1.msra.mxu0 0.0
  %965 = vmatprep.subr.mxu0 0.0
  %966 = vmatpush1.msra.mxu0 0.0
  %967 = vmatprep.subr.mxu0 0.0
  %968 = vmatpush1.msra.mxu0 0.0
  %969 = vmatprep.subr.mxu0 0.0
  %970 = vmatpush1.msra.mxu0 0.0
  %971 = vmatprep.subr.mxu0 0.0
  %972 = vmatpush1.msra.mxu0 0.0
  %973 = vmatprep.subr.mxu0 0.0
  %974 = vmatpush1.msra.mxu0 0.0
  %975 = vmatprep.subr.mxu0 0.0
  %976 = vmatpush1.msra.mxu0 0.0
  %977 = vmatprep.subr.mxu0 0.0
  %978 = vmatpush1.msra.mxu0 0.0
  %979 = vmatprep.subr.mxu0 0.0
  %980 = vmatpush1.msra.mxu0 0.0
  %981 = vmatprep.subr.mxu0 0.0
  %982 = vmatpush1.msra.mxu0 0.0
  %983 = vmatprep.mubr.f32.mxu0 0.0
  %984 = vmatmul.mubr.f32.gmra.mrb[0].mxu0 %v917
  %v985 = vpop.f32.mrb[0].mxu0
  %v986 = vadd.f32 0.0, %v985
  %v987 = vpop.f32.mrb[0].mxu0
  %988 = vdwg.mxu0
  %v990 = vrot.slane %v617, 1
  %v993 = vadd.f32 %v906, %v617
  %v994 = vadd.f32 %v986, %v990
  %v996 = vrot.slane %v707, 1
  %v999 = vadd.f32 %v993, %v707
  %v1000 = vadd.f32 %v994, %v996
  %v1001 = vxor.u32 %v999, 2147483648
  %v1002 = vxor.u32 %v1000, 2147483648
  %v1003 = vmul.f32 %v1001, 1.442695
  %v1004 = vpow.pop %v1003
  %v1005 = vmul.f32 %v1002, 1.442695
  %v1006 = vpow.pop %v1005
  %v1007 = vadd.f32 %v1004, 1.0
  %v1008 = vadd.f32 %v1006, 1.0
  %v1009 = vrcp.pop %v1007
  %v1010 = vmul.f32 1.0, %v1009
  %v1011 = vrcp.pop %v1008
  %v1012 = vmul.f32 1.0, %v1011
  %v1013 = vtanh.pop %v999
  %v1014 = vtanh.pop %v1000
  %v1015 = vmul.f32 %v1010, 0.0
  %v1016 = vmul.f32 %v1012, 0.0
  %1019 = vrot.lane.b32.xlu0 %v1013, 64
  %v1020 = vpop.permute.xlu0 %1019
  %1021 = vrot.lane.b32.xlu0 %v1014, 64
  %v1022 = vpop.permute.xlu0 %1021
  %v1025 = vmul.f32 %v1010, %v1020
  %v1026 = vmul.f32 %v1012, %v1022
  %1029 = vrot.lane.b32.xlu0 %v1025, 32
  %v1030 = vpop.permute.xlu0 %1029
  %1031 = vrot.lane.b32.xlu0 %v1026, 32
  %v1032 = vpop.permute.xlu0 %1031
  %v1035 = vadd.f32 %v1015, %v1030
  %v1036 = vadd.f32 %v1016, %v1032
  %v1037 = vtanh.pop %v1035
  %v1038 = vtanh.pop %v1036
  %1041 = vrot.lane.b32.xlu0 %v1037, 64
  %v1042 = vpop.permute.xlu0 %1041
  %1043 = vrot.lane.b32.xlu0 %v1038, 64
  %v1044 = vpop.permute.xlu0 %1043
  %v1047 = vmul.f32 %v1010, %v1042
  %v1048 = vmul.f32 %v1012, %v1044
  %v1051 = vrot.slane %v1048, 7
  %v1052 = vsel %vm768, %v1051, %v1047
  %1053 = vrot.lane.b32.xlu0 %v1052, 32
  %v1054 = vpop.permute.xlu0 %1053
  %v1055 = vsel %vm150, %v1054, 0
  %1057 = vmatprep.subr.mxu0 %v633
  %1058 = vmatpush1.msra.mxu0 %v632
  %1059 = vmatprep.subr.mxu0 %v635
  %1060 = vmatpush1.msra.mxu0 %v634
  %1061 = vmatprep.subr.mxu0 %v637
  %1062 = vmatpush1.msra.mxu0 %v636
  %1063 = vmatprep.subr.mxu0 %v639
  %1064 = vmatpush1.msra.mxu0 %v638
  %1065 = vmatprep.subr.mxu0 0.0
  %1066 = vmatpush1.msra.mxu0 0.0
  %1067 = vmatprep.subr.mxu0 0.0
  %1068 = vmatpush1.msra.mxu0 0.0
  %1069 = vmatprep.subr.mxu0 0.0
  %1070 = vmatpush1.msra.mxu0 0.0
  %1071 = vmatprep.subr.mxu0 0.0
  %1072 = vmatpush1.msra.mxu0 0.0
  %1073 = vmatprep.subr.mxu0 0.0
  %1074 = vmatpush1.msra.mxu0 0.0
  %1075 = vmatprep.subr.mxu0 0.0
  %1076 = vmatpush1.msra.mxu0 0.0
  %1077 = vmatprep.subr.mxu0 0.0
  %1078 = vmatpush1.msra.mxu0 0.0
  %1079 = vmatprep.subr.mxu0 0.0
  %1080 = vmatpush1.msra.mxu0 0.0
  %1081 = vmatprep.subr.mxu0 0.0
  %1082 = vmatpush1.msra.mxu0 0.0
  %1083 = vmatprep.subr.mxu0 0.0
  %1084 = vmatpush1.msra.mxu0 0.0
  %1085 = vmatprep.subr.mxu0 0.0
  %1086 = vmatpush1.msra.mxu0 0.0
  %1087 = vmatprep.subr.mxu0 0.0
  %1088 = vmatpush1.msra.mxu0 0.0
  %1089 = vmatprep.subr.mxu0 0.0
  %1090 = vmatpush1.msra.mxu0 0.0
  %1091 = vmatprep.subr.mxu0 0.0
  %1092 = vmatpush1.msra.mxu0 0.0
  %1093 = vmatprep.subr.mxu0 0.0
  %1094 = vmatpush1.msra.mxu0 0.0
  %1095 = vmatprep.subr.mxu0 0.0
  %1096 = vmatpush1.msra.mxu0 0.0
  %1097 = vmatprep.subr.mxu0 0.0
  %1098 = vmatpush1.msra.mxu0 0.0
  %1099 = vmatprep.subr.mxu0 0.0
  %1100 = vmatpush1.msra.mxu0 0.0
  %1101 = vmatprep.subr.mxu0 0.0
  %1102 = vmatpush1.msra.mxu0 0.0
  %1103 = vmatprep.subr.mxu0 0.0
  %1104 = vmatpush1.msra.mxu0 0.0
  %1105 = vmatprep.subr.mxu0 0.0
  %1106 = vmatpush1.msra.mxu0 0.0
  %1107 = vmatprep.subr.mxu0 0.0
  %1108 = vmatpush1.msra.mxu0 0.0
  %1109 = vmatprep.subr.mxu0 0.0
  %1110 = vmatpush1.msra.mxu0 0.0
  %1111 = vmatprep.subr.mxu0 0.0
  %1112 = vmatpush1.msra.mxu0 0.0
  %1113 = vmatprep.subr.mxu0 0.0
  %1114 = vmatpush1.msra.mxu0 0.0
  %1115 = vmatprep.subr.mxu0 0.0
  %1116 = vmatpush1.msra.mxu0 0.0
  %1117 = vmatprep.subr.mxu0 0.0
  %1118 = vmatpush1.msra.mxu0 0.0
  %1119 = vmatprep.subr.mxu0 0.0
  %1120 = vmatpush1.msra.mxu0 0.0
  %1121 = vmatprep.mubr.f32.mxu0 0.0
  %1122 = vmatmul.mubr.f32.gmra.mrb[0].mxu0 %v1055
  %v1123 = vpop.f32.mrb[0].mxu0
  %v1124 = vadd.f32 0.0, %v1123
  %v1125 = vpop.f32.mrb[0].mxu0
  %v1126 = vadd.f32 0.0, %v1125
  %1127 = vdwg.mxu0
  %v1130 = vunpack.c.l.s4 1966171168
  %v1131 = vunpack.c.0.s8 %v1130
  %v1132 = vlaneseq
  %v1133 = vshrl.u32 %v1132, 7
  %v1134 = vsub.s32 %v1131, %v1133
  %v1135 = vrot.slane %v1126, %v1134
  %v1136 = vcombine.high %v1135, %v1135
  %v1138 = vunpack.c.l.s4 1966171168
  %v1139 = vunpack.c.0.s8 %v1138
  %v1140 = vlaneseq
  %v1141 = vshrl.u32 %v1140, 7
  %v1142 = vsub.s32 %v1139, %v1141
  %v1143 = vrot.slane %v1135, %v1142
  %v1145 = vunpack.c.l.s4 1966171168
  %v1146 = vunpack.c.0.s8 %v1145
  %v1147 = vlaneseq
  %v1148 = vshrl.u32 %v1147, 7
  %v1149 = vsub.s32 %v1146, %v1148
  %v1150 = vrot.slane %v1136, %v1149
  %v1151 = vlaneseq
  %v1152 = vshrl.u32 %v1151, 7
  %v1153 = vsub.s32 0, %v1152
  %v1154 = vrot.slane %v1143, %v1153
  %v1155 = vlaneseq
  %v1156 = vshrl.u32 %v1155, 7
  %v1157 = vsub.s32 0, %v1156
  %v1158 = vrot.slane %v1150, %v1157
  %v1161 = vadd.f32 %v446, %v1154
  %v1162 = vadd.f32 %v451, %v1158
  %v1163 = vtanh.pop %v1161
  %v1164 = vtanh.pop %v1162
  %v1165 = vmul.f32 %v1163, %v630
  %v1166 = vmul.f32 %v1164, %v630
  %v1167 = vsel %vm150, %v1165, 0.0
  %1168 = vadd.xlane.f32.xlu0 %v1167
  %v1169 = vpop.xlane.xlu0 %1168
  %v1170 = vsel %vm150, %v1166, 0.0
  %1171 = vadd.xlane.f32.xlu0 %v1170
  %v1172 = vpop.xlane.xlu0 %1171
  %v1175 = vlaneseq
  %v1176 = vshrl.u32 %v1175, 7
  %v1177 = vsub.s32 %v759, %v1176
  %v1178 = vrot.slane %v1169, %v1177
  %v1179 = vlaneseq
  %v1180 = vshrl.u32 %v1179, 7
  %v1181 = vsub.s32 %v759, %v1180
  %v1182 = vrot.slane %v1172, %v1181
  %v1183 = vsel %vm768, %v1182, %v1178
  %v1185 = vsel %vm771, %v1183, -inf
  %1186 = vmax.xlane.f32.xlu0 %v1185
  %v1187 = vpop.xlane.xlu0 %1186
  %v1189 = vlaneseq
  %v1190 = vshrl.u32 %v1189, 7
  %v1191 = vsub.s32 0, %v1190
  %v1192 = vrot.slane %v1187, %v1191
  %v1193 = vlaneseq
  %v1194 = vshrl.u32 %v1193, 7
  %v1195 = vsub.s32 1, %v1194
  %v1196 = vrot.slane %v1187, %v1195
  %v1199 = vsub.f32 %v1169, %v1192
  %v1200 = vsub.f32 %v1172, %v1196
  %v1201 = vmul.f32 %v1199, 1.442695
  %v1202 = vpow.pop %v1201
  %v1203 = vmul.f32 %v1200, 1.442695
  %v1204 = vpow.pop %v1203
  %1207 = vset.pattern.permute.xlu0 0
  %1208 = vperm.xlu0 %1207, %v1202
  %v1209 = vpop.permute.xlu0 %1208
  %1210 = vset.pattern.permute.xlu0 0
  %1211 = vperm.xlu0 %1210, %v1204
  %v1212 = vpop.permute.xlu0 %1211
  %v1213 = vlaneseq
  %v1214 = vshrl.u32 %v1213, 7
  %v1215 = vsub.s32 %v759, %v1214
  %v1216 = vrot.slane %v1209, %v1215
  %v1217 = vlaneseq
  %v1218 = vshrl.u32 %v1217, 7
  %v1219 = vsub.s32 %v759, %v1218
  %v1220 = vrot.slane %v1212, %v1219
  %v1221 = vsel %vm768, %v1220, %v1216
  %v1223 = vsel %vm771, %v1221, 0.0
  %1224 = vadd.xlane.f32.xlu0 %v1223
  %v1225 = vpop.xlane.xlu0 %1224
  %v1227 = vlaneseq
  %v1228 = vshrl.u32 %v1227, 7
  %v1229 = vsub.s32 0, %v1228
  %v1230 = vrot.slane %v1225, %v1229
  %v1231 = vlaneseq
  %v1232 = vshrl.u32 %v1231, 7
  %v1233 = vsub.s32 1, %v1232
  %v1234 = vrot.slane %v1225, %v1233
  %v1237 = vrcp.pop %v1230
  %v1238 = vmul.f32 %v1202, %v1237
  %v1239 = vrcp.pop %v1234
  %v1240 = vmul.f32 %v1204, %v1239
  %1242 = vset.pattern.permute.xlu0 0
  %1243 = vperm.xlu0 %1242, %v1238
  %v1244 = vpop.permute.xlu0 %1243
  %v1245 = vlaneseq
  %v1246 = vshrl.u32 %v1245, 7
  %v1247 = vsub.s32 %v759, %v1246
  %v1248 = vrot.slane %v1244, %v1247
  %v1249 = vsel %vm836, %v1248, 0
  %1251 = vmatprep.subr.mxu0 0.0
  %1252 = vmatpush1.msra.mxu0 %v525
  %1253 = vmatprep.subr.mxu0 0.0
  %1254 = vmatpush1.msra.mxu0 0.0
  %1255 = vmatprep.subr.mxu0 0.0
  %1256 = vmatpush1.msra.mxu0 0.0
  %1257 = vmatprep.subr.mxu0 0.0
  %1258 = vmatpush1.msra.mxu0 0.0
  %1259 = vmatprep.subr.mxu0 0.0
  %1260 = vmatpush1.msra.mxu0 0.0
  %1261 = vmatprep.subr.mxu0 0.0
  %1262 = vmatpush1.msra.mxu0 0.0
  %1263 = vmatprep.subr.mxu0 0.0
  %1264 = vmatpush1.msra.mxu0 0.0
  %1265 = vmatprep.subr.mxu0 0.0
  %1266 = vmatpush1.msra.mxu0 0.0
  %1267 = vmatprep.subr.mxu0 0.0
  %1268 = vmatpush1.msra.mxu0 0.0
  %1269 = vmatprep.subr.mxu0 0.0
  %1270 = vmatpush1.msra.mxu0 0.0
  %1271 = vmatprep.subr.mxu0 0.0
  %1272 = vmatpush1.msra.mxu0 0.0
  %1273 = vmatprep.subr.mxu0 0.0
  %1274 = vmatpush1.msra.mxu0 0.0
  %1275 = vmatprep.subr.mxu0 0.0
  %1276 = vmatpush1.msra.mxu0 0.0
  %1277 = vmatprep.subr.mxu0 0.0
  %1278 = vmatpush1.msra.mxu0 0.0
  %1279 = vmatprep.subr.mxu0 0.0
  %1280 = vmatpush1.msra.mxu0 0.0
  %1281 = vmatprep.subr.mxu0 0.0
  %1282 = vmatpush1.msra.mxu0 0.0
  %1283 = vmatprep.subr.mxu0 0.0
  %1284 = vmatpush1.msra.mxu0 0.0
  %1285 = vmatprep.subr.mxu0 0.0
  %1286 = vmatpush1.msra.mxu0 0.0
  %1287 = vmatprep.subr.mxu0 0.0
  %1288 = vmatpush1.msra.mxu0 0.0
  %1289 = vmatprep.subr.mxu0 0.0
  %1290 = vmatpush1.msra.mxu0 0.0
  %1291 = vmatprep.subr.mxu0 0.0
  %1292 = vmatpush1.msra.mxu0 0.0
  %1293 = vmatprep.subr.mxu0 0.0
  %1294 = vmatpush1.msra.mxu0 0.0
  %1295 = vmatprep.subr.mxu0 0.0
  %1296 = vmatpush1.msra.mxu0 0.0
  %1297 = vmatprep.subr.mxu0 0.0
  %1298 = vmatpush1.msra.mxu0 0.0
  %1299 = vmatprep.subr.mxu0 0.0
  %1300 = vmatpush1.msra.mxu0 0.0
  %1301 = vmatprep.subr.mxu0 0.0
  %1302 = vmatpush1.msra.mxu0 0.0
  %1303 = vmatprep.subr.mxu0 0.0
  %1304 = vmatpush1.msra.mxu0 0.0
  %1305 = vmatprep.subr.mxu0 0.0
  %1306 = vmatpush1.msra.mxu0 0.0
  %1307 = vmatprep.subr.mxu0 0.0
  %1308 = vmatpush1.msra.mxu0 0.0
  %1309 = vmatprep.subr.mxu0 0.0
  %1310 = vmatpush1.msra.mxu0 0.0
  %1311 = vmatprep.subr.mxu0 0.0
  %1312 = vmatpush1.msra.mxu0 0.0
  %1313 = vmatprep.subr.mxu0 0.0
  %1314 = vmatpush1.msra.mxu0 0.0
  %1315 = vmatprep.mubr.f32.mxu0 0.0
  %1316 = vmatmul.mubr.f32.gmra.mrb[0].mxu0 %v1249
  %v1317 = vpop.f32.mrb[0].mxu0
  %v1318 = vadd.f32 0.0, %v1317
  %v1319 = vpop.f32.mrb[0].mxu0
  %1320 = vdwg.mxu0
  %1322 = vset.pattern.permute.xlu0 0
  %1323 = vperm.xlu0 %1322, %v1240
  %v1324 = vpop.permute.xlu0 %1323
  %v1325 = vlaneseq
  %v1326 = vshrl.u32 %v1325, 7
  %v1327 = vsub.s32 %v759, %v1326
  %v1328 = vrot.slane %v1324, %v1327
  %v1329 = vsel %vm836, %v1328, 0
  %1331 = vmatprep.subr.mxu0 0.0
  %1332 = vmatpush1.msra.mxu0 %v530
  %1333 = vmatprep.subr.mxu0 0.0
  %1334 = vmatpush1.msra.mxu0 0.0
  %1335 = vmatprep.subr.mxu0 0.0
  %1336 = vmatpush1.msra.mxu0 0.0
  %1337 = vmatprep.subr.mxu0 0.0
  %1338 = vmatpush1.msra.mxu0 0.0
  %1339 = vmatprep.subr.mxu0 0.0
  %1340 = vmatpush1.msra.mxu0 0.0
  %1341 = vmatprep.subr.mxu0 0.0
  %1342 = vmatpush1.msra.mxu0 0.0
  %1343 = vmatprep.subr.mxu0 0.0
  %1344 = vmatpush1.msra.mxu0 0.0
  %1345 = vmatprep.subr.mxu0 0.0
  %1346 = vmatpush1.msra.mxu0 0.0
  %1347 = vmatprep.subr.mxu0 0.0
  %1348 = vmatpush1.msra.mxu0 0.0
  %1349 = vmatprep.subr.mxu0 0.0
  %1350 = vmatpush1.msra.mxu0 0.0
  %1351 = vmatprep.subr.mxu0 0.0
  %1352 = vmatpush1.msra.mxu0 0.0
  %1353 = vmatprep.subr.mxu0 0.0
  %1354 = vmatpush1.msra.mxu0 0.0
  %1355 = vmatprep.subr.mxu0 0.0
  %1356 = vmatpush1.msra.mxu0 0.0
  %1357 = vmatprep.subr.mxu0 0.0
  %1358 = vmatpush1.msra.mxu0 0.0
  %1359 = vmatprep.subr.mxu0 0.0
  %1360 = vmatpush1.msra.mxu0 0.0
  %1361 = vmatprep.subr.mxu0 0.0
  %1362 = vmatpush1.msra.mxu0 0.0
  %1363 = vmatprep.subr.mxu0 0.0
  %1364 = vmatpush1.msra.mxu0 0.0
  %1365 = vmatprep.subr.mxu0 0.0
  %1366 = vmatpush1.msra.mxu0 0.0
  %1367 = vmatprep.subr.mxu0 0.0
  %1368 = vmatpush1.msra.mxu0 0.0
  %1369 = vmatprep.subr.mxu0 0.0
  %1370 = vmatpush1.msra.mxu0 0.0
  %1371 = vmatprep.subr.mxu0 0.0
  %1372 = vmatpush1.msra.mxu0 0.0
  %1373 = vmatprep.subr.mxu0 0.0
  %1374 = vmatpush1.msra.mxu0 0.0
  %1375 = vmatprep.subr.mxu0 0.0
  %1376 = vmatpush1.msra.mxu0 0.0
  %1377 = vmatprep.subr.mxu0 0.0
  %1378 = vmatpush1.msra.mxu0 0.0
  %1379 = vmatprep.subr.mxu0 0.0
  %1380 = vmatpush1.msra.mxu0 0.0
  %1381 = vmatprep.subr.mxu0 0.0
  %1382 = vmatpush1.msra.mxu0 0.0
  %1383 = vmatprep.subr.mxu0 0.0
  %1384 = vmatpush1.msra.mxu0 0.0
  %1385 = vmatprep.subr.mxu0 0.0
  %1386 = vmatpush1.msra.mxu0 0.0
  %1387 = vmatprep.subr.mxu0 0.0
  %1388 = vmatpush1.msra.mxu0 0.0
  %1389 = vmatprep.subr.mxu0 0.0
  %1390 = vmatpush1.msra.mxu0 0.0
  %1391 = vmatprep.subr.mxu0 0.0
  %1392 = vmatpush1.msra.mxu0 0.0
  %1393 = vmatprep.subr.mxu0 0.0
  %1394 = vmatpush1.msra.mxu0 0.0
  %1395 = vmatprep.mubr.f32.mxu0 0.0
  %1396 = vmatmul.mubr.f32.gmra.mrb[0].mxu0 %v1329
  %v1397 = vpop.f32.mrb[0].mxu0
  %v1398 = vadd.f32 0.0, %v1397
  %v1399 = vpop.f32.mrb[0].mxu0
  %1400 = vdwg.mxu0
  %v1401 = vrot.slane %v617, 2
  %v1402 = vrot.slane %v617, 3
  %v1405 = vadd.f32 %v1318, %v1401
  %v1406 = vadd.f32 %v1398, %v1402
  %v1408 = vrot.slane %v1124, 1
  %v1411 = vadd.f32 %v1405, %v1124
  %v1412 = vadd.f32 %v1406, %v1408
  %v1413 = vxor.u32 %v1411, 2147483648
  %v1414 = vxor.u32 %v1412, 2147483648
  %v1415 = vmul.f32 %v1413, 1.442695
  %v1416 = vpow.pop %v1415
  %v1417 = vmul.f32 %v1414, 1.442695
  %v1418 = vpow.pop %v1417
  %v1419 = vadd.f32 %v1416, 1.0
  %v1420 = vadd.f32 %v1418, 1.0
  %v1421 = vrcp.pop %v1419
  %v1422 = vmul.f32 1.0, %v1421
  %v1423 = vrcp.pop %v1420
  %v1424 = vmul.f32 1.0, %v1423
  %v1425 = vtanh.pop %v1411
  %v1426 = vtanh.pop %v1412
  %v1427 = vmul.f32 %v1422, %v1035
  %v1428 = vmul.f32 %v1424, %v1036
  %1431 = vrot.lane.b32.xlu0 %v1425, 64
  %v1432 = vpop.permute.xlu0 %1431
  %1433 = vrot.lane.b32.xlu0 %v1426, 64
  %v1434 = vpop.permute.xlu0 %1433
  %v1437 = vmul.f32 %v1422, %v1432
  %v1438 = vmul.f32 %v1424, %v1434
  %1441 = vrot.lane.b32.xlu0 %v1437, 32
  %v1442 = vpop.permute.xlu0 %1441
  %1443 = vrot.lane.b32.xlu0 %v1438, 32
  %v1444 = vpop.permute.xlu0 %1443
  %v1447 = vadd.f32 %v1427, %v1442
  %v1448 = vadd.f32 %v1428, %v1444
  %v1449 = vtanh.pop %v1447
  %v1450 = vtanh.pop %v1448
  %1453 = vrot.lane.b32.xlu0 %v1449, 64
  %v1454 = vpop.permute.xlu0 %1453
  %1455 = vrot.lane.b32.xlu0 %v1450, 64
  %v1456 = vpop.permute.xlu0 %1455
  %v1459 = vmul.f32 %v1422, %v1454
  %v1460 = vmul.f32 %v1424, %v1456
  %v1463 = vrot.slane %v1460, 7
  %v1464 = vsel %vm768, %v1463, %v1459
  %1465 = vrot.lane.b32.xlu0 %v1464, 32
  %v1466 = vpop.permute.xlu0 %1465
  %v1467 = vsel %vm150, %v1466, 0
  %1469 = vmatprep.subr.mxu0 %v633
  %1470 = vmatpush1.msra.mxu0 %v632
  %1471 = vmatprep.subr.mxu0 %v635
  %1472 = vmatpush1.msra.mxu0 %v634
  %1473 = vmatprep.subr.mxu0 %v637
  %1474 = vmatpush1.msra.mxu0 %v636
  %1475 = vmatprep.subr.mxu0 %v639
  %1476 = vmatpush1.msra.mxu0 %v638
  %1477 = vmatprep.subr.mxu0 0.0
  %1478 = vmatpush1.msra.mxu0 0.0
  %1479 = vmatprep.subr.mxu0 0.0
  %1480 = vmatpush1.msra.mxu0 0.0
  %1481 = vmatprep.subr.mxu0 0.0
  %1482 = vmatpush1.msra.mxu0 0.0
  %1483 = vmatprep.subr.mxu0 0.0
  %1484 = vmatpush1.msra.mxu0 0.0
  %1485 = vmatprep.subr.mxu0 0.0
  %1486 = vmatpush1.msra.mxu0 0.0
  %1487 = vmatprep.subr.mxu0 0.0
  %1488 = vmatpush1.msra.mxu0 0.0
  %1489 = vmatprep.subr.mxu0 0.0
  %1490 = vmatpush1.msra.mxu0 0.0
  %1491 = vmatprep.subr.mxu0 0.0
  %1492 = vmatpush1.msra.mxu0 0.0
  %1493 = vmatprep.subr.mxu0 0.0
  %1494 = vmatpush1.msra.mxu0 0.0
  %1495 = vmatprep.subr.mxu0 0.0
  %1496 = vmatpush1.msra.mxu0 0.0
  %1497 = vmatprep.subr.mxu0 0.0
  %1498 = vmatpush1.msra.mxu0 0.0
  %1499 = vmatprep.subr.mxu0 0.0
  %1500 = vmatpush1.msra.mxu0 0.0
  %1501 = vmatprep.subr.mxu0 0.0
  %1502 = vmatpush1.msra.mxu0 0.0
  %1503 = vmatprep.subr.mxu0 0.0
  %1504 = vmatpush1.msra.mxu0 0.0
  %1505 = vmatprep.subr.mxu0 0.0
  %1506 = vmatpush1.msra.mxu0 0.0
  %1507 = vmatprep.subr.mxu0 0.0
  %1508 = vmatpush1.msra.mxu0 0.0
  %1509 = vmatprep.subr.mxu0 0.0
  %1510 = vmatpush1.msra.mxu0 0.0
  %1511 = vmatprep.subr.mxu0 0.0
  %1512 = vmatpush1.msra.mxu0 0.0
  %1513 = vmatprep.subr.mxu0 0.0
  %1514 = vmatpush1.msra.mxu0 0.0
  %1515 = vmatprep.subr.mxu0 0.0
  %1516 = vmatpush1.msra.mxu0 0.0
  %1517 = vmatprep.subr.mxu0 0.0
  %1518 = vmatpush1.msra.mxu0 0.0
  %1519 = vmatprep.subr.mxu0 0.0
  %1520 = vmatpush1.msra.mxu0 0.0
  %1521 = vmatprep.subr.mxu0 0.0
  %1522 = vmatpush1.msra.mxu0 0.0
  %1523 = vmatprep.subr.mxu0 0.0
  %1524 = vmatpush1.msra.mxu0 0.0
  %1525 = vmatprep.subr.mxu0 0.0
  %1526 = vmatpush1.msra.mxu0 0.0
  %1527 = vmatprep.subr.mxu0 0.0
  %1528 = vmatpush1.msra.mxu0 0.0
  %1529 = vmatprep.subr.mxu0 0.0
  %1530 = vmatpush1.msra.mxu0 0.0
  %1531 = vmatprep.subr.mxu0 0.0
  %1532 = vmatpush1.msra.mxu0 0.0
  %1533 = vmatprep.mubr.f32.mxu0 0.0
  %1534 = vmatmul.mubr.f32.gmra.mrb[0].mxu0 %v1467
  %v1535 = vpop.f32.mrb[0].mxu0
  %v1536 = vadd.f32 0.0, %v1535
  %v1537 = vpop.f32.mrb[0].mxu0
  %v1538 = vadd.f32 0.0, %v1537
  %1539 = vdwg.mxu0
  %v1542 = vunpack.c.l.s4 1966171168
  %v1543 = vunpack.c.0.s8 %v1542
  %v1544 = vlaneseq
  %v1545 = vshrl.u32 %v1544, 7
  %v1546 = vsub.s32 %v1543, %v1545
  %v1547 = vrot.slane %v1538, %v1546
  %v1548 = vcombine.high %v1547, %v1547
  %v1550 = vunpack.c.l.s4 1966171168
  %v1551 = vunpack.c.0.s8 %v1550
  %v1552 = vlaneseq
  %v1553 = vshrl.u32 %v1552, 7
  %v1554 = vsub.s32 %v1551, %v1553
  %v1555 = vrot.slane %v1547, %v1554
  %v1557 = vunpack.c.l.s4 1966171168
  %v1558 = vunpack.c.0.s8 %v1557
  %v1559 = vlaneseq
  %v1560 = vshrl.u32 %v1559, 7
  %v1561 = vsub.s32 %v1558, %v1560
  %v1562 = vrot.slane %v1548, %v1561
  %v1563 = vlaneseq
  %v1564 = vshrl.u32 %v1563, 7
  %v1565 = vsub.s32 0, %v1564
  %v1566 = vrot.slane %v1555, %v1565
  %v1567 = vlaneseq
  %v1568 = vshrl.u32 %v1567, 7
  %v1569 = vsub.s32 0, %v1568
  %v1570 = vrot.slane %v1562, %v1569
  %v1573 = vadd.f32 %v446, %v1566
  %v1574 = vadd.f32 %v451, %v1570
  %v1575 = vtanh.pop %v1573
  %v1576 = vtanh.pop %v1574
  %v1577 = vmul.f32 %v1575, %v630
  %v1578 = vmul.f32 %v1576, %v630
  %v1579 = vsel %vm150, %v1577, 0.0
  %1580 = vadd.xlane.f32.xlu0 %v1579
  %v1581 = vpop.xlane.xlu0 %1580
  %v1582 = vsel %vm150, %v1578, 0.0
  %1583 = vadd.xlane.f32.xlu0 %v1582
  %v1584 = vpop.xlane.xlu0 %1583
  %v1587 = vlaneseq
  %v1588 = vshrl.u32 %v1587, 7
  %v1589 = vsub.s32 %v759, %v1588
  %v1590 = vrot.slane %v1581, %v1589
  %v1591 = vlaneseq
  %v1592 = vshrl.u32 %v1591, 7
  %v1593 = vsub.s32 %v759, %v1592
  %v1594 = vrot.slane %v1584, %v1593
  %v1595 = vsel %vm768, %v1594, %v1590
  %v1597 = vsel %vm771, %v1595, -inf
  %1598 = vmax.xlane.f32.xlu0 %v1597
  %v1599 = vpop.xlane.xlu0 %1598
  %v1601 = vlaneseq
  %v1602 = vshrl.u32 %v1601, 7
  %v1603 = vsub.s32 0, %v1602
  %v1604 = vrot.slane %v1599, %v1603
  %v1605 = vlaneseq
  %v1606 = vshrl.u32 %v1605, 7
  %v1607 = vsub.s32 1, %v1606
  %v1608 = vrot.slane %v1599, %v1607
  %v1611 = vsub.f32 %v1581, %v1604
  %v1612 = vsub.f32 %v1584, %v1608
  %v1613 = vmul.f32 %v1611, 1.442695
  %v1614 = vpow.pop %v1613
  %v1615 = vmul.f32 %v1612, 1.442695
  %v1616 = vpow.pop %v1615
  %1619 = vset.pattern.permute.xlu0 0
  %1620 = vperm.xlu0 %1619, %v1614
  %v1621 = vpop.permute.xlu0 %1620
  %1622 = vset.pattern.permute.xlu0 0
  %1623 = vperm.xlu0 %1622, %v1616
  %v1624 = vpop.permute.xlu0 %1623
  %v1625 = vlaneseq
  %v1626 = vshrl.u32 %v1625, 7
  %v1627 = vsub.s32 %v759, %v1626
  %v1628 = vrot.slane %v1621, %v1627
  %v1629 = vlaneseq
  %v1630 = vshrl.u32 %v1629, 7
  %v1631 = vsub.s32 %v759, %v1630
  %v1632 = vrot.slane %v1624, %v1631
  %v1633 = vsel %vm768, %v1632, %v1628
  %v1635 = vsel %vm771, %v1633, 0.0
  %1636 = vadd.xlane.f32.xlu0 %v1635
  %v1637 = vpop.xlane.xlu0 %1636
  %v1639 = vlaneseq
  %v1640 = vshrl.u32 %v1639, 7
  %v1641 = vsub.s32 0, %v1640
  %v1642 = vrot.slane %v1637, %v1641
  %v1643 = vlaneseq
  %v1644 = vshrl.u32 %v1643, 7
  %v1645 = vsub.s32 1, %v1644
  %v1646 = vrot.slane %v1637, %v1645
  %v1649 = vrcp.pop %v1642
  %v1650 = vmul.f32 %v1614, %v1649
  %v1651 = vrcp.pop %v1646
  %v1652 = vmul.f32 %v1616, %v1651
  %1654 = vset.pattern.permute.xlu0 0
  %1655 = vperm.xlu0 %1654, %v1650
  %v1656 = vpop.permute.xlu0 %1655
  %v1657 = vlaneseq
  %v1658 = vshrl.u32 %v1657, 7
  %v1659 = vsub.s32 %v759, %v1658
  %v1660 = vrot.slane %v1656, %v1659
  %v1661 = vsel %vm836, %v1660, 0
  %1663 = vmatprep.subr.mxu0 0.0
  %1664 = vmatpush1.msra.mxu0 %v525
  %1665 = vmatprep.subr.mxu0 0.0
  %1666 = vmatpush1.msra.mxu0 0.0
  %1667 = vmatprep.subr.mxu0 0.0
  %1668 = vmatpush1.msra.mxu0 0.0
  %1669 = vmatprep.subr.mxu0 0.0
  %1670 = vmatpush1.msra.mxu0 0.0
  %1671 = vmatprep.subr.mxu0 0.0
  %1672 = vmatpush1.msra.mxu0 0.0
  %1673 = vmatprep.subr.mxu0 0.0
  %1674 = vmatpush1.msra.mxu0 0.0
  %1675 = vmatprep.subr.mxu0 0.0
  %1676 = vmatpush1.msra.mxu0 0.0
  %1677 = vmatprep.subr.mxu0 0.0
  %1678 = vmatpush1.msra.mxu0 0.0
  %1679 = vmatprep.subr.mxu0 0.0
  %1680 = vmatpush1.msra.mxu0 0.0
  %1681 = vmatprep.subr.mxu0 0.0
  %1682 = vmatpush1.msra.mxu0 0.0
  %1683 = vmatprep.subr.mxu0 0.0
  %1684 = vmatpush1.msra.mxu0 0.0
  %1685 = vmatprep.subr.mxu0 0.0
  %1686 = vmatpush1.msra.mxu0 0.0
  %1687 = vmatprep.subr.mxu0 0.0
  %1688 = vmatpush1.msra.mxu0 0.0
  %1689 = vmatprep.subr.mxu0 0.0
  %1690 = vmatpush1.msra.mxu0 0.0
  %1691 = vmatprep.subr.mxu0 0.0
  %1692 = vmatpush1.msra.mxu0 0.0
  %1693 = vmatprep.subr.mxu0 0.0
  %1694 = vmatpush1.msra.mxu0 0.0
  %1695 = vmatprep.subr.mxu0 0.0
  %1696 = vmatpush1.msra.mxu0 0.0
  %1697 = vmatprep.subr.mxu0 0.0
  %1698 = vmatpush1.msra.mxu0 0.0
  %1699 = vmatprep.subr.mxu0 0.0
  %1700 = vmatpush1.msra.mxu0 0.0
  %1701 = vmatprep.subr.mxu0 0.0
  %1702 = vmatpush1.msra.mxu0 0.0
  %1703 = vmatprep.subr.mxu0 0.0
  %1704 = vmatpush1.msra.mxu0 0.0
  %1705 = vmatprep.subr.mxu0 0.0
  %1706 = vmatpush1.msra.mxu0 0.0
  %1707 = vmatprep.subr.mxu0 0.0
  %1708 = vmatpush1.msra.mxu0 0.0
  %1709 = vmatprep.subr.mxu0 0.0
  %1710 = vmatpush1.msra.mxu0 0.0
  %1711 = vmatprep.subr.mxu0 0.0
  %1712 = vmatpush1.msra.mxu0 0.0
  %1713 = vmatprep.subr.mxu0 0.0
  %1714 = vmatpush1.msra.mxu0 0.0
  %1715 = vmatprep.subr.mxu0 0.0
  %1716 = vmatpush1.msra.mxu0 0.0
  %1717 = vmatprep.subr.mxu0 0.0
  %1718 = vmatpush1.msra.mxu0 0.0
  %1719 = vmatprep.subr.mxu0 0.0
  %1720 = vmatpush1.msra.mxu0 0.0
  %1721 = vmatprep.subr.mxu0 0.0
  %1722 = vmatpush1.msra.mxu0 0.0
  %1723 = vmatprep.subr.mxu0 0.0
  %1724 = vmatpush1.msra.mxu0 0.0
  %1725 = vmatprep.subr.mxu0 0.0
  %1726 = vmatpush1.msra.mxu0 0.0
  %1727 = vmatprep.mubr.f32.mxu0 0.0
  %1728 = vmatmul.mubr.f32.gmra.mrb[0].mxu0 %v1661
  %v1729 = vpop.f32.mrb[0].mxu0
  %v1730 = vadd.f32 0.0, %v1729
  %v1731 = vpop.f32.mrb[0].mxu0
  %1732 = vdwg.mxu0
  %1734 = vset.pattern.permute.xlu0 0
  %1735 = vperm.xlu0 %1734, %v1652
  %v1736 = vpop.permute.xlu0 %1735
  %v1737 = vlaneseq
  %v1738 = vshrl.u32 %v1737, 7
  %v1739 = vsub.s32 %v759, %v1738
  %v1740 = vrot.slane %v1736, %v1739
  %v1741 = vsel %vm836, %v1740, 0
  %1743 = vmatprep.subr.mxu0 0.0
  %1744 = vmatpush1.msra.mxu0 %v530
  %1745 = vmatprep.subr.mxu0 0.0
  %1746 = vmatpush1.msra.mxu0 0.0
  %1747 = vmatprep.subr.mxu0 0.0
  %1748 = vmatpush1.msra.mxu0 0.0
  %1749 = vmatprep.subr.mxu0 0.0
  %1750 = vmatpush1.msra.mxu0 0.0
  %1751 = vmatprep.subr.mxu0 0.0
  %1752 = vmatpush1.msra.mxu0 0.0
  %1753 = vmatprep.subr.mxu0 0.0
  %1754 = vmatpush1.msra.mxu0 0.0
  %1755 = vmatprep.subr.mxu0 0.0
  %1756 = vmatpush1.msra.mxu0 0.0
  %1757 = vmatprep.subr.mxu0 0.0
  %1758 = vmatpush1.msra.mxu0 0.0
  %1759 = vmatprep.subr.mxu0 0.0
  %1760 = vmatpush1.msra.mxu0 0.0
  %1761 = vmatprep.subr.mxu0 0.0
  %1762 = vmatpush1.msra.mxu0 0.0
  %1763 = vmatprep.subr.mxu0 0.0
  %1764 = vmatpush1.msra.mxu0 0.0
  %1765 = vmatprep.subr.mxu0 0.0
  %1766 = vmatpush1.msra.mxu0 0.0
  %1767 = vmatprep.subr.mxu0 0.0
  %1768 = vmatpush1.msra.mxu0 0.0
  %1769 = vmatprep.subr.mxu0 0.0
  %1770 = vmatpush1.msra.mxu0 0.0
  %1771 = vmatprep.subr.mxu0 0.0
  %1772 = vmatpush1.msra.mxu0 0.0
  %1773 = vmatprep.subr.mxu0 0.0
  %1774 = vmatpush1.msra.mxu0 0.0
  %1775 = vmatprep.subr.mxu0 0.0
  %1776 = vmatpush1.msra.mxu0 0.0
  %1777 = vmatprep.subr.mxu0 0.0
  %1778 = vmatpush1.msra.mxu0 0.0
  %1779 = vmatprep.subr.mxu0 0.0
  %1780 = vmatpush1.msra.mxu0 0.0
  %1781 = vmatprep.subr.mxu0 0.0
  %1782 = vmatpush1.msra.mxu0 0.0
  %1783 = vmatprep.subr.mxu0 0.0
  %1784 = vmatpush1.msra.mxu0 0.0
  %1785 = vmatprep.subr.mxu0 0.0
  %1786 = vmatpush1.msra.mxu0 0.0
  %1787 = vmatprep.subr.mxu0 0.0
  %1788 = vmatpush1.msra.mxu0 0.0
  %1789 = vmatprep.subr.mxu0 0.0
  %1790 = vmatpush1.msra.mxu0 0.0
  %1791 = vmatprep.subr.mxu0 0.0
  %1792 = vmatpush1.msra.mxu0 0.0
  %1793 = vmatprep.subr.mxu0 0.0
  %1794 = vmatpush1.msra.mxu0 0.0
  %1795 = vmatprep.subr.mxu0 0.0
  %1796 = vmatpush1.msra.mxu0 0.0
  %1797 = vmatprep.subr.mxu0 0.0
  %1798 = vmatpush1.msra.mxu0 0.0
  %1799 = vmatprep.subr.mxu0 0.0
  %1800 = vmatpush1.msra.mxu0 0.0
  %1801 = vmatprep.subr.mxu0 0.0
  %1802 = vmatpush1.msra.mxu0 0.0
  %1803 = vmatprep.subr.mxu0 0.0
  %1804 = vmatpush1.msra.mxu0 0.0
  %1805 = vmatprep.subr.mxu0 0.0
  %1806 = vmatpush1.msra.mxu0 0.0
  %1807 = vmatprep.mubr.f32.mxu0 0.0
  %1808 = vmatmul.mubr.f32.gmra.mrb[0].mxu0 %v1741
  %v1809 = vpop.f32.mrb[0].mxu0
  %v1810 = vadd.f32 0.0, %v1809
  %v1811 = vpop.f32.mrb[0].mxu0
  %1812 = vdwg.mxu0
  %v1813 = vrot.slane %v617, 4
  %v1814 = vrot.slane %v617, 5
  %v1817 = vadd.f32 %v1730, %v1813
  %v1818 = vadd.f32 %v1810, %v1814
  %v1820 = vrot.slane %v1536, 1
  %v1823 = vadd.f32 %v1817, %v1536
  %v1824 = vadd.f32 %v1818, %v1820
  %v1825 = vxor.u32 %v1823, 2147483648
  %v1826 = vxor.u32 %v1824, 2147483648
  %v1827 = vmul.f32 %v1825, 1.442695
  %v1828 = vpow.pop %v1827
  %v1829 = vmul.f32 %v1826, 1.442695
  %v1830 = vpow.pop %v1829
  %v1831 = vadd.f32 %v1828, 1.0
  %v1832 = vadd.f32 %v1830, 1.0
  %v1833 = vrcp.pop %v1831
  %v1834 = vmul.f32 1.0, %v1833
  %v1835 = vrcp.pop %v1832
  %v1836 = vmul.f32 1.0, %v1835
  %v1837 = vtanh.pop %v1823
  %v1838 = vtanh.pop %v1824
  %v1839 = vmul.f32 %v1834, %v1447
  %v1840 = vmul.f32 %v1836, %v1448
  %1843 = vrot.lane.b32.xlu0 %v1837, 64
  %v1844 = vpop.permute.xlu0 %1843
  %1845 = vrot.lane.b32.xlu0 %v1838, 64
  %v1846 = vpop.permute.xlu0 %1845
  %v1849 = vmul.f32 %v1834, %v1844
  %v1850 = vmul.f32 %v1836, %v1846
  %1853 = vrot.lane.b32.xlu0 %v1849, 32
  %v1854 = vpop.permute.xlu0 %1853
  %1855 = vrot.lane.b32.xlu0 %v1850, 32
  %v1856 = vpop.permute.xlu0 %1855
  %v1859 = vadd.f32 %v1839, %v1854
  %v1860 = vadd.f32 %v1840, %v1856
  %v1861 = vtanh.pop %v1859
  %v1862 = vtanh.pop %v1860
  %1865 = vrot.lane.b32.xlu0 %v1861, 64
  %v1866 = vpop.permute.xlu0 %1865
  %1867 = vrot.lane.b32.xlu0 %v1862, 64
  %v1868 = vpop.permute.xlu0 %1867
  %v1871 = vmul.f32 %v1834, %v1866
  %v1872 = vmul.f32 %v1836, %v1868
  %v1875 = vrot.slane %v1872, 7
  %v1876 = vsel %vm768, %v1875, %v1871
  %1877 = vrot.lane.b32.xlu0 %v1876, 32
  %v1878 = vpop.permute.xlu0 %1877
  %v1879 = vsel %vm150, %v1878, 0
  %1881 = vmatprep.subr.mxu0 %v633
  %1882 = vmatpush1.msra.mxu0 %v632
  %1883 = vmatprep.subr.mxu0 %v635
  %1884 = vmatpush1.msra.mxu0 %v634
  %1885 = vmatprep.subr.mxu0 %v637
  %1886 = vmatpush1.msra.mxu0 %v636
  %1887 = vmatprep.subr.mxu0 %v639
  %1888 = vmatpush1.msra.mxu0 %v638
  %1889 = vmatprep.subr.mxu0 0.0
  %1890 = vmatpush1.msra.mxu0 0.0
  %1891 = vmatprep.subr.mxu0 0.0
  %1892 = vmatpush1.msra.mxu0 0.0
  %1893 = vmatprep.subr.mxu0 0.0
  %1894 = vmatpush1.msra.mxu0 0.0
  %1895 = vmatprep.subr.mxu0 0.0
  %1896 = vmatpush1.msra.mxu0 0.0
  %1897 = vmatprep.subr.mxu0 0.0
  %1898 = vmatpush1.msra.mxu0 0.0
  %1899 = vmatprep.subr.mxu0 0.0
  %1900 = vmatpush1.msra.mxu0 0.0
  %1901 = vmatprep.subr.mxu0 0.0
  %1902 = vmatpush1.msra.mxu0 0.0
  %1903 = vmatprep.subr.mxu0 0.0
  %1904 = vmatpush1.msra.mxu0 0.0
  %1905 = vmatprep.subr.mxu0 0.0
  %1906 = vmatpush1.msra.mxu0 0.0
  %1907 = vmatprep.subr.mxu0 0.0
  %1908 = vmatpush1.msra.mxu0 0.0
  %1909 = vmatprep.subr.mxu0 0.0
  %1910 = vmatpush1.msra.mxu0 0.0
  %1911 = vmatprep.subr.mxu0 0.0
  %1912 = vmatpush1.msra.mxu0 0.0
  %1913 = vmatprep.subr.mxu0 0.0
  %1914 = vmatpush1.msra.mxu0 0.0
  %1915 = vmatprep.subr.mxu0 0.0
  %1916 = vmatpush1.msra.mxu0 0.0
  %1917 = vmatprep.subr.mxu0 0.0
  %1918 = vmatpush1.msra.mxu0 0.0
  %1919 = vmatprep.subr.mxu0 0.0
  %1920 = vmatpush1.msra.mxu0 0.0
  %1921 = vmatprep.subr.mxu0 0.0
  %1922 = vmatpush1.msra.mxu0 0.0
  %1923 = vmatprep.subr.mxu0 0.0
  %1924 = vmatpush1.msra.mxu0 0.0
  %1925 = vmatprep.subr.mxu0 0.0
  %1926 = vmatpush1.msra.mxu0 0.0
  %1927 = vmatprep.subr.mxu0 0.0
  %1928 = vmatpush1.msra.mxu0 0.0
  %1929 = vmatprep.subr.mxu0 0.0
  %1930 = vmatpush1.msra.mxu0 0.0
  %1931 = vmatprep.subr.mxu0 0.0
  %1932 = vmatpush1.msra.mxu0 0.0
  %1933 = vmatprep.subr.mxu0 0.0
  %1934 = vmatpush1.msra.mxu0 0.0
  %1935 = vmatprep.subr.mxu0 0.0
  %1936 = vmatpush1.msra.mxu0 0.0
  %1937 = vmatprep.subr.mxu0 0.0
  %1938 = vmatpush1.msra.mxu0 0.0
  %1939 = vmatprep.subr.mxu0 0.0
  %1940 = vmatpush1.msra.mxu0 0.0
  %1941 = vmatprep.subr.mxu0 0.0
  %1942 = vmatpush1.msra.mxu0 0.0
  %1943 = vmatprep.subr.mxu0 0.0
  %1944 = vmatpush1.msra.mxu0 0.0
  %1945 = vmatprep.mubr.f32.mxu0 0.0
  %1946 = vmatmul.mubr.f32.gmra.mrb[0].mxu0 %v1879
  %v1947 = vpop.f32.mrb[0].mxu0
  %v1948 = vadd.f32 0.0, %v1947
  %v1949 = vpop.f32.mrb[0].mxu0
  %v1950 = vadd.f32 0.0, %v1949
  %1951 = vdwg.mxu0
  %v1954 = vunpack.c.l.s4 1966171168
  %v1955 = vunpack.c.0.s8 %v1954
  %v1956 = vlaneseq
  %v1957 = vshrl.u32 %v1956, 7
  %v1958 = vsub.s32 %v1955, %v1957
  %v1959 = vrot.slane %v1950, %v1958
  %v1960 = vcombine.high %v1959, %v1959
  %v1962 = vunpack.c.l.s4 1966171168
  %v1963 = vunpack.c.0.s8 %v1962
  %v1964 = vlaneseq
  %v1965 = vshrl.u32 %v1964, 7
  %v1966 = vsub.s32 %v1963, %v1965
  %v1967 = vrot.slane %v1959, %v1966
  %v1969 = vunpack.c.l.s4 1966171168
  %v1970 = vunpack.c.0.s8 %v1969
  %v1971 = vlaneseq
  %v1972 = vshrl.u32 %v1971, 7
  %v1973 = vsub.s32 %v1970, %v1972
  %v1974 = vrot.slane %v1960, %v1973
  %v1975 = vlaneseq
  %v1976 = vshrl.u32 %v1975, 7
  %v1977 = vsub.s32 0, %v1976
  %v1978 = vrot.slane %v1967, %v1977
  %v1979 = vlaneseq
  %v1980 = vshrl.u32 %v1979, 7
  %v1981 = vsub.s32 0, %v1980
  %v1982 = vrot.slane %v1974, %v1981
  %v1985 = vadd.f32 %v446, %v1978
  %v1986 = vadd.f32 %v451, %v1982
  %v1987 = vtanh.pop %v1985
  %v1988 = vtanh.pop %v1986
  %v1989 = vmul.f32 %v1987, %v630
  %v1990 = vmul.f32 %v1988, %v630
  %v1991 = vsel %vm150, %v1989, 0.0
  %1992 = vadd.xlane.f32.xlu0 %v1991
  %v1993 = vpop.xlane.xlu0 %1992
  %v1994 = vsel %vm150, %v1990, 0.0
  %1995 = vadd.xlane.f32.xlu0 %v1994
  %v1996 = vpop.xlane.xlu0 %1995
  %v1999 = vlaneseq
  %v2000 = vshrl.u32 %v1999, 7
  %v2001 = vsub.s32 %v759, %v2000
  %v2002 = vrot.slane %v1993, %v2001
  %v2003 = vlaneseq
  %v2004 = vshrl.u32 %v2003, 7
  %v2005 = vsub.s32 %v759, %v2004
  %v2006 = vrot.slane %v1996, %v2005
  %v2007 = vsel %vm768, %v2006, %v2002
  %v2009 = vsel %vm771, %v2007, -inf
  %2010 = vmax.xlane.f32.xlu0 %v2009
  %v2011 = vpop.xlane.xlu0 %2010
  %v2013 = vlaneseq
  %v2014 = vshrl.u32 %v2013, 7
  %v2015 = vsub.s32 0, %v2014
  %v2016 = vrot.slane %v2011, %v2015
  %v2017 = vlaneseq
  %v2018 = vshrl.u32 %v2017, 7
  %v2019 = vsub.s32 1, %v2018
  %v2020 = vrot.slane %v2011, %v2019
  %v2023 = vsub.f32 %v1993, %v2016
  %v2024 = vsub.f32 %v1996, %v2020
  %v2025 = vmul.f32 %v2023, 1.442695
  %v2026 = vpow.pop %v2025
  %v2027 = vmul.f32 %v2024, 1.442695
  %v2028 = vpow.pop %v2027
  %2031 = vset.pattern.permute.xlu0 0
  %2032 = vperm.xlu0 %2031, %v2026
  %v2033 = vpop.permute.xlu0 %2032
  %2034 = vset.pattern.permute.xlu0 0
  %2035 = vperm.xlu0 %2034, %v2028
  %v2036 = vpop.permute.xlu0 %2035
  %v2037 = vlaneseq
  %v2038 = vshrl.u32 %v2037, 7
  %v2039 = vsub.s32 %v759, %v2038
  %v2040 = vrot.slane %v2033, %v2039
  %v2041 = vlaneseq
  %v2042 = vshrl.u32 %v2041, 7
  %v2043 = vsub.s32 %v759, %v2042
  %v2044 = vrot.slane %v2036, %v2043
  %v2045 = vsel %vm768, %v2044, %v2040
  %v2047 = vsel %vm771, %v2045, 0.0
  %2048 = vadd.xlane.f32.xlu0 %v2047
  %v2049 = vpop.xlane.xlu0 %2048
  %v2051 = vlaneseq
  %v2052 = vshrl.u32 %v2051, 7
  %v2053 = vsub.s32 0, %v2052
  %v2054 = vrot.slane %v2049, %v2053
  %v2055 = vlaneseq
  %v2056 = vshrl.u32 %v2055, 7
  %v2057 = vsub.s32 1, %v2056
  %v2058 = vrot.slane %v2049, %v2057
  %v2061 = vrcp.pop %v2054
  %v2062 = vmul.f32 %v2026, %v2061
  %v2063 = vrcp.pop %v2058
  %v2064 = vmul.f32 %v2028, %v2063
  %2066 = vset.pattern.permute.xlu0 0
  %2067 = vperm.xlu0 %2066, %v2062
  %v2068 = vpop.permute.xlu0 %2067
  %v2069 = vlaneseq
  %v2070 = vshrl.u32 %v2069, 7
  %v2071 = vsub.s32 %v759, %v2070
  %v2072 = vrot.slane %v2068, %v2071
  %v2073 = vsel %vm836, %v2072, 0
  %2075 = vmatprep.subr.mxu0 0.0
  %2076 = vmatpush1.msra.mxu0 %v525
  %2077 = vmatprep.subr.mxu0 0.0
  %2078 = vmatpush1.msra.mxu0 0.0
  %2079 = vmatprep.subr.mxu0 0.0
  %2080 = vmatpush1.msra.mxu0 0.0
  %2081 = vmatprep.subr.mxu0 0.0
  %2082 = vmatpush1.msra.mxu0 0.0
  %2083 = vmatprep.subr.mxu0 0.0
  %2084 = vmatpush1.msra.mxu0 0.0
  %2085 = vmatprep.subr.mxu0 0.0
  %2086 = vmatpush1.msra.mxu0 0.0
  %2087 = vmatprep.subr.mxu0 0.0
  %2088 = vmatpush1.msra.mxu0 0.0
  %2089 = vmatprep.subr.mxu0 0.0
  %2090 = vmatpush1.msra.mxu0 0.0
  %2091 = vmatprep.subr.mxu0 0.0
  %2092 = vmatpush1.msra.mxu0 0.0
  %2093 = vmatprep.subr.mxu0 0.0
  %2094 = vmatpush1.msra.mxu0 0.0
  %2095 = vmatprep.subr.mxu0 0.0
  %2096 = vmatpush1.msra.mxu0 0.0
  %2097 = vmatprep.subr.mxu0 0.0
  %2098 = vmatpush1.msra.mxu0 0.0
  %2099 = vmatprep.subr.mxu0 0.0
  %2100 = vmatpush1.msra.mxu0 0.0
  %2101 = vmatprep.subr.mxu0 0.0
  %2102 = vmatpush1.msra.mxu0 0.0
  %2103 = vmatprep.subr.mxu0 0.0
  %2104 = vmatpush1.msra.mxu0 0.0
  %2105 = vmatprep.subr.mxu0 0.0
  %2106 = vmatpush1.msra.mxu0 0.0
  %2107 = vmatprep.subr.mxu0 0.0
  %2108 = vmatpush1.msra.mxu0 0.0
  %2109 = vmatprep.subr.mxu0 0.0
  %2110 = vmatpush1.msra.mxu0 0.0
  %2111 = vmatprep.subr.mxu0 0.0
  %2112 = vmatpush1.msra.mxu0 0.0
  %2113 = vmatprep.subr.mxu0 0.0
  %2114 = vmatpush1.msra.mxu0 0.0
  %2115 = vmatprep.subr.mxu0 0.0
  %2116 = vmatpush1.msra.mxu0 0.0
  %2117 = vmatprep.subr.mxu0 0.0
  %2118 = vmatpush1.msra.mxu0 0.0
  %2119 = vmatprep.subr.mxu0 0.0
  %2120 = vmatpush1.msra.mxu0 0.0
  %2121 = vmatprep.subr.mxu0 0.0
  %2122 = vmatpush1.msra.mxu0 0.0
  %2123 = vmatprep.subr.mxu0 0.0
  %2124 = vmatpush1.msra.mxu0 0.0
  %2125 = vmatprep.subr.mxu0 0.0
  %2126 = vmatpush1.msra.mxu0 0.0
  %2127 = vmatprep.subr.mxu0 0.0
  %2128 = vmatpush1.msra.mxu0 0.0
  %2129 = vmatprep.subr.mxu0 0.0
  %2130 = vmatpush1.msra.mxu0 0.0
  %2131 = vmatprep.subr.mxu0 0.0
  %2132 = vmatpush1.msra.mxu0 0.0
  %2133 = vmatprep.subr.mxu0 0.0
  %2134 = vmatpush1.msra.mxu0 0.0
  %2135 = vmatprep.subr.mxu0 0.0
  %2136 = vmatpush1.msra.mxu0 0.0
  %2137 = vmatprep.subr.mxu0 0.0
  %2138 = vmatpush1.msra.mxu0 0.0
  %2139 = vmatprep.mubr.f32.mxu0 0.0
  %2140 = vmatmul.mubr.f32.gmra.mrb[0].mxu0 %v2073
  %v2141 = vpop.f32.mrb[0].mxu0
  %v2142 = vadd.f32 0.0, %v2141
  %v2143 = vpop.f32.mrb[0].mxu0
  %2144 = vdwg.mxu0
  %2146 = vset.pattern.permute.xlu0 0
  %2147 = vperm.xlu0 %2146, %v2064
  %v2148 = vpop.permute.xlu0 %2147
  %v2149 = vlaneseq
  %v2150 = vshrl.u32 %v2149, 7
  %v2151 = vsub.s32 %v759, %v2150
  %v2152 = vrot.slane %v2148, %v2151
  %v2153 = vsel %vm836, %v2152, 0
  %2155 = vmatprep.subr.mxu0 0.0
  %2156 = vmatpush1.msra.mxu0 %v530
  %2157 = vmatprep.subr.mxu0 0.0
  %2158 = vmatpush1.msra.mxu0 0.0
  %2159 = vmatprep.subr.mxu0 0.0
  %2160 = vmatpush1.msra.mxu0 0.0
  %2161 = vmatprep.subr.mxu0 0.0
  %2162 = vmatpush1.msra.mxu0 0.0
  %2163 = vmatprep.subr.mxu0 0.0
  %2164 = vmatpush1.msra.mxu0 0.0
  %2165 = vmatprep.subr.mxu0 0.0
  %2166 = vmatpush1.msra.mxu0 0.0
  %2167 = vmatprep.subr.mxu0 0.0
  %2168 = vmatpush1.msra.mxu0 0.0
  %2169 = vmatprep.subr.mxu0 0.0
  %2170 = vmatpush1.msra.mxu0 0.0
  %2171 = vmatprep.subr.mxu0 0.0
  %2172 = vmatpush1.msra.mxu0 0.0
  %2173 = vmatprep.subr.mxu0 0.0
  %2174 = vmatpush1.msra.mxu0 0.0
  %2175 = vmatprep.subr.mxu0 0.0
  %2176 = vmatpush1.msra.mxu0 0.0
  %2177 = vmatprep.subr.mxu0 0.0
  %2178 = vmatpush1.msra.mxu0 0.0
  %2179 = vmatprep.subr.mxu0 0.0
  %2180 = vmatpush1.msra.mxu0 0.0
  %2181 = vmatprep.subr.mxu0 0.0
  %2182 = vmatpush1.msra.mxu0 0.0
  %2183 = vmatprep.subr.mxu0 0.0
  %2184 = vmatpush1.msra.mxu0 0.0
  %2185 = vmatprep.subr.mxu0 0.0
  %2186 = vmatpush1.msra.mxu0 0.0
  %2187 = vmatprep.subr.mxu0 0.0
  %2188 = vmatpush1.msra.mxu0 0.0
  %2189 = vmatprep.subr.mxu0 0.0
  %2190 = vmatpush1.msra.mxu0 0.0
  %2191 = vmatprep.subr.mxu0 0.0
  %2192 = vmatpush1.msra.mxu0 0.0
  %2193 = vmatprep.subr.mxu0 0.0
  %2194 = vmatpush1.msra.mxu0 0.0
  %2195 = vmatprep.subr.mxu0 0.0
  %2196 = vmatpush1.msra.mxu0 0.0
  %2197 = vmatprep.subr.mxu0 0.0
  %2198 = vmatpush1.msra.mxu0 0.0
  %2199 = vmatprep.subr.mxu0 0.0
  %2200 = vmatpush1.msra.mxu0 0.0
  %2201 = vmatprep.subr.mxu0 0.0
  %2202 = vmatpush1.msra.mxu0 0.0
  %2203 = vmatprep.subr.mxu0 0.0
  %2204 = vmatpush1.msra.mxu0 0.0
  %2205 = vmatprep.subr.mxu0 0.0
  %2206 = vmatpush1.msra.mxu0 0.0
  %2207 = vmatprep.subr.mxu0 0.0
  %2208 = vmatpush1.msra.mxu0 0.0
  %2209 = vmatprep.subr.mxu0 0.0
  %2210 = vmatpush1.msra.mxu0 0.0
  %2211 = vmatprep.subr.mxu0 0.0
  %2212 = vmatpush1.msra.mxu0 0.0
  %2213 = vmatprep.subr.mxu0 0.0
  %2214 = vmatpush1.msra.mxu0 0.0
  %2215 = vmatprep.subr.mxu0 0.0
  %2216 = vmatpush1.msra.mxu0 0.0
  %2217 = vmatprep.subr.mxu0 0.0
  %2218 = vmatpush1.msra.mxu0 0.0
  %2219 = vmatprep.mubr.f32.mxu0 0.0
  %2220 = vmatmul.mubr.f32.gmra.mrb[0].mxu0 %v2153
  %v2221 = vpop.f32.mrb[0].mxu0
  %v2222 = vadd.f32 0.0, %v2221
  %v2223 = vpop.f32.mrb[0].mxu0
  %2224 = vdwg.mxu0
  %v2225 = vrot.slane %v617, 6
  %v2226 = vrot.slane %v617, 7
  %v2229 = vadd.f32 %v2142, %v2225
  %v2230 = vadd.f32 %v2222, %v2226
  %v2232 = vrot.slane %v1948, 1
  %v2235 = vadd.f32 %v2229, %v1948
  %v2236 = vadd.f32 %v2230, %v2232
  %v2237 = vxor.u32 %v2235, 2147483648
  %v2238 = vxor.u32 %v2236, 2147483648
  %v2239 = vmul.f32 %v2237, 1.442695
  %v2240 = vpow.pop %v2239
  %v2241 = vmul.f32 %v2238, 1.442695
  %v2242 = vpow.pop %v2241
  %v2243 = vadd.f32 %v2240, 1.0
  %v2244 = vadd.f32 %v2242, 1.0
  %v2245 = vrcp.pop %v2243
  %v2246 = vmul.f32 1.0, %v2245
  %v2247 = vrcp.pop %v2244
  %v2248 = vmul.f32 1.0, %v2247
  %v2249 = vtanh.pop %v2235
  %v2250 = vtanh.pop %v2236
  %v2251 = vmul.f32 %v2246, %v1859
  %v2252 = vmul.f32 %v2248, %v1860
  %2255 = vrot.lane.b32.xlu0 %v2249, 64
  %v2256 = vpop.permute.xlu0 %2255
  %2257 = vrot.lane.b32.xlu0 %v2250, 64
  %v2258 = vpop.permute.xlu0 %2257
  %v2261 = vmul.f32 %v2246, %v2256
  %v2262 = vmul.f32 %v2248, %v2258
  %2265 = vrot.lane.b32.xlu0 %v2261, 32
  %v2266 = vpop.permute.xlu0 %2265
  %2267 = vrot.lane.b32.xlu0 %v2262, 32
  %v2268 = vpop.permute.xlu0 %2267
  %v2271 = vadd.f32 %v2251, %v2266
  %v2272 = vadd.f32 %v2252, %v2268
  %v2273 = vtanh.pop %v2271
  %v2274 = vtanh.pop %v2272
  %2277 = vrot.lane.b32.xlu0 %v2273, 64
  %v2278 = vpop.permute.xlu0 %2277
  %2279 = vrot.lane.b32.xlu0 %v2274, 64
  %v2280 = vpop.permute.xlu0 %2279
  %v2283 = vmul.f32 %v2246, %v2278
  %v2284 = vmul.f32 %v2248, %v2280
  %v2287 = vrot.slane %v2284, 7
  %v2288 = vsel %vm768, %v2287, %v2283
  %2289 = vrot.lane.b32.xlu0 %v2288, 32
  %v2290 = vpop.permute.xlu0 %2289
  %v2291 = vsel %vm150, %v2290, 0
  %2293 = vmatprep.subr.mxu0 %v633
  %2294 = vmatpush1.msra.mxu0 %v632
  %2295 = vmatprep.subr.mxu0 %v635
  %2296 = vmatpush1.msra.mxu0 %v634
  %2297 = vmatprep.subr.mxu0 %v637
  %2298 = vmatpush1.msra.mxu0 %v636
  %2299 = vmatprep.subr.mxu0 %v639
  %2300 = vmatpush1.msra.mxu0 %v638
  %2301 = vmatprep.subr.mxu0 0.0
  %2302 = vmatpush1.msra.mxu0 0.0
  %2303 = vmatprep.subr.mxu0 0.0
  %2304 = vmatpush1.msra.mxu0 0.0
  %2305 = vmatprep.subr.mxu0 0.0
  %2306 = vmatpush1.msra.mxu0 0.0
  %2307 = vmatprep.subr.mxu0 0.0
  %2308 = vmatpush1.msra.mxu0 0.0
  %2309 = vmatprep.subr.mxu0 0.0
  %2310 = vmatpush1.msra.mxu0 0.0
  %2311 = vmatprep.subr.mxu0 0.0
  %2312 = vmatpush1.msra.mxu0 0.0
  %2313 = vmatprep.subr.mxu0 0.0
  %2314 = vmatpush1.msra.mxu0 0.0
  %2315 = vmatprep.subr.mxu0 0.0
  %2316 = vmatpush1.msra.mxu0 0.0
  %2317 = vmatprep.subr.mxu0 0.0
  %2318 = vmatpush1.msra.mxu0 0.0
  %2319 = vmatprep.subr.mxu0 0.0
  %2320 = vmatpush1.msra.mxu0 0.0
  %2321 = vmatprep.subr.mxu0 0.0
  %2322 = vmatpush1.msra.mxu0 0.0
  %2323 = vmatprep.subr.mxu0 0.0
  %2324 = vmatpush1.msra.mxu0 0.0
  %2325 = vmatprep.subr.mxu0 0.0
  %2326 = vmatpush1.msra.mxu0 0.0
  %2327 = vmatprep.subr.mxu0 0.0
  %2328 = vmatpush1.msra.mxu0 0.0
  %2329 = vmatprep.subr.mxu0 0.0
  %2330 = vmatpush1.msra.mxu0 0.0
  %2331 = vmatprep.subr.mxu0 0.0
  %2332 = vmatpush1.msra.mxu0 0.0
  %2333 = vmatprep.subr.mxu0 0.0
  %2334 = vmatpush1.msra.mxu0 0.0
  %2335 = vmatprep.subr.mxu0 0.0
  %2336 = vmatpush1.msra.mxu0 0.0
  %2337 = vmatprep.subr.mxu0 0.0
  %2338 = vmatpush1.msra.mxu0 0.0
  %2339 = vmatprep.subr.mxu0 0.0
  %2340 = vmatpush1.msra.mxu0 0.0
  %2341 = vmatprep.subr.mxu0 0.0
  %2342 = vmatpush1.msra.mxu0 0.0
  %2343 = vmatprep.subr.mxu0 0.0
  %2344 = vmatpush1.msra.mxu0 0.0
  %2345 = vmatprep.subr.mxu0 0.0
  %2346 = vmatpush1.msra.mxu0 0.0
  %2347 = vmatprep.subr.mxu0 0.0
  %2348 = vmatpush1.msra.mxu0 0.0
  %2349 = vmatprep.subr.mxu0 0.0
  %2350 = vmatpush1.msra.mxu0 0.0
  %2351 = vmatprep.subr.mxu0 0.0
  %2352 = vmatpush1.msra.mxu0 0.0
  %2353 = vmatprep.subr.mxu0 0.0
  %2354 = vmatpush1.msra.mxu0 0.0
  %2355 = vmatprep.subr.mxu0 0.0
  %2356 = vmatpush1.msra.mxu0 0.0
  %2357 = vmatprep.mubr.f32.mxu0 0.0
  %2358 = vmatmul.mubr.f32.gmra.mrb[0].mxu0 %v2291
  %v2359 = vpop.f32.mrb[0].mxu0
  %v2360 = vadd.f32 0.0, %v2359
  %v2361 = vpop.f32.mrb[0].mxu0
  %v2362 = vadd.f32 0.0, %v2361
  %2363 = vdwg.mxu0
  %v2366 = vunpack.c.l.s4 1966171168
  %v2367 = vunpack.c.0.s8 %v2366
  %v2368 = vlaneseq
  %v2369 = vshrl.u32 %v2368, 7
  %v2370 = vsub.s32 %v2367, %v2369
  %v2371 = vrot.slane %v2362, %v2370
  %v2372 = vcombine.high %v2371, %v2371
  %v2374 = vunpack.c.l.s4 1966171168
  %v2375 = vunpack.c.0.s8 %v2374
  %v2376 = vlaneseq
  %v2377 = vshrl.u32 %v2376, 7
  %v2378 = vsub.s32 %v2375, %v2377
  %v2379 = vrot.slane %v2371, %v2378
  %v2381 = vunpack.c.l.s4 1966171168
  %v2382 = vunpack.c.0.s8 %v2381
  %v2383 = vlaneseq
  %v2384 = vshrl.u32 %v2383, 7
  %v2385 = vsub.s32 %v2382, %v2384
  %v2386 = vrot.slane %v2372, %v2385
  %v2387 = vlaneseq
  %v2388 = vshrl.u32 %v2387, 7
  %v2389 = vsub.s32 0, %v2388
  %v2390 = vrot.slane %v2379, %v2389
  %v2391 = vlaneseq
  %v2392 = vshrl.u32 %v2391, 7
  %v2393 = vsub.s32 0, %v2392
  %v2394 = vrot.slane %v2386, %v2393
  %v2397 = vadd.f32 %v446, %v2390
  %v2398 = vadd.f32 %v451, %v2394
  %v2399 = vtanh.pop %v2397
  %v2400 = vtanh.pop %v2398
  %v2401 = vmul.f32 %v2399, %v630
  %v2402 = vmul.f32 %v2400, %v630
  %v2403 = vsel %vm150, %v2401, 0.0
  %2404 = vadd.xlane.f32.xlu0 %v2403
  %v2405 = vpop.xlane.xlu0 %2404
  %v2406 = vsel %vm150, %v2402, 0.0
  %2407 = vadd.xlane.f32.xlu0 %v2406
  %v2408 = vpop.xlane.xlu0 %2407
  %v2411 = vlaneseq
  %v2412 = vshrl.u32 %v2411, 7
  %v2413 = vsub.s32 %v759, %v2412
  %v2414 = vrot.slane %v2405, %v2413
  %v2415 = vlaneseq
  %v2416 = vshrl.u32 %v2415, 7
  %v2417 = vsub.s32 %v759, %v2416
  %v2418 = vrot.slane %v2408, %v2417
  %v2419 = vsel %vm768, %v2418, %v2414
  %v2421 = vsel %vm771, %v2419, -inf
  %2422 = vmax.xlane.f32.xlu0 %v2421
  %v2423 = vpop.xlane.xlu0 %2422
  %v2425 = vlaneseq
  %v2426 = vshrl.u32 %v2425, 7
  %v2427 = vsub.s32 0, %v2426
  %v2428 = vrot.slane %v2423, %v2427
  %v2429 = vlaneseq
  %v2430 = vshrl.u32 %v2429, 7
  %v2431 = vsub.s32 1, %v2430
  %v2432 = vrot.slane %v2423, %v2431
  %v2435 = vsub.f32 %v2405, %v2428
  %v2436 = vsub.f32 %v2408, %v2432
  %v2437 = vmul.f32 %v2435, 1.442695
  %v2438 = vpow.pop %v2437
  %v2439 = vmul.f32 %v2436, 1.442695
  %v2440 = vpow.pop %v2439
  %2443 = vset.pattern.permute.xlu0 0
  %2444 = vperm.xlu0 %2443, %v2438
  %v2445 = vpop.permute.xlu0 %2444
  %2446 = vset.pattern.permute.xlu0 0
  %2447 = vperm.xlu0 %2446, %v2440
  %v2448 = vpop.permute.xlu0 %2447
  %v2449 = vlaneseq
  %v2450 = vshrl.u32 %v2449, 7
  %v2451 = vsub.s32 %v759, %v2450
  %v2452 = vrot.slane %v2445, %v2451
  %v2453 = vlaneseq
  %v2454 = vshrl.u32 %v2453, 7
  %v2455 = vsub.s32 %v759, %v2454
  %v2456 = vrot.slane %v2448, %v2455
  %v2457 = vsel %vm768, %v2456, %v2452
  %v2459 = vsel %vm771, %v2457, 0.0
  %2460 = vadd.xlane.f32.xlu0 %v2459
  %v2461 = vpop.xlane.xlu0 %2460
  %v2463 = vlaneseq
  %v2464 = vshrl.u32 %v2463, 7
  %v2465 = vsub.s32 0, %v2464
  %v2466 = vrot.slane %v2461, %v2465
  %v2467 = vlaneseq
  %v2468 = vshrl.u32 %v2467, 7
  %v2469 = vsub.s32 1, %v2468
  %v2470 = vrot.slane %v2461, %v2469
  %v2473 = vrcp.pop %v2466
  %v2474 = vmul.f32 %v2438, %v2473
  %v2475 = vrcp.pop %v2470
  %v2476 = vmul.f32 %v2440, %v2475
  %2478 = vset.pattern.permute.xlu0 0
  %2479 = vperm.xlu0 %2478, %v2474
  %v2480 = vpop.permute.xlu0 %2479
  %v2481 = vlaneseq
  %v2482 = vshrl.u32 %v2481, 7
  %v2483 = vsub.s32 %v759, %v2482
  %v2484 = vrot.slane %v2480, %v2483
  %v2485 = vsel %vm836, %v2484, 0
  %2487 = vmatprep.subr.mxu0 0.0
  %2488 = vmatpush1.msra.mxu0 %v525
  %2489 = vmatprep.subr.mxu0 0.0
  %2490 = vmatpush1.msra.mxu0 0.0
  %2491 = vmatprep.subr.mxu0 0.0
  %2492 = vmatpush1.msra.mxu0 0.0
  %2493 = vmatprep.subr.mxu0 0.0
  %2494 = vmatpush1.msra.mxu0 0.0
  %2495 = vmatprep.subr.mxu0 0.0
  %2496 = vmatpush1.msra.mxu0 0.0
  %2497 = vmatprep.subr.mxu0 0.0
  %2498 = vmatpush1.msra.mxu0 0.0
  %2499 = vmatprep.subr.mxu0 0.0
  %2500 = vmatpush1.msra.mxu0 0.0
  %2501 = vmatprep.subr.mxu0 0.0
  %2502 = vmatpush1.msra.mxu0 0.0
  %2503 = vmatprep.subr.mxu0 0.0
  %2504 = vmatpush1.msra.mxu0 0.0
  %2505 = vmatprep.subr.mxu0 0.0
  %2506 = vmatpush1.msra.mxu0 0.0
  %2507 = vmatprep.subr.mxu0 0.0
  %2508 = vmatpush1.msra.mxu0 0.0
  %2509 = vmatprep.subr.mxu0 0.0
  %2510 = vmatpush1.msra.mxu0 0.0
  %2511 = vmatprep.subr.mxu0 0.0
  %2512 = vmatpush1.msra.mxu0 0.0
  %2513 = vmatprep.subr.mxu0 0.0
  %2514 = vmatpush1.msra.mxu0 0.0
  %2515 = vmatprep.subr.mxu0 0.0
  %2516 = vmatpush1.msra.mxu0 0.0
  %2517 = vmatprep.subr.mxu0 0.0
  %2518 = vmatpush1.msra.mxu0 0.0
  %2519 = vmatprep.subr.mxu0 0.0
  %2520 = vmatpush1.msra.mxu0 0.0
  %2521 = vmatprep.subr.mxu0 0.0
  %2522 = vmatpush1.msra.mxu0 0.0
  %2523 = vmatprep.subr.mxu0 0.0
  %2524 = vmatpush1.msra.mxu0 0.0
  %2525 = vmatprep.subr.mxu0 0.0
  %2526 = vmatpush1.msra.mxu0 0.0
  %2527 = vmatprep.subr.mxu0 0.0
  %2528 = vmatpush1.msra.mxu0 0.0
  %2529 = vmatprep.subr.mxu0 0.0
  %2530 = vmatpush1.msra.mxu0 0.0
  %2531 = vmatprep.subr.mxu0 0.0
  %2532 = vmatpush1.msra.mxu0 0.0
  %2533 = vmatprep.subr.mxu0 0.0
  %2534 = vmatpush1.msra.mxu0 0.0
  %2535 = vmatprep.subr.mxu0 0.0
  %2536 = vmatpush1.msra.mxu0 0.0
  %2537 = vmatprep.subr.mxu0 0.0
  %2538 = vmatpush1.msra.mxu0 0.0
  %2539 = vmatprep.subr.mxu0 0.0
  %2540 = vmatpush1.msra.mxu0 0.0
  %2541 = vmatprep.subr.mxu0 0.0
  %2542 = vmatpush1.msra.mxu0 0.0
  %2543 = vmatprep.subr.mxu0 0.0
  %2544 = vmatpush1.msra.mxu0 0.0
  %2545 = vmatprep.subr.mxu0 0.0
  %2546 = vmatpush1.msra.mxu0 0.0
  %2547 = vmatprep.subr.mxu0 0.0
  %2548 = vmatpush1.msra.mxu0 0.0
  %2549 = vmatprep.subr.mxu0 0.0
  %2550 = vmatpush1.msra.mxu0 0.0
  %2551 = vmatprep.mubr.f32.mxu0 0.0
  %2552 = vmatmul.mubr.f32.gmra.mrb[0].mxu0 %v2485
  %v2553 = vpop.f32.mrb[0].mxu0
  %v2554 = vadd.f32 0.0, %v2553
  %v2555 = vpop.f32.mrb[0].mxu0
  %2556 = vdwg.mxu0
  %2558 = vset.pattern.permute.xlu0 0
  %2559 = vperm.xlu0 %2558, %v2476
  %v2560 = vpop.permute.xlu0 %2559
  %v2561 = vlaneseq
  %v2562 = vshrl.u32 %v2561, 7
  %v2563 = vsub.s32 %v759, %v2562
  %v2564 = vrot.slane %v2560, %v2563
  %v2565 = vsel %vm836, %v2564, 0
  %2567 = vmatprep.subr.mxu0 0.0
  %2568 = vmatpush1.msra.mxu0 %v530
  %2569 = vmatprep.subr.mxu0 0.0
  %2570 = vmatpush1.msra.mxu0 0.0
  %2571 = vmatprep.subr.mxu0 0.0
  %2572 = vmatpush1.msra.mxu0 0.0
  %2573 = vmatprep.subr.mxu0 0.0
  %2574 = vmatpush1.msra.mxu0 0.0
  %2575 = vmatprep.subr.mxu0 0.0
  %2576 = vmatpush1.msra.mxu0 0.0
  %2577 = vmatprep.subr.mxu0 0.0
  %2578 = vmatpush1.msra.mxu0 0.0
  %2579 = vmatprep.subr.mxu0 0.0
  %2580 = vmatpush1.msra.mxu0 0.0
  %2581 = vmatprep.subr.mxu0 0.0
  %2582 = vmatpush1.msra.mxu0 0.0
  %2583 = vmatprep.subr.mxu0 0.0
  %2584 = vmatpush1.msra.mxu0 0.0
  %2585 = vmatprep.subr.mxu0 0.0
  %2586 = vmatpush1.msra.mxu0 0.0
  %2587 = vmatprep.subr.mxu0 0.0
  %2588 = vmatpush1.msra.mxu0 0.0
  %2589 = vmatprep.subr.mxu0 0.0
  %2590 = vmatpush1.msra.mxu0 0.0
  %2591 = vmatprep.subr.mxu0 0.0
  %2592 = vmatpush1.msra.mxu0 0.0
  %2593 = vmatprep.subr.mxu0 0.0
  %2594 = vmatpush1.msra.mxu0 0.0
  %2595 = vmatprep.subr.mxu0 0.0
  %2596 = vmatpush1.msra.mxu0 0.0
  %2597 = vmatprep.subr.mxu0 0.0
  %2598 = vmatpush1.msra.mxu0 0.0
  %2599 = vmatprep.subr.mxu0 0.0
  %2600 = vmatpush1.msra.mxu0 0.0
  %2601 = vmatprep.subr.mxu0 0.0
  %2602 = vmatpush1.msra.mxu0 0.0
  %2603 = vmatprep.subr.mxu0 0.0
  %2604 = vmatpush1.msra.mxu0 0.0
  %2605 = vmatprep.subr.mxu0 0.0
  %2606 = vmatpush1.msra.mxu0 0.0
  %2607 = vmatprep.subr.mxu0 0.0
  %2608 = vmatpush1.msra.mxu0 0.0
  %2609 = vmatprep.subr.mxu0 0.0
  %2610 = vmatpush1.msra.mxu0 0.0
  %2611 = vmatprep.subr.mxu0 0.0
  %2612 = vmatpush1.msra.mxu0 0.0
  %2613 = vmatprep.subr.mxu0 0.0
  %2614 = vmatpush1.msra.mxu0 0.0
  %2615 = vmatprep.subr.mxu0 0.0
  %2616 = vmatpush1.msra.mxu0 0.0
  %2617 = vmatprep.subr.mxu0 0.0
  %2618 = vmatpush1.msra.mxu0 0.0
  %2619 = vmatprep.subr.mxu0 0.0
  %2620 = vmatpush1.msra.mxu0 0.0
  %2621 = vmatprep.subr.mxu0 0.0
  %2622 = vmatpush1.msra.mxu0 0.0
  %2623 = vmatprep.subr.mxu0 0.0
  %2624 = vmatpush1.msra.mxu0 0.0
  %2625 = vmatprep.subr.mxu0 0.0
  %2626 = vmatpush1.msra.mxu0 0.0
  %2627 = vmatprep.subr.mxu0 0.0
  %2628 = vmatpush1.msra.mxu0 0.0
  %2629 = vmatprep.subr.mxu0 0.0
  %2630 = vmatpush1.msra.mxu0 0.0
  %2631 = vmatprep.mubr.f32.mxu0 0.0
  %2632 = vmatmul.mubr.f32.gmra.mrb[0].mxu0 %v2565
  %v2633 = vpop.f32.mrb[0].mxu0
  %v2634 = vadd.f32 0.0, %v2633
  %v2635 = vpop.f32.mrb[0].mxu0
  %2636 = vdwg.mxu0
  %v2638 = vrot.slane %v622, 1
  %v2641 = vadd.f32 %v2554, %v622
  %v2642 = vadd.f32 %v2634, %v2638
  %v2644 = vrot.slane %v2360, 1
  %v2647 = vadd.f32 %v2641, %v2360
  %v2648 = vadd.f32 %v2642, %v2644
  %v2649 = vxor.u32 %v2647, 2147483648
  %v2650 = vxor.u32 %v2648, 2147483648
  %v2651 = vmul.f32 %v2649, 1.442695
  %v2652 = vpow.pop %v2651
  %v2653 = vmul.f32 %v2650, 1.442695
  %v2654 = vpow.pop %v2653
  %v2655 = vadd.f32 %v2652, 1.0
  %v2656 = vadd.f32 %v2654, 1.0
  %v2657 = vrcp.pop %v2655
  %v2658 = vmul.f32 1.0, %v2657
  %v2659 = vrcp.pop %v2656
  %v2660 = vmul.f32 1.0, %v2659
  %v2661 = vtanh.pop %v2647
  %v2662 = vtanh.pop %v2648
  %v2663 = vmul.f32 %v2658, %v2271
  %v2664 = vmul.f32 %v2660, %v2272
  %2667 = vrot.lane.b32.xlu0 %v2661, 64
  %v2668 = vpop.permute.xlu0 %2667
  %2669 = vrot.lane.b32.xlu0 %v2662, 64
  %v2670 = vpop.permute.xlu0 %2669
  %v2673 = vmul.f32 %v2658, %v2668
  %v2674 = vmul.f32 %v2660, %v2670
  %2677 = vrot.lane.b32.xlu0 %v2673, 32
  %v2678 = vpop.permute.xlu0 %2677
  %2679 = vrot.lane.b32.xlu0 %v2674, 32
  %v2680 = vpop.permute.xlu0 %2679
  %v2683 = vadd.f32 %v2663, %v2678
  %v2684 = vadd.f32 %v2664, %v2680
  %v2685 = vtanh.pop %v2683
  %v2686 = vtanh.pop %v2684
  %2689 = vrot.lane.b32.xlu0 %v2685, 64
  %v2690 = vpop.permute.xlu0 %2689
  %2691 = vrot.lane.b32.xlu0 %v2686, 64
  %v2692 = vpop.permute.xlu0 %2691
  %v2695 = vmul.f32 %v2658, %v2690
  %v2696 = vmul.f32 %v2660, %v2692
  %v2699 = vrot.slane %v2696, 7
  %v2700 = vsel %vm768, %v2699, %v2695
  %2701 = vrot.lane.b32.xlu0 %v2700, 32
  %v2702 = vpop.permute.xlu0 %2701
  %v2703 = vsel %vm150, %v2702, 0
  %2705 = vmatprep.subr.mxu0 %v633
  %2706 = vmatpush1.msra.mxu0 %v632
  %2707 = vmatprep.subr.mxu0 %v635
  %2708 = vmatpush1.msra.mxu0 %v634
  %2709 = vmatprep.subr.mxu0 %v637
  %2710 = vmatpush1.msra.mxu0 %v636
  %2711 = vmatprep.subr.mxu0 %v639
  %2712 = vmatpush1.msra.mxu0 %v638
  %2713 = vmatprep.subr.mxu0 0.0
  %2714 = vmatpush1.msra.mxu0 0.0
  %2715 = vmatprep.subr.mxu0 0.0
  %2716 = vmatpush1.msra.mxu0 0.0
  %2717 = vmatprep.subr.mxu0 0.0
  %2718 = vmatpush1.msra.mxu0 0.0
  %2719 = vmatprep.subr.mxu0 0.0
  %2720 = vmatpush1.msra.mxu0 0.0
  %2721 = vmatprep.subr.mxu0 0.0
  %2722 = vmatpush1.msra.mxu0 0.0
  %2723 = vmatprep.subr.mxu0 0.0
  %2724 = vmatpush1.msra.mxu0 0.0
  %2725 = vmatprep.subr.mxu0 0.0
  %2726 = vmatpush1.msra.mxu0 0.0
  %2727 = vmatprep.subr.mxu0 0.0
  %2728 = vmatpush1.msra.mxu0 0.0
  %2729 = vmatprep.subr.mxu0 0.0
  %2730 = vmatpush1.msra.mxu0 0.0
  %2731 = vmatprep.subr.mxu0 0.0
  %2732 = vmatpush1.msra.mxu0 0.0
  %2733 = vmatprep.subr.mxu0 0.0
  %2734 = vmatpush1.msra.mxu0 0.0
  %2735 = vmatprep.subr.mxu0 0.0
  %2736 = vmatpush1.msra.mxu0 0.0
  %2737 = vmatprep.subr.mxu0 0.0
  %2738 = vmatpush1.msra.mxu0 0.0
  %2739 = vmatprep.subr.mxu0 0.0
  %2740 = vmatpush1.msra.mxu0 0.0
  %2741 = vmatprep.subr.mxu0 0.0
  %2742 = vmatpush1.msra.mxu0 0.0
  %2743 = vmatprep.subr.mxu0 0.0
  %2744 = vmatpush1.msra.mxu0 0.0
  %2745 = vmatprep.subr.mxu0 0.0
  %2746 = vmatpush1.msra.mxu0 0.0
  %2747 = vmatprep.subr.mxu0 0.0
  %2748 = vmatpush1.msra.mxu0 0.0
  %2749 = vmatprep.subr.mxu0 0.0
  %2750 = vmatpush1.msra.mxu0 0.0
  %2751 = vmatprep.subr.mxu0 0.0
  %2752 = vmatpush1.msra.mxu0 0.0
  %2753 = vmatprep.subr.mxu0 0.0
  %2754 = vmatpush1.msra.mxu0 0.0
  %2755 = vmatprep.subr.mxu0 0.0
  %2756 = vmatpush1.msra.mxu0 0.0
  %2757 = vmatprep.subr.mxu0 0.0
  %2758 = vmatpush1.msra.mxu0 0.0
  %2759 = vmatprep.subr.mxu0 0.0
  %2760 = vmatpush1.msra.mxu0 0.0
  %2761 = vmatprep.subr.mxu0 0.0
  %2762 = vmatpush1.msra.mxu0 0.0
  %2763 = vmatprep.subr.mxu0 0.0
  %2764 = vmatpush1.msra.mxu0 0.0
  %2765 = vmatprep.subr.mxu0 0.0
  %2766 = vmatpush1.msra.mxu0 0.0
  %2767 = vmatprep.subr.mxu0 0.0
  %2768 = vmatpush1.msra.mxu0 0.0
  %2769 = vmatprep.mubr.f32.mxu0 0.0
  %2770 = vmatmul.mubr.f32.gmra.mrb[0].mxu0 %v2703
  %v2771 = vpop.f32.mrb[0].mxu0
  %v2772 = vadd.f32 0.0, %v2771
  %v2773 = vpop.f32.mrb[0].mxu0
  %v2774 = vadd.f32 0.0, %v2773
  %2775 = vdwg.mxu0
  %v2778 = vunpack.c.l.s4 1966171168
  %v2779 = vunpack.c.0.s8 %v2778
  %v2780 = vlaneseq
  %v2781 = vshrl.u32 %v2780, 7
  %v2782 = vsub.s32 %v2779, %v2781
  %v2783 = vrot.slane %v2774, %v2782
  %v2784 = vcombine.high %v2783, %v2783
  %v2786 = vunpack.c.l.s4 1966171168
  %v2787 = vunpack.c.0.s8 %v2786
  %v2788 = vlaneseq
  %v2789 = vshrl.u32 %v2788, 7
  %v2790 = vsub.s32 %v2787, %v2789
  %v2791 = vrot.slane %v2783, %v2790
  %v2793 = vunpack.c.l.s4 1966171168
  %v2794 = vunpack.c.0.s8 %v2793
  %v2795 = vlaneseq
  %v2796 = vshrl.u32 %v2795, 7
  %v2797 = vsub.s32 %v2794, %v2796
  %v2798 = vrot.slane %v2784, %v2797
  %v2799 = vlaneseq
  %v2800 = vshrl.u32 %v2799, 7
  %v2801 = vsub.s32 0, %v2800
  %v2802 = vrot.slane %v2791, %v2801
  %v2803 = vlaneseq
  %v2804 = vshrl.u32 %v2803, 7
  %v2805 = vsub.s32 0, %v2804
  %v2806 = vrot.slane %v2798, %v2805
  %v2809 = vadd.f32 %v446, %v2802
  %v2810 = vadd.f32 %v451, %v2806
  %v2811 = vtanh.pop %v2809
  %v2812 = vtanh.pop %v2810
  %v2813 = vmul.f32 %v2811, %v630
  %v2814 = vmul.f32 %v2812, %v630
  %v2815 = vsel %vm150, %v2813, 0.0
  %2816 = vadd.xlane.f32.xlu0 %v2815
  %v2817 = vpop.xlane.xlu0 %2816
  %v2818 = vsel %vm150, %v2814, 0.0
  %2819 = vadd.xlane.f32.xlu0 %v2818
  %v2820 = vpop.xlane.xlu0 %2819
  %v2823 = vlaneseq
  %v2824 = vshrl.u32 %v2823, 7
  %v2825 = vsub.s32 %v759, %v2824
  %v2826 = vrot.slane %v2817, %v2825
  %v2827 = vlaneseq
  %v2828 = vshrl.u32 %v2827, 7
  %v2829 = vsub.s32 %v759, %v2828
  %v2830 = vrot.slane %v2820, %v2829
  %v2831 = vsel %vm768, %v2830, %v2826
  %v2833 = vsel %vm771, %v2831, -inf
  %2834 = vmax.xlane.f32.xlu0 %v2833
  %v2835 = vpop.xlane.xlu0 %2834
  %v2837 = vlaneseq
  %v2838 = vshrl.u32 %v2837, 7
  %v2839 = vsub.s32 0, %v2838
  %v2840 = vrot.slane %v2835, %v2839
  %v2841 = vlaneseq
  %v2842 = vshrl.u32 %v2841, 7
  %v2843 = vsub.s32 1, %v2842
  %v2844 = vrot.slane %v2835, %v2843
  %v2847 = vsub.f32 %v2817, %v2840
  %v2848 = vsub.f32 %v2820, %v2844
  %v2849 = vmul.f32 %v2847, 1.442695
  %v2850 = vpow.pop %v2849
  %v2851 = vmul.f32 %v2848, 1.442695
  %v2852 = vpow.pop %v2851
  %2855 = vset.pattern.permute.xlu0 0
  %2856 = vperm.xlu0 %2855, %v2850
  %v2857 = vpop.permute.xlu0 %2856
  %2858 = vset.pattern.permute.xlu0 0
  %2859 = vperm.xlu0 %2858, %v2852
  %v2860 = vpop.permute.xlu0 %2859
  %v2861 = vlaneseq
  %v2862 = vshrl.u32 %v2861, 7
  %v2863 = vsub.s32 %v759, %v2862
  %v2864 = vrot.slane %v2857, %v2863
  %v2865 = vlaneseq
  %v2866 = vshrl.u32 %v2865, 7
  %v2867 = vsub.s32 %v759, %v2866
  %v2868 = vrot.slane %v2860, %v2867
  %v2869 = vsel %vm768, %v2868, %v2864
  %v2871 = vsel %vm771, %v2869, 0.0
  %2872 = vadd.xlane.f32.xlu0 %v2871
  %v2873 = vpop.xlane.xlu0 %2872
  %v2875 = vlaneseq
  %v2876 = vshrl.u32 %v2875, 7
  %v2877 = vsub.s32 0, %v2876
  %v2878 = vrot.slane %v2873, %v2877
  %v2879 = vlaneseq
  %v2880 = vshrl.u32 %v2879, 7
  %v2881 = vsub.s32 1, %v2880
  %v2882 = vrot.slane %v2873, %v2881
  %v2885 = vrcp.pop %v2878
  %v2886 = vmul.f32 %v2850, %v2885
  %v2887 = vrcp.pop %v2882
  %v2888 = vmul.f32 %v2852, %v2887
  %2890 = vset.pattern.permute.xlu0 0
  %2891 = vperm.xlu0 %2890, %v2886
  %v2892 = vpop.permute.xlu0 %2891
  %v2893 = vlaneseq
  %v2894 = vshrl.u32 %v2893, 7
  %v2895 = vsub.s32 %v759, %v2894
  %v2896 = vrot.slane %v2892, %v2895
  %v2897 = vsel %vm836, %v2896, 0
  %2899 = vmatprep.subr.mxu0 0.0
  %2900 = vmatpush1.msra.mxu0 %v525
  %2901 = vmatprep.subr.mxu0 0.0
  %2902 = vmatpush1.msra.mxu0 0.0
  %2903 = vmatprep.subr.mxu0 0.0
  %2904 = vmatpush1.msra.mxu0 0.0
  %2905 = vmatprep.subr.mxu0 0.0
  %2906 = vmatpush1.msra.mxu0 0.0
  %2907 = vmatprep.subr.mxu0 0.0
  %2908 = vmatpush1.msra.mxu0 0.0
  %2909 = vmatprep.subr.mxu0 0.0
  %2910 = vmatpush1.msra.mxu0 0.0
  %2911 = vmatprep.subr.mxu0 0.0
  %2912 = vmatpush1.msra.mxu0 0.0
  %2913 = vmatprep.subr.mxu0 0.0
  %2914 = vmatpush1.msra.mxu0 0.0
  %2915 = vmatprep.subr.mxu0 0.0
  %2916 = vmatpush1.msra.mxu0 0.0
  %2917 = vmatprep.subr.mxu0 0.0
  %2918 = vmatpush1.msra.mxu0 0.0
  %2919 = vmatprep.subr.mxu0 0.0
  %2920 = vmatpush1.msra.mxu0 0.0
  %2921 = vmatprep.subr.mxu0 0.0
  %2922 = vmatpush1.msra.mxu0 0.0
  %2923 = vmatprep.subr.mxu0 0.0
  %2924 = vmatpush1.msra.mxu0 0.0
  %2925 = vmatprep.subr.mxu0 0.0
  %2926 = vmatpush1.msra.mxu0 0.0
  %2927 = vmatprep.subr.mxu0 0.0
  %2928 = vmatpush1.msra.mxu0 0.0
  %2929 = vmatprep.subr.mxu0 0.0
  %2930 = vmatpush1.msra.mxu0 0.0
  %2931 = vmatprep.subr.mxu0 0.0
  %2932 = vmatpush1.msra.mxu0 0.0
  %2933 = vmatprep.subr.mxu0 0.0
  %2934 = vmatpush1.msra.mxu0 0.0
  %2935 = vmatprep.subr.mxu0 0.0
  %2936 = vmatpush1.msra.mxu0 0.0
  %2937 = vmatprep.subr.mxu0 0.0
  %2938 = vmatpush1.msra.mxu0 0.0
  %2939 = vmatprep.subr.mxu0 0.0
  %2940 = vmatpush1.msra.mxu0 0.0
  %2941 = vmatprep.subr.mxu0 0.0
  %2942 = vmatpush1.msra.mxu0 0.0
  %2943 = vmatprep.subr.mxu0 0.0
  %2944 = vmatpush1.msra.mxu0 0.0
  %2945 = vmatprep.subr.mxu0 0.0
  %2946 = vmatpush1.msra.mxu0 0.0
  %2947 = vmatprep.subr.mxu0 0.0
  %2948 = vmatpush1.msra.mxu0 0.0
  %2949 = vmatprep.subr.mxu0 0.0
  %2950 = vmatpush1.msra.mxu0 0.0
  %2951 = vmatprep.subr.mxu0 0.0
  %2952 = vmatpush1.msra.mxu0 0.0
  %2953 = vmatprep.subr.mxu0 0.0
  %2954 = vmatpush1.msra.mxu0 0.0
  %2955 = vmatprep.subr.mxu0 0.0
  %2956 = vmatpush1.msra.mxu0 0.0
  %2957 = vmatprep.subr.mxu0 0.0
  %2958 = vmatpush1.msra.mxu0 0.0
  %2959 = vmatprep.subr.mxu0 0.0
  %2960 = vmatpush1.msra.mxu0 0.0
  %2961 = vmatprep.subr.mxu0 0.0
  %2962 = vmatpush1.msra.mxu0 0.0
  %2963 = vmatprep.mubr.f32.mxu0 0.0
  %2964 = vmatmul.mubr.f32.gmra.mrb[0].mxu0 %v2897
  %v2965 = vpop.f32.mrb[0].mxu0
  %v2966 = vadd.f32 0.0, %v2965
  %v2967 = vpop.f32.mrb[0].mxu0
  %2968 = vdwg.mxu0
  %2970 = vset.pattern.permute.xlu0 0
  %2971 = vperm.xlu0 %2970, %v2888
  %v2972 = vpop.permute.xlu0 %2971
  %v2973 = vlaneseq
  %v2974 = vshrl.u32 %v2973, 7
  %v2975 = vsub.s32 %v759, %v2974
  %v2976 = vrot.slane %v2972, %v2975
  %v2977 = vsel %vm836, %v2976, 0
  %2979 = vmatprep.subr.mxu0 0.0
  %2980 = vmatpush1.msra.mxu0 %v530
  %2981 = vmatprep.subr.mxu0 0.0
  %2982 = vmatpush1.msra.mxu0 0.0
  %2983 = vmatprep.subr.mxu0 0.0
  %2984 = vmatpush1.msra.mxu0 0.0
  %2985 = vmatprep.subr.mxu0 0.0
  %2986 = vmatpush1.msra.mxu0 0.0
  %2987 = vmatprep.subr.mxu0 0.0
  %2988 = vmatpush1.msra.mxu0 0.0
  %2989 = vmatprep.subr.mxu0 0.0
  %2990 = vmatpush1.msra.mxu0 0.0
  %2991 = vmatprep.subr.mxu0 0.0
  %2992 = vmatpush1.msra.mxu0 0.0
  %2993 = vmatprep.subr.mxu0 0.0
  %2994 = vmatpush1.msra.mxu0 0.0
  %2995 = vmatprep.subr.mxu0 0.0
  %2996 = vmatpush1.msra.mxu0 0.0
  %2997 = vmatprep.subr.mxu0 0.0
  %2998 = vmatpush1.msra.mxu0 0.0
  %2999 = vmatprep.subr.mxu0 0.0
  %3000 = vmatpush1.msra.mxu0 0.0
  %3001 = vmatprep.subr.mxu0 0.0
  %3002 = vmatpush1.msra.mxu0 0.0
  %3003 = vmatprep.subr.mxu0 0.0
  %3004 = vmatpush1.msra.mxu0 0.0
  %3005 = vmatprep.subr.mxu0 0.0
  %3006 = vmatpush1.msra.mxu0 0.0
  %3007 = vmatprep.subr.mxu0 0.0
  %3008 = vmatpush1.msra.mxu0 0.0
  %3009 = vmatprep.subr.mxu0 0.0
  %3010 = vmatpush1.msra.mxu0 0.0
  %3011 = vmatprep.subr.mxu0 0.0
  %3012 = vmatpush1.msra.mxu0 0.0
  %3013 = vmatprep.subr.mxu0 0.0
  %3014 = vmatpush1.msra.mxu0 0.0
  %3015 = vmatprep.subr.mxu0 0.0
  %3016 = vmatpush1.msra.mxu0 0.0
  %3017 = vmatprep.subr.mxu0 0.0
  %3018 = vmatpush1.msra.mxu0 0.0
  %3019 = vmatprep.subr.mxu0 0.0
  %3020 = vmatpush1.msra.mxu0 0.0
  %3021 = vmatprep.subr.mxu0 0.0
  %3022 = vmatpush1.msra.mxu0 0.0
  %3023 = vmatprep.subr.mxu0 0.0
  %3024 = vmatpush1.msra.mxu0 0.0
  %3025 = vmatprep.subr.mxu0 0.0
  %3026 = vmatpush1.msra.mxu0 0.0
  %3027 = vmatprep.subr.mxu0 0.0
  %3028 = vmatpush1.msra.mxu0 0.0
  %3029 = vmatprep.subr.mxu0 0.0
  %3030 = vmatpush1.msra.mxu0 0.0
  %3031 = vmatprep.subr.mxu0 0.0
  %3032 = vmatpush1.msra.mxu0 0.0
  %3033 = vmatprep.subr.mxu0 0.0
  %3034 = vmatpush1.msra.mxu0 0.0
  %3035 = vmatprep.subr.mxu0 0.0
  %3036 = vmatpush1.msra.mxu0 0.0
  %3037 = vmatprep.subr.mxu0 0.0
  %3038 = vmatpush1.msra.mxu0 0.0
  %3039 = vmatprep.subr.mxu0 0.0
  %3040 = vmatpush1.msra.mxu0 0.0
  %3041 = vmatprep.subr.mxu0 0.0
  %3042 = vmatpush1.msra.mxu0 0.0
  %3043 = vmatprep.mubr.f32.mxu0 0.0
  %3044 = vmatmul.mubr.f32.gmra.mrb[0].mxu0 %v2977
  %v3045 = vpop.f32.mrb[0].mxu0
  %v3046 = vadd.f32 0.0, %v3045
  %v3047 = vpop.f32.mrb[0].mxu0
  %3048 = vdwg.mxu0
  %v3049 = vrot.slane %v622, 2
  %v3050 = vrot.slane %v622, 3
  %v3053 = vadd.f32 %v2966, %v3049
  %v3054 = vadd.f32 %v3046, %v3050
  %v3056 = vrot.slane %v2772, 1
  %v3059 = vadd.f32 %v3053, %v2772
  %v3060 = vadd.f32 %v3054, %v3056
  %v3061 = vxor.u32 %v3059, 2147483648
  %v3062 = vxor.u32 %v3060, 2147483648
  %v3063 = vmul.f32 %v3061, 1.442695
  %v3064 = vpow.pop %v3063
  %v3065 = vmul.f32 %v3062, 1.442695
  %v3066 = vpow.pop %v3065
  %v3067 = vadd.f32 %v3064, 1.0
  %v3068 = vadd.f32 %v3066, 1.0
  %v3069 = vrcp.pop %v3067
  %v3070 = vmul.f32 1.0, %v3069
  %v3071 = vrcp.pop %v3068
  %v3072 = vmul.f32 1.0, %v3071
  %v3073 = vtanh.pop %v3059
  %v3074 = vtanh.pop %v3060
  %v3075 = vmul.f32 %v3070, %v2683
  %v3076 = vmul.f32 %v3072, %v2684
  %3079 = vrot.lane.b32.xlu0 %v3073, 64
  %v3080 = vpop.permute.xlu0 %3079
  %3081 = vrot.lane.b32.xlu0 %v3074, 64
  %v3082 = vpop.permute.xlu0 %3081
  %v3085 = vmul.f32 %v3070, %v3080
  %v3086 = vmul.f32 %v3072, %v3082
  %3089 = vrot.lane.b32.xlu0 %v3085, 32
  %v3090 = vpop.permute.xlu0 %3089
  %3091 = vrot.lane.b32.xlu0 %v3086, 32
  %v3092 = vpop.permute.xlu0 %3091
  %v3095 = vadd.f32 %v3075, %v3090
  %v3096 = vadd.f32 %v3076, %v3092
  %v3097 = vtanh.pop %v3095
  %v3098 = vtanh.pop %v3096
  %3101 = vrot.lane.b32.xlu0 %v3097, 64
  %v3102 = vpop.permute.xlu0 %3101
  %3103 = vrot.lane.b32.xlu0 %v3098, 64
  %v3104 = vpop.permute.xlu0 %3103
  %v3107 = vmul.f32 %v3070, %v3102
  %v3108 = vmul.f32 %v3072, %v3104
  %v3111 = vrot.slane %v3108, 7
  %v3112 = vsel %vm768, %v3111, %v3107
  %3113 = vrot.lane.b32.xlu0 %v3112, 32
  %v3114 = vpop.permute.xlu0 %3113
  %v3115 = vsel %vm150, %v3114, 0
  %3117 = vmatprep.subr.mxu0 %v633
  %3118 = vmatpush1.msra.mxu0 %v632
  %3119 = vmatprep.subr.mxu0 %v635
  %3120 = vmatpush1.msra.mxu0 %v634
  %3121 = vmatprep.subr.mxu0 %v637
  %3122 = vmatpush1.msra.mxu0 %v636
  %3123 = vmatprep.subr.mxu0 %v639
  %3124 = vmatpush1.msra.mxu0 %v638
  %3125 = vmatprep.subr.mxu0 0.0
  %3126 = vmatpush1.msra.mxu0 0.0
  %3127 = vmatprep.subr.mxu0 0.0
  %3128 = vmatpush1.msra.mxu0 0.0
  %3129 = vmatprep.subr.mxu0 0.0
  %3130 = vmatpush1.msra.mxu0 0.0
  %3131 = vmatprep.subr.mxu0 0.0
  %3132 = vmatpush1.msra.mxu0 0.0
  %3133 = vmatprep.subr.mxu0 0.0
  %3134 = vmatpush1.msra.mxu0 0.0
  %3135 = vmatprep.subr.mxu0 0.0
  %3136 = vmatpush1.msra.mxu0 0.0
  %3137 = vmatprep.subr.mxu0 0.0
  %3138 = vmatpush1.msra.mxu0 0.0
  %3139 = vmatprep.subr.mxu0 0.0
  %3140 = vmatpush1.msra.mxu0 0.0
  %3141 = vmatprep.subr.mxu0 0.0
  %3142 = vmatpush1.msra.mxu0 0.0
  %3143 = vmatprep.subr.mxu0 0.0
  %3144 = vmatpush1.msra.mxu0 0.0
  %3145 = vmatprep.subr.mxu0 0.0
  %3146 = vmatpush1.msra.mxu0 0.0
  %3147 = vmatprep.subr.mxu0 0.0
  %3148 = vmatpush1.msra.mxu0 0.0
  %3149 = vmatprep.subr.mxu0 0.0
  %3150 = vmatpush1.msra.mxu0 0.0
  %3151 = vmatprep.subr.mxu0 0.0
  %3152 = vmatpush1.msra.mxu0 0.0
  %3153 = vmatprep.subr.mxu0 0.0
  %3154 = vmatpush1.msra.mxu0 0.0
  %3155 = vmatprep.subr.mxu0 0.0
  %3156 = vmatpush1.msra.mxu0 0.0
  %3157 = vmatprep.subr.mxu0 0.0
  %3158 = vmatpush1.msra.mxu0 0.0
  %3159 = vmatprep.subr.mxu0 0.0
  %3160 = vmatpush1.msra.mxu0 0.0
  %3161 = vmatprep.subr.mxu0 0.0
  %3162 = vmatpush1.msra.mxu0 0.0
  %3163 = vmatprep.subr.mxu0 0.0
  %3164 = vmatpush1.msra.mxu0 0.0
  %3165 = vmatprep.subr.mxu0 0.0
  %3166 = vmatpush1.msra.mxu0 0.0
  %3167 = vmatprep.subr.mxu0 0.0
  %3168 = vmatpush1.msra.mxu0 0.0
  %3169 = vmatprep.subr.mxu0 0.0
  %3170 = vmatpush1.msra.mxu0 0.0
  %3171 = vmatprep.subr.mxu0 0.0
  %3172 = vmatpush1.msra.mxu0 0.0
  %3173 = vmatprep.subr.mxu0 0.0
  %3174 = vmatpush1.msra.mxu0 0.0
  %3175 = vmatprep.subr.mxu0 0.0
  %3176 = vmatpush1.msra.mxu0 0.0
  %3177 = vmatprep.subr.mxu0 0.0
  %3178 = vmatpush1.msra.mxu0 0.0
  %3179 = vmatprep.subr.mxu0 0.0
  %3180 = vmatpush1.msra.mxu0 0.0
  %3181 = vmatprep.mubr.f32.mxu0 0.0
  %3182 = vmatmul.mubr.f32.gmra.mrb[0].mxu0 %v3115
  %v3183 = vpop.f32.mrb[0].mxu0
  %v3184 = vadd.f32 0.0, %v3183
  %v3185 = vpop.f32.mrb[0].mxu0
  %v3186 = vadd.f32 0.0, %v3185
  %3187 = vdwg.mxu0
  %v3190 = vunpack.c.l.s4 1966171168
  %v3191 = vunpack.c.0.s8 %v3190
  %v3192 = vlaneseq
  %v3193 = vshrl.u32 %v3192, 7
  %v3194 = vsub.s32 %v3191, %v3193
  %v3195 = vrot.slane %v3186, %v3194
  %v3196 = vcombine.high %v3195, %v3195
  %v3198 = vunpack.c.l.s4 1966171168
  %v3199 = vunpack.c.0.s8 %v3198
  %v3200 = vlaneseq
  %v3201 = vshrl.u32 %v3200, 7
  %v3202 = vsub.s32 %v3199, %v3201
  %v3203 = vrot.slane %v3195, %v3202
  %v3205 = vunpack.c.l.s4 1966171168
  %v3206 = vunpack.c.0.s8 %v3205
  %v3207 = vlaneseq
  %v3208 = vshrl.u32 %v3207, 7
  %v3209 = vsub.s32 %v3206, %v3208
  %v3210 = vrot.slane %v3196, %v3209
  %v3211 = vlaneseq
  %v3212 = vshrl.u32 %v3211, 7
  %v3213 = vsub.s32 0, %v3212
  %v3214 = vrot.slane %v3203, %v3213
  %v3215 = vlaneseq
  %v3216 = vshrl.u32 %v3215, 7
  %v3217 = vsub.s32 0, %v3216
  %v3218 = vrot.slane %v3210, %v3217
  %v3221 = vadd.f32 %v446, %v3214
  %v3222 = vadd.f32 %v451, %v3218
  %v3223 = vtanh.pop %v3221
  %v3224 = vtanh.pop %v3222
  %v3225 = vmul.f32 %v3223, %v630
  %v3226 = vmul.f32 %v3224, %v630
  %v3227 = vsel %vm150, %v3225, 0.0
  %3228 = vadd.xlane.f32.xlu0 %v3227
  %v3229 = vpop.xlane.xlu0 %3228
  %v3230 = vsel %vm150, %v3226, 0.0
  %3231 = vadd.xlane.f32.xlu0 %v3230
  %v3232 = vpop.xlane.xlu0 %3231
  %v3235 = vlaneseq
  %v3236 = vshrl.u32 %v3235, 7
  %v3237 = vsub.s32 %v759, %v3236
  %v3238 = vrot.slane %v3229, %v3237
  %v3239 = vlaneseq
  %v3240 = vshrl.u32 %v3239, 7
  %v3241 = vsub.s32 %v759, %v3240
  %v3242 = vrot.slane %v3232, %v3241
  %v3243 = vsel %vm768, %v3242, %v3238
  %v3245 = vsel %vm771, %v3243, -inf
  %3246 = vmax.xlane.f32.xlu0 %v3245
  %v3247 = vpop.xlane.xlu0 %3246
  %v3249 = vlaneseq
  %v3250 = vshrl.u32 %v3249, 7
  %v3251 = vsub.s32 0, %v3250
  %v3252 = vrot.slane %v3247, %v3251
  %v3253 = vlaneseq
  %v3254 = vshrl.u32 %v3253, 7
  %v3255 = vsub.s32 1, %v3254
  %v3256 = vrot.slane %v3247, %v3255
  %v3259 = vsub.f32 %v3229, %v3252
  %v3260 = vsub.f32 %v3232, %v3256
  %v3261 = vmul.f32 %v3259, 1.442695
  %v3262 = vpow.pop %v3261
  %v3263 = vmul.f32 %v3260, 1.442695
  %v3264 = vpow.pop %v3263
  %3267 = vset.pattern.permute.xlu0 0
  %3268 = vperm.xlu0 %3267, %v3262
  %v3269 = vpop.permute.xlu0 %3268
  %3270 = vset.pattern.permute.xlu0 0
  %3271 = vperm.xlu0 %3270, %v3264
  %v3272 = vpop.permute.xlu0 %3271
  %v3273 = vlaneseq
  %v3274 = vshrl.u32 %v3273, 7
  %v3275 = vsub.s32 %v759, %v3274
  %v3276 = vrot.slane %v3269, %v3275
  %v3277 = vlaneseq
  %v3278 = vshrl.u32 %v3277, 7
  %v3279 = vsub.s32 %v759, %v3278
  %v3280 = vrot.slane %v3272, %v3279
  %v3281 = vsel %vm768, %v3280, %v3276
  %v3283 = vsel %vm771, %v3281, 0.0
  %3284 = vadd.xlane.f32.xlu0 %v3283
  %v3285 = vpop.xlane.xlu0 %3284
  %v3287 = vlaneseq
  %v3288 = vshrl.u32 %v3287, 7
  %v3289 = vsub.s32 0, %v3288
  %v3290 = vrot.slane %v3285, %v3289
  %v3291 = vlaneseq
  %v3292 = vshrl.u32 %v3291, 7
  %v3293 = vsub.s32 1, %v3292
  %v3294 = vrot.slane %v3285, %v3293
  %v3297 = vrcp.pop %v3290
  %v3298 = vmul.f32 %v3262, %v3297
  %v3299 = vrcp.pop %v3294
  %v3300 = vmul.f32 %v3264, %v3299
  %3302 = vset.pattern.permute.xlu0 0
  %3303 = vperm.xlu0 %3302, %v3298
  %v3304 = vpop.permute.xlu0 %3303
  %v3305 = vlaneseq
  %v3306 = vshrl.u32 %v3305, 7
  %v3307 = vsub.s32 %v759, %v3306
  %v3308 = vrot.slane %v3304, %v3307
  %v3309 = vsel %vm836, %v3308, 0
  %3311 = vmatprep.subr.mxu0 0.0
  %3312 = vmatpush1.msra.mxu0 %v525
  %3313 = vmatprep.subr.mxu0 0.0
  %3314 = vmatpush1.msra.mxu0 0.0
  %3315 = vmatprep.subr.mxu0 0.0
  %3316 = vmatpush1.msra.mxu0 0.0
  %3317 = vmatprep.subr.mxu0 0.0
  %3318 = vmatpush1.msra.mxu0 0.0
  %3319 = vmatprep.subr.mxu0 0.0
  %3320 = vmatpush1.msra.mxu0 0.0
  %3321 = vmatprep.subr.mxu0 0.0
  %3322 = vmatpush1.msra.mxu0 0.0
  %3323 = vmatprep.subr.mxu0 0.0
  %3324 = vmatpush1.msra.mxu0 0.0
  %3325 = vmatprep.subr.mxu0 0.0
  %3326 = vmatpush1.msra.mxu0 0.0
  %3327 = vmatprep.subr.mxu0 0.0
  %3328 = vmatpush1.msra.mxu0 0.0
  %3329 = vmatprep.subr.mxu0 0.0
  %3330 = vmatpush1.msra.mxu0 0.0
  %3331 = vmatprep.subr.mxu0 0.0
  %3332 = vmatpush1.msra.mxu0 0.0
  %3333 = vmatprep.subr.mxu0 0.0
  %3334 = vmatpush1.msra.mxu0 0.0
  %3335 = vmatprep.subr.mxu0 0.0
  %3336 = vmatpush1.msra.mxu0 0.0
  %3337 = vmatprep.subr.mxu0 0.0
  %3338 = vmatpush1.msra.mxu0 0.0
  %3339 = vmatprep.subr.mxu0 0.0
  %3340 = vmatpush1.msra.mxu0 0.0
  %3341 = vmatprep.subr.mxu0 0.0
  %3342 = vmatpush1.msra.mxu0 0.0
  %3343 = vmatprep.subr.mxu0 0.0
  %3344 = vmatpush1.msra.mxu0 0.0
  %3345 = vmatprep.subr.mxu0 0.0
  %3346 = vmatpush1.msra.mxu0 0.0
  %3347 = vmatprep.subr.mxu0 0.0
  %3348 = vmatpush1.msra.mxu0 0.0
  %3349 = vmatprep.subr.mxu0 0.0
  %3350 = vmatpush1.msra.mxu0 0.0
  %3351 = vmatprep.subr.mxu0 0.0
  %3352 = vmatpush1.msra.mxu0 0.0
  %3353 = vmatprep.subr.mxu0 0.0
  %3354 = vmatpush1.msra.mxu0 0.0
  %3355 = vmatprep.subr.mxu0 0.0
  %3356 = vmatpush1.msra.mxu0 0.0
  %3357 = vmatprep.subr.mxu0 0.0
  %3358 = vmatpush1.msra.mxu0 0.0
  %3359 = vmatprep.subr.mxu0 0.0
  %3360 = vmatpush1.msra.mxu0 0.0
  %3361 = vmatprep.subr.mxu0 0.0
  %3362 = vmatpush1.msra.mxu0 0.0
  %3363 = vmatprep.subr.mxu0 0.0
  %3364 = vmatpush1.msra.mxu0 0.0
  %3365 = vmatprep.subr.mxu0 0.0
  %3366 = vmatpush1.msra.mxu0 0.0
  %3367 = vmatprep.subr.mxu0 0.0
  %3368 = vmatpush1.msra.mxu0 0.0
  %3369 = vmatprep.subr.mxu0 0.0
  %3370 = vmatpush1.msra.mxu0 0.0
  %3371 = vmatprep.subr.mxu0 0.0
  %3372 = vmatpush1.msra.mxu0 0.0
  %3373 = vmatprep.subr.mxu0 0.0
  %3374 = vmatpush1.msra.mxu0 0.0
  %3375 = vmatprep.mubr.f32.mxu0 0.0
  %3376 = vmatmul.mubr.f32.gmra.mrb[0].mxu0 %v3309
  %v3377 = vpop.f32.mrb[0].mxu0
  %v3378 = vadd.f32 0.0, %v3377
  %v3379 = vpop.f32.mrb[0].mxu0
  %3380 = vdwg.mxu0
  %3382 = vset.pattern.permute.xlu0 0
  %3383 = vperm.xlu0 %3382, %v3300
  %v3384 = vpop.permute.xlu0 %3383
  %v3385 = vlaneseq
  %v3386 = vshrl.u32 %v3385, 7
  %v3387 = vsub.s32 %v759, %v3386
  %v3388 = vrot.slane %v3384, %v3387
  %v3389 = vsel %vm836, %v3388, 0
  %3391 = vmatprep.subr.mxu0 0.0
  %3392 = vmatpush1.msra.mxu0 %v530
  %3393 = vmatprep.subr.mxu0 0.0
  %3394 = vmatpush1.msra.mxu0 0.0
  %3395 = vmatprep.subr.mxu0 0.0
  %3396 = vmatpush1.msra.mxu0 0.0
  %3397 = vmatprep.subr.mxu0 0.0
  %3398 = vmatpush1.msra.mxu0 0.0
  %3399 = vmatprep.subr.mxu0 0.0
  %3400 = vmatpush1.msra.mxu0 0.0
  %3401 = vmatprep.subr.mxu0 0.0
  %3402 = vmatpush1.msra.mxu0 0.0
  %3403 = vmatprep.subr.mxu0 0.0
  %3404 = vmatpush1.msra.mxu0 0.0
  %3405 = vmatprep.subr.mxu0 0.0
  %3406 = vmatpush1.msra.mxu0 0.0
  %3407 = vmatprep.subr.mxu0 0.0
  %3408 = vmatpush1.msra.mxu0 0.0
  %3409 = vmatprep.subr.mxu0 0.0
  %3410 = vmatpush1.msra.mxu0 0.0
  %3411 = vmatprep.subr.mxu0 0.0
  %3412 = vmatpush1.msra.mxu0 0.0
  %3413 = vmatprep.subr.mxu0 0.0
  %3414 = vmatpush1.msra.mxu0 0.0
  %3415 = vmatprep.subr.mxu0 0.0
  %3416 = vmatpush1.msra.mxu0 0.0
  %3417 = vmatprep.subr.mxu0 0.0
  %3418 = vmatpush1.msra.mxu0 0.0
  %3419 = vmatprep.subr.mxu0 0.0
  %3420 = vmatpush1.msra.mxu0 0.0
  %3421 = vmatprep.subr.mxu0 0.0
  %3422 = vmatpush1.msra.mxu0 0.0
  %3423 = vmatprep.subr.mxu0 0.0
  %3424 = vmatpush1.msra.mxu0 0.0
  %3425 = vmatprep.subr.mxu0 0.0
  %3426 = vmatpush1.msra.mxu0 0.0
  %3427 = vmatprep.subr.mxu0 0.0
  %3428 = vmatpush1.msra.mxu0 0.0
  %3429 = vmatprep.subr.mxu0 0.0
  %3430 = vmatpush1.msra.mxu0 0.0
  %3431 = vmatprep.subr.mxu0 0.0
  %3432 = vmatpush1.msra.mxu0 0.0
  %3433 = vmatprep.subr.mxu0 0.0
  %3434 = vmatpush1.msra.mxu0 0.0
  %3435 = vmatprep.subr.mxu0 0.0
  %3436 = vmatpush1.msra.mxu0 0.0
  %3437 = vmatprep.subr.mxu0 0.0
  %3438 = vmatpush1.msra.mxu0 0.0
  %3439 = vmatprep.subr.mxu0 0.0
  %3440 = vmatpush1.msra.mxu0 0.0
  %3441 = vmatprep.subr.mxu0 0.0
  %3442 = vmatpush1.msra.mxu0 0.0
  %3443 = vmatprep.subr.mxu0 0.0
  %3444 = vmatpush1.msra.mxu0 0.0
  %3445 = vmatprep.subr.mxu0 0.0
  %3446 = vmatpush1.msra.mxu0 0.0
  %3447 = vmatprep.subr.mxu0 0.0
  %3448 = vmatpush1.msra.mxu0 0.0
  %3449 = vmatprep.subr.mxu0 0.0
  %3450 = vmatpush1.msra.mxu0 0.0
  %3451 = vmatprep.subr.mxu0 0.0
  %3452 = vmatpush1.msra.mxu0 0.0
  %3453 = vmatprep.subr.mxu0 0.0
  %3454 = vmatpush1.msra.mxu0 0.0
  %3455 = vmatprep.mubr.f32.mxu0 0.0
  %3456 = vmatmul.mubr.f32.gmra.mrb[0].mxu0 %v3389
  %v3457 = vpop.f32.mrb[0].mxu0
  %v3458 = vadd.f32 0.0, %v3457
  %v3459 = vpop.f32.mrb[0].mxu0
  %3460 = vdwg.mxu0
  %v3461 = vrot.slane %v622, 4
  %v3462 = vrot.slane %v622, 5
  %v3465 = vadd.f32 %v3378, %v3461
  %v3466 = vadd.f32 %v3458, %v3462
  %v3468 = vrot.slane %v3184, 1
  %v3471 = vadd.f32 %v3465, %v3184
  %v3472 = vadd.f32 %v3466, %v3468
  %v3473 = vxor.u32 %v3471, 2147483648
  %v3474 = vxor.u32 %v3472, 2147483648
  %v3475 = vmul.f32 %v3473, 1.442695
  %v3476 = vpow.pop %v3475
  %v3477 = vmul.f32 %v3474, 1.442695
  %v3478 = vpow.pop %v3477
  %v3479 = vadd.f32 %v3476, 1.0
  %v3480 = vadd.f32 %v3478, 1.0
  %v3481 = vrcp.pop %v3479
  %v3482 = vmul.f32 1.0, %v3481
  %v3483 = vrcp.pop %v3480
  %v3484 = vmul.f32 1.0, %v3483
  %v3485 = vtanh.pop %v3471
  %v3486 = vtanh.pop %v3472
  %v3487 = vmul.f32 %v3482, %v3095
  %v3488 = vmul.f32 %v3484, %v3096
  %3491 = vrot.lane.b32.xlu0 %v3485, 64
  %v3492 = vpop.permute.xlu0 %3491
  %3493 = vrot.lane.b32.xlu0 %v3486, 64
  %v3494 = vpop.permute.xlu0 %3493
  %v3497 = vmul.f32 %v3482, %v3492
  %v3498 = vmul.f32 %v3484, %v3494
  %3501 = vrot.lane.b32.xlu0 %v3497, 32
  %v3502 = vpop.permute.xlu0 %3501
  %3503 = vrot.lane.b32.xlu0 %v3498, 32
  %v3504 = vpop.permute.xlu0 %3503
  %v3507 = vadd.f32 %v3487, %v3502
  %v3508 = vadd.f32 %v3488, %v3504
  %v3509 = vtanh.pop %v3507
  %v3510 = vtanh.pop %v3508
  %3513 = vrot.lane.b32.xlu0 %v3509, 64
  %v3514 = vpop.permute.xlu0 %3513
  %3515 = vrot.lane.b32.xlu0 %v3510, 64
  %v3516 = vpop.permute.xlu0 %3515
  %v3519 = vmul.f32 %v3482, %v3514
  %v3520 = vmul.f32 %v3484, %v3516
  %v3523 = vrot.slane %v3520, 7
  %v3524 = vsel %vm768, %v3523, %v3519
  %3525 = vrot.lane.b32.xlu0 %v3524, 32
  %v3526 = vpop.permute.xlu0 %3525
  %v3527 = vsel %vm150, %v3526, 0
  %3529 = vmatprep.subr.mxu0 %v633
  %3530 = vmatpush1.msra.mxu0 %v632
  %3531 = vmatprep.subr.mxu0 %v635
  %3532 = vmatpush1.msra.mxu0 %v634
  %3533 = vmatprep.subr.mxu0 %v637
  %3534 = vmatpush1.msra.mxu0 %v636
  %3535 = vmatprep.subr.mxu0 %v639
  %3536 = vmatpush1.msra.mxu0 %v638
  %3537 = vmatprep.subr.mxu0 0.0
  %3538 = vmatpush1.msra.mxu0 0.0
  %3539 = vmatprep.subr.mxu0 0.0
  %3540 = vmatpush1.msra.mxu0 0.0
  %3541 = vmatprep.subr.mxu0 0.0
  %3542 = vmatpush1.msra.mxu0 0.0
  %3543 = vmatprep.subr.mxu0 0.0
  %3544 = vmatpush1.msra.mxu0 0.0
  %3545 = vmatprep.subr.mxu0 0.0
  %3546 = vmatpush1.msra.mxu0 0.0
  %3547 = vmatprep.subr.mxu0 0.0
  %3548 = vmatpush1.msra.mxu0 0.0
  %3549 = vmatprep.subr.mxu0 0.0
  %3550 = vmatpush1.msra.mxu0 0.0
  %3551 = vmatprep.subr.mxu0 0.0
  %3552 = vmatpush1.msra.mxu0 0.0
  %3553 = vmatprep.subr.mxu0 0.0
  %3554 = vmatpush1.msra.mxu0 0.0
  %3555 = vmatprep.subr.mxu0 0.0
  %3556 = vmatpush1.msra.mxu0 0.0
  %3557 = vmatprep.subr.mxu0 0.0
  %3558 = vmatpush1.msra.mxu0 0.0
  %3559 = vmatprep.subr.mxu0 0.0
  %3560 = vmatpush1.msra.mxu0 0.0
  %3561 = vmatprep.subr.mxu0 0.0
  %3562 = vmatpush1.msra.mxu0 0.0
  %3563 = vmatprep.subr.mxu0 0.0
  %3564 = vmatpush1.msra.mxu0 0.0
  %3565 = vmatprep.subr.mxu0 0.0
  %3566 = vmatpush1.msra.mxu0 0.0
  %3567 = vmatprep.subr.mxu0 0.0
  %3568 = vmatpush1.msra.mxu0 0.0
  %3569 = vmatprep.subr.mxu0 0.0
  %3570 = vmatpush1.msra.mxu0 0.0
  %3571 = vmatprep.subr.mxu0 0.0
  %3572 = vmatpush1.msra.mxu0 0.0
  %3573 = vmatprep.subr.mxu0 0.0
  %3574 = vmatpush1.msra.mxu0 0.0
  %3575 = vmatprep.subr.mxu0 0.0
  %3576 = vmatpush1.msra.mxu0 0.0
  %3577 = vmatprep.subr.mxu0 0.0
  %3578 = vmatpush1.msra.mxu0 0.0
  %3579 = vmatprep.subr.mxu0 0.0
  %3580 = vmatpush1.msra.mxu0 0.0
  %3581 = vmatprep.subr.mxu0 0.0
  %3582 = vmatpush1.msra.mxu0 0.0
  %3583 = vmatprep.subr.mxu0 0.0
  %3584 = vmatpush1.msra.mxu0 0.0
  %3585 = vmatprep.subr.mxu0 0.0
  %3586 = vmatpush1.msra.mxu0 0.0
  %3587 = vmatprep.subr.mxu0 0.0
  %3588 = vmatpush1.msra.mxu0 0.0
  %3589 = vmatprep.subr.mxu0 0.0
  %3590 = vmatpush1.msra.mxu0 0.0
  %3591 = vmatprep.subr.mxu0 0.0
  %3592 = vmatpush1.msra.mxu0 0.0
  %3593 = vmatprep.mubr.f32.mxu0 0.0
  %3594 = vmatmul.mubr.f32.gmra.mrb[0].mxu0 %v3527
  %v3595 = vpop.f32.mrb[0].mxu0
  %v3596 = vadd.f32 0.0, %v3595
  %v3597 = vpop.f32.mrb[0].mxu0
  %v3598 = vadd.f32 0.0, %v3597
  %3599 = vdwg.mxu0
  %v3602 = vunpack.c.l.s4 1966171168
  %v3603 = vunpack.c.0.s8 %v3602
  %v3604 = vlaneseq
  %v3605 = vshrl.u32 %v3604, 7
  %v3606 = vsub.s32 %v3603, %v3605
  %v3607 = vrot.slane %v3598, %v3606
  %v3608 = vcombine.high %v3607, %v3607
  %v3610 = vunpack.c.l.s4 1966171168
  %v3611 = vunpack.c.0.s8 %v3610
  %v3612 = vlaneseq
  %v3613 = vshrl.u32 %v3612, 7
  %v3614 = vsub.s32 %v3611, %v3613
  %v3615 = vrot.slane %v3607, %v3614
  %v3617 = vunpack.c.l.s4 1966171168
  %v3618 = vunpack.c.0.s8 %v3617
  %v3619 = vlaneseq
  %v3620 = vshrl.u32 %v3619, 7
  %v3621 = vsub.s32 %v3618, %v3620
  %v3622 = vrot.slane %v3608, %v3621
  %v3623 = vlaneseq
  %v3624 = vshrl.u32 %v3623, 7
  %v3625 = vsub.s32 0, %v3624
  %v3626 = vrot.slane %v3615, %v3625
  %v3627 = vlaneseq
  %v3628 = vshrl.u32 %v3627, 7
  %v3629 = vsub.s32 0, %v3628
  %v3630 = vrot.slane %v3622, %v3629
  %v3633 = vadd.f32 %v446, %v3626
  %v3634 = vadd.f32 %v451, %v3630
  %v3635 = vtanh.pop %v3633
  %v3636 = vtanh.pop %v3634
  %v3637 = vmul.f32 %v3635, %v630
  %v3638 = vmul.f32 %v3636, %v630
  %v3639 = vsel %vm150, %v3637, 0.0
  %3640 = vadd.xlane.f32.xlu0 %v3639
  %v3641 = vpop.xlane.xlu0 %3640
  %v3642 = vsel %vm150, %v3638, 0.0
  %3643 = vadd.xlane.f32.xlu0 %v3642
  %v3644 = vpop.xlane.xlu0 %3643
  %v3647 = vlaneseq
  %v3648 = vshrl.u32 %v3647, 7
  %v3649 = vsub.s32 %v759, %v3648
  %v3650 = vrot.slane %v3641, %v3649
  %v3651 = vlaneseq
  %v3652 = vshrl.u32 %v3651, 7
  %v3653 = vsub.s32 %v759, %v3652
  %v3654 = vrot.slane %v3644, %v3653
  %v3655 = vsel %vm768, %v3654, %v3650
  %v3657 = vsel %vm771, %v3655, -inf
  %3658 = vmax.xlane.f32.xlu0 %v3657
  %v3659 = vpop.xlane.xlu0 %3658
  %v3661 = vlaneseq
  %v3662 = vshrl.u32 %v3661, 7
  %v3663 = vsub.s32 0, %v3662
  %v3664 = vrot.slane %v3659, %v3663
  %v3665 = vlaneseq
  %v3666 = vshrl.u32 %v3665, 7
  %v3667 = vsub.s32 1, %v3666
  %v3668 = vrot.slane %v3659, %v3667
  %v3671 = vsub.f32 %v3641, %v3664
  %v3672 = vsub.f32 %v3644, %v3668
  %v3673 = vmul.f32 %v3671, 1.442695
  %v3674 = vpow.pop %v3673
  %v3675 = vmul.f32 %v3672, 1.442695
  %v3676 = vpow.pop %v3675
  %3679 = vset.pattern.permute.xlu0 0
  %3680 = vperm.xlu0 %3679, %v3674
  %v3681 = vpop.permute.xlu0 %3680
  %3682 = vset.pattern.permute.xlu0 0
  %3683 = vperm.xlu0 %3682, %v3676
  %v3684 = vpop.permute.xlu0 %3683
  %v3685 = vlaneseq
  %v3686 = vshrl.u32 %v3685, 7
  %v3687 = vsub.s32 %v759, %v3686
  %v3688 = vrot.slane %v3681, %v3687
  %v3689 = vlaneseq
  %v3690 = vshrl.u32 %v3689, 7
  %v3691 = vsub.s32 %v759, %v3690
  %v3692 = vrot.slane %v3684, %v3691
  %v3693 = vsel %vm768, %v3692, %v3688
  %v3695 = vsel %vm771, %v3693, 0.0
  %3696 = vadd.xlane.f32.xlu0 %v3695
  %v3697 = vpop.xlane.xlu0 %3696
  %v3699 = vlaneseq
  %v3700 = vshrl.u32 %v3699, 7
  %v3701 = vsub.s32 0, %v3700
  %v3702 = vrot.slane %v3697, %v3701
  %v3703 = vlaneseq
  %v3704 = vshrl.u32 %v3703, 7
  %v3705 = vsub.s32 1, %v3704
  %v3706 = vrot.slane %v3697, %v3705
  %v3709 = vrcp.pop %v3702
  %v3710 = vmul.f32 %v3674, %v3709
  %v3711 = vrcp.pop %v3706
  %v3712 = vmul.f32 %v3676, %v3711
  %3714 = vset.pattern.permute.xlu0 0
  %3715 = vperm.xlu0 %3714, %v3710
  %v3716 = vpop.permute.xlu0 %3715
  %v3717 = vlaneseq
  %v3718 = vshrl.u32 %v3717, 7
  %v3719 = vsub.s32 %v759, %v3718
  %v3720 = vrot.slane %v3716, %v3719
  %v3721 = vsel %vm836, %v3720, 0
  %3723 = vmatprep.subr.mxu0 0.0
  %3724 = vmatpush1.msra.mxu0 %v525
  %3725 = vmatprep.subr.mxu0 0.0
  %3726 = vmatpush1.msra.mxu0 0.0
  %3727 = vmatprep.subr.mxu0 0.0
  %3728 = vmatpush1.msra.mxu0 0.0
  %3729 = vmatprep.subr.mxu0 0.0
  %3730 = vmatpush1.msra.mxu0 0.0
  %3731 = vmatprep.subr.mxu0 0.0
  %3732 = vmatpush1.msra.mxu0 0.0
  %3733 = vmatprep.subr.mxu0 0.0
  %3734 = vmatpush1.msra.mxu0 0.0
  %3735 = vmatprep.subr.mxu0 0.0
  %3736 = vmatpush1.msra.mxu0 0.0
  %3737 = vmatprep.subr.mxu0 0.0
  %3738 = vmatpush1.msra.mxu0 0.0
  %3739 = vmatprep.subr.mxu0 0.0
  %3740 = vmatpush1.msra.mxu0 0.0
  %3741 = vmatprep.subr.mxu0 0.0
  %3742 = vmatpush1.msra.mxu0 0.0
  %3743 = vmatprep.subr.mxu0 0.0
  %3744 = vmatpush1.msra.mxu0 0.0
  %3745 = vmatprep.subr.mxu0 0.0
  %3746 = vmatpush1.msra.mxu0 0.0
  %3747 = vmatprep.subr.mxu0 0.0
  %3748 = vmatpush1.msra.mxu0 0.0
  %3749 = vmatprep.subr.mxu0 0.0
  %3750 = vmatpush1.msra.mxu0 0.0
  %3751 = vmatprep.subr.mxu0 0.0
  %3752 = vmatpush1.msra.mxu0 0.0
  %3753 = vmatprep.subr.mxu0 0.0
  %3754 = vmatpush1.msra.mxu0 0.0
  %3755 = vmatprep.subr.mxu0 0.0
  %3756 = vmatpush1.msra.mxu0 0.0
  %3757 = vmatprep.subr.mxu0 0.0
  %3758 = vmatpush1.msra.mxu0 0.0
  %3759 = vmatprep.subr.mxu0 0.0
  %3760 = vmatpush1.msra.mxu0 0.0
  %3761 = vmatprep.subr.mxu0 0.0
  %3762 = vmatpush1.msra.mxu0 0.0
  %3763 = vmatprep.subr.mxu0 0.0
  %3764 = vmatpush1.msra.mxu0 0.0
  %3765 = vmatprep.subr.mxu0 0.0
  %3766 = vmatpush1.msra.mxu0 0.0
  %3767 = vmatprep.subr.mxu0 0.0
  %3768 = vmatpush1.msra.mxu0 0.0
  %3769 = vmatprep.subr.mxu0 0.0
  %3770 = vmatpush1.msra.mxu0 0.0
  %3771 = vmatprep.subr.mxu0 0.0
  %3772 = vmatpush1.msra.mxu0 0.0
  %3773 = vmatprep.subr.mxu0 0.0
  %3774 = vmatpush1.msra.mxu0 0.0
  %3775 = vmatprep.subr.mxu0 0.0
  %3776 = vmatpush1.msra.mxu0 0.0
  %3777 = vmatprep.subr.mxu0 0.0
  %3778 = vmatpush1.msra.mxu0 0.0
  %3779 = vmatprep.subr.mxu0 0.0
  %3780 = vmatpush1.msra.mxu0 0.0
  %3781 = vmatprep.subr.mxu0 0.0
  %3782 = vmatpush1.msra.mxu0 0.0
  %3783 = vmatprep.subr.mxu0 0.0
  %3784 = vmatpush1.msra.mxu0 0.0
  %3785 = vmatprep.subr.mxu0 0.0
  %3786 = vmatpush1.msra.mxu0 0.0
  %3787 = vmatprep.mubr.f32.mxu0 0.0
  %3788 = vmatmul.mubr.f32.gmra.mrb[0].mxu0 %v3721
  %v3789 = vpop.f32.mrb[0].mxu0
  %v3790 = vadd.f32 0.0, %v3789
  %v3791 = vpop.f32.mrb[0].mxu0
  %3792 = vdwg.mxu0
  %3794 = vset.pattern.permute.xlu0 0
  %3795 = vperm.xlu0 %3794, %v3712
  %v3796 = vpop.permute.xlu0 %3795
  %v3797 = vlaneseq
  %v3798 = vshrl.u32 %v3797, 7
  %v3799 = vsub.s32 %v759, %v3798
  %v3800 = vrot.slane %v3796, %v3799
  %v3801 = vsel %vm836, %v3800, 0
  %3803 = vmatprep.subr.mxu0 0.0
  %3804 = vmatpush1.msra.mxu0 %v530
  %3805 = vmatprep.subr.mxu0 0.0
  %3806 = vmatpush1.msra.mxu0 0.0
  %3807 = vmatprep.subr.mxu0 0.0
  %3808 = vmatpush1.msra.mxu0 0.0
  %3809 = vmatprep.subr.mxu0 0.0
  %3810 = vmatpush1.msra.mxu0 0.0
  %3811 = vmatprep.subr.mxu0 0.0
  %3812 = vmatpush1.msra.mxu0 0.0
  %3813 = vmatprep.subr.mxu0 0.0
  %3814 = vmatpush1.msra.mxu0 0.0
  %3815 = vmatprep.subr.mxu0 0.0
  %3816 = vmatpush1.msra.mxu0 0.0
  %3817 = vmatprep.subr.mxu0 0.0
  %3818 = vmatpush1.msra.mxu0 0.0
  %3819 = vmatprep.subr.mxu0 0.0
  %3820 = vmatpush1.msra.mxu0 0.0
  %3821 = vmatprep.subr.mxu0 0.0
  %3822 = vmatpush1.msra.mxu0 0.0
  %3823 = vmatprep.subr.mxu0 0.0
  %3824 = vmatpush1.msra.mxu0 0.0
  %3825 = vmatprep.subr.mxu0 0.0
  %3826 = vmatpush1.msra.mxu0 0.0
  %3827 = vmatprep.subr.mxu0 0.0
  %3828 = vmatpush1.msra.mxu0 0.0
  %3829 = vmatprep.subr.mxu0 0.0
  %3830 = vmatpush1.msra.mxu0 0.0
  %3831 = vmatprep.subr.mxu0 0.0
  %3832 = vmatpush1.msra.mxu0 0.0
  %3833 = vmatprep.subr.mxu0 0.0
  %3834 = vmatpush1.msra.mxu0 0.0
  %3835 = vmatprep.subr.mxu0 0.0
  %3836 = vmatpush1.msra.mxu0 0.0
  %3837 = vmatprep.subr.mxu0 0.0
  %3838 = vmatpush1.msra.mxu0 0.0
  %3839 = vmatprep.subr.mxu0 0.0
  %3840 = vmatpush1.msra.mxu0 0.0
  %3841 = vmatprep.subr.mxu0 0.0
  %3842 = vmatpush1.msra.mxu0 0.0
  %3843 = vmatprep.subr.mxu0 0.0
  %3844 = vmatpush1.msra.mxu0 0.0
  %3845 = vmatprep.subr.mxu0 0.0
  %3846 = vmatpush1.msra.mxu0 0.0
  %3847 = vmatprep.subr.mxu0 0.0
  %3848 = vmatpush1.msra.mxu0 0.0
  %3849 = vmatprep.subr.mxu0 0.0
  %3850 = vmatpush1.msra.mxu0 0.0
  %3851 = vmatprep.subr.mxu0 0.0
  %3852 = vmatpush1.msra.mxu0 0.0
  %3853 = vmatprep.subr.mxu0 0.0
  %3854 = vmatpush1.msra.mxu0 0.0
  %3855 = vmatprep.subr.mxu0 0.0
  %3856 = vmatpush1.msra.mxu0 0.0
  %3857 = vmatprep.subr.mxu0 0.0
  %3858 = vmatpush1.msra.mxu0 0.0
  %3859 = vmatprep.subr.mxu0 0.0
  %3860 = vmatpush1.msra.mxu0 0.0
  %3861 = vmatprep.subr.mxu0 0.0
  %3862 = vmatpush1.msra.mxu0 0.0
  %3863 = vmatprep.subr.mxu0 0.0
  %3864 = vmatpush1.msra.mxu0 0.0
  %3865 = vmatprep.subr.mxu0 0.0
  %3866 = vmatpush1.msra.mxu0 0.0
  %3867 = vmatprep.mubr.f32.mxu0 0.0
  %3868 = vmatmul.mubr.f32.gmra.mrb[0].mxu0 %v3801
  %v3869 = vpop.f32.mrb[0].mxu0
  %v3870 = vadd.f32 0.0, %v3869
  %v3871 = vpop.f32.mrb[0].mxu0
  %3872 = vdwg.mxu0
  %v3873 = vrot.slane %v622, 6
  %v3874 = vrot.slane %v622, 7
  %v3877 = vadd.f32 %v3790, %v3873
  %v3878 = vadd.f32 %v3870, %v3874
  %v3880 = vrot.slane %v3596, 1
  %v3883 = vadd.f32 %v3877, %v3596
  %v3884 = vadd.f32 %v3878, %v3880
  %v3885 = vxor.u32 %v3883, 2147483648
  %v3886 = vxor.u32 %v3884, 2147483648
  %v3887 = vmul.f32 %v3885, 1.442695
  %v3888 = vpow.pop %v3887
  %v3889 = vmul.f32 %v3886, 1.442695
  %v3890 = vpow.pop %v3889
  %v3891 = vadd.f32 %v3888, 1.0
  %v3892 = vadd.f32 %v3890, 1.0
  %v3893 = vrcp.pop %v3891
  %v3894 = vmul.f32 1.0, %v3893
  %v3895 = vrcp.pop %v3892
  %v3896 = vmul.f32 1.0, %v3895
  %v3897 = vtanh.pop %v3883
  %v3898 = vtanh.pop %v3884
  %v3899 = vmul.f32 %v3894, %v3507
  %v3900 = vmul.f32 %v3896, %v3508
  %3903 = vrot.lane.b32.xlu0 %v3897, 64
  %v3904 = vpop.permute.xlu0 %3903
  %3905 = vrot.lane.b32.xlu0 %v3898, 64
  %v3906 = vpop.permute.xlu0 %3905
  %v3909 = vmul.f32 %v3894, %v3904
  %v3910 = vmul.f32 %v3896, %v3906
  %3913 = vrot.lane.b32.xlu0 %v3909, 32
  %v3914 = vpop.permute.xlu0 %3913
  %3915 = vrot.lane.b32.xlu0 %v3910, 32
  %v3916 = vpop.permute.xlu0 %3915
  %v3919 = vadd.f32 %v3899, %v3914
  %v3920 = vadd.f32 %v3900, %v3916
  %v3921 = vtanh.pop %v3919
  %v3922 = vtanh.pop %v3920
  %3925 = vrot.lane.b32.xlu0 %v3921, 64
  %v3926 = vpop.permute.xlu0 %3925
  %3927 = vrot.lane.b32.xlu0 %v3922, 64
  %v3928 = vpop.permute.xlu0 %3927
  %v3931 = vmul.f32 %v3894, %v3926
  %v3932 = vmul.f32 %v3896, %v3928
  %v3934 = vrot.slane %v1459, 6
  %v3935 = vrot.slane %v1460, 5
  %vm3936 = vcmask 1043459
  %v3937 = vsel %vm3936, %v3935, %v3934
  %v3939 = vrot.slane %v1871, 4
  %v3940 = vrot.slane %v1872, 3
  %vm3941 = vcmask 1045509
  %v3942 = vsel %vm3941, %v3940, %v3939
  %v3944 = vrot.slane %v2283, 2
  %v3945 = vrot.slane %v2284, 1
  %vm3946 = vcmask 1047559
  %v3947 = vsel %vm3946, %v3945, %v3944
  %v3950 = vrot.slane %v3107, 6
  %v3951 = vrot.slane %v3108, 5
  %v3952 = vsel %vm3936, %v3951, %v3950
  %v3954 = vrot.slane %v3519, 4
  %v3955 = vrot.slane %v3520, 3
  %v3956 = vsel %vm3941, %v3955, %v3954
  %v3960 = vrot.slane %v3931, 2
  %v3961 = vrot.slane %v3932, 1
  %v3962 = vsel %vm3946, %v3961, %v3960
  %vm3964 = vcmask 1041408
  %v3965 = vsel %vm3964, %v1052, %v3937
  %vm3966 = vcmask 1043456
  %v3967 = vsel %vm3966, %v3965, %v3942
  %vm3968 = vcmask 1045504
  %v3969 = vsel %vm3968, %v3967, %v3947
  %v3970 = vsel %vm3964, %v2700, %v3952
  %v3971 = vsel %vm3966, %v3970, %v3956
  %v3972 = vsel %vm3968, %v3971, %v3962
  %v3973 = vld [vmem:[%s12] sm:$0xff]
  %v3974 = vld [vmem:[%s12 + $0x8] sm:$0xff]
  %v3975 = vld [vmem:[%s12 + $0x10] sm:$0xff]
  %v3976 = vld [vmem:[%s12 + $0x18] sm:$0xff]
  %v3977 = vld [vmem:[%s13] sm:$0x1]
  %v3979 = vlaneseq
  %v3980 = vshrl.u32 %v3979, 7
  %v3981 = vsub.s32 0, %v3980
  %v3982 = vrot.slane %v3977, %v3981
  %3986 = vrot.lane.b32.xlu0 %v3969, 32
  %v3987 = vpop.permute.xlu0 %3986
  %3988 = vrot.lane.b32.xlu0 %v3972, 32
  %v3989 = vpop.permute.xlu0 %3988
  %v3990 = vsel %vm150, %v3987, 0
  %v3992 = vsel %vm150, %v3989, 0
  %3994 = vmatprep.subr.mxu0 0.0
  %3995 = vmatpush1.msra.mxu0 %v3973
  %3996 = vmatprep.subr.mxu0 0.0
  %3997 = vmatpush1.msra.mxu0 %v3974
  %3998 = vmatprep.subr.mxu0 0.0
  %3999 = vmatpush1.msra.mxu0 %v3975
  %4000 = vmatprep.subr.mxu0 0.0
  %4001 = vmatpush1.msra.mxu0 %v3976
  %4002 = vmatprep.subr.mxu0 0.0
  %4003 = vmatpush1.msra.mxu0 0.0
  %4004 = vmatprep.subr.mxu0 0.0
  %4005 = vmatpush1.msra.mxu0 0.0
  %4006 = vmatprep.subr.mxu0 0.0
  %4007 = vmatpush1.msra.mxu0 0.0
  %4008 = vmatprep.subr.mxu0 0.0
  %4009 = vmatpush1.msra.mxu0 0.0
  %4010 = vmatprep.subr.mxu0 0.0
  %4011 = vmatpush1.msra.mxu0 0.0
  %4012 = vmatprep.subr.mxu0 0.0
  %4013 = vmatpush1.msra.mxu0 0.0
  %4014 = vmatprep.subr.mxu0 0.0
  %4015 = vmatpush1.msra.mxu0 0.0
  %4016 = vmatprep.subr.mxu0 0.0
  %4017 = vmatpush1.msra.mxu0 0.0
  %4018 = vmatprep.subr.mxu0 0.0
  %4019 = vmatpush1.msra.mxu0 0.0
  %4020 = vmatprep.subr.mxu0 0.0
  %4021 = vmatpush1.msra.mxu0 0.0
  %4022 = vmatprep.subr.mxu0 0.0
  %4023 = vmatpush1.msra.mxu0 0.0
  %4024 = vmatprep.subr.mxu0 0.0
  %4025 = vmatpush1.msra.mxu0 0.0
  %4026 = vmatprep.subr.mxu0 0.0
  %4027 = vmatpush1.msra.mxu0 0.0
  %4028 = vmatprep.subr.mxu0 0.0
  %4029 = vmatpush1.msra.mxu0 0.0
  %4030 = vmatprep.subr.mxu0 0.0
  %4031 = vmatpush1.msra.mxu0 0.0
  %4032 = vmatprep.subr.mxu0 0.0
  %4033 = vmatpush1.msra.mxu0 0.0
  %4034 = vmatprep.subr.mxu0 0.0
  %4035 = vmatpush1.msra.mxu0 0.0
  %4036 = vmatprep.subr.mxu0 0.0
  %4037 = vmatpush1.msra.mxu0 0.0
  %4038 = vmatprep.subr.mxu0 0.0
  %4039 = vmatpush1.msra.mxu0 0.0
  %4040 = vmatprep.subr.mxu0 0.0
  %4041 = vmatpush1.msra.mxu0 0.0
  %4042 = vmatprep.subr.mxu0 0.0
  %4043 = vmatpush1.msra.mxu0 0.0
  %4044 = vmatprep.subr.mxu0 0.0
  %4045 = vmatpush1.msra.mxu0 0.0
  %4046 = vmatprep.subr.mxu0 0.0
  %4047 = vmatpush1.msra.mxu0 0.0
  %4048 = vmatprep.subr.mxu0 0.0
  %4049 = vmatpush1.msra.mxu0 0.0
  %4050 = vmatprep.subr.mxu0 0.0
  %4051 = vmatpush1.msra.mxu0 0.0
  %4052 = vmatprep.subr.mxu0 0.0
  %4053 = vmatpush1.msra.mxu0 0.0
  %4054 = vmatprep.subr.mxu0 0.0
  %4055 = vmatpush1.msra.mxu0 0.0
  %4056 = vmatprep.subr.mxu0 0.0
  %4057 = vmatpush1.msra.mxu0 0.0
  %4058 = vmatprep.mubr.f32.mxu0 0.0
  %4059 = vmatmul.mubr.f32.gmra.mrb[0].mxu0 %v3990
  %v4060 = vpop.f32.mrb[0].mxu0
  %v4061 = vadd.f32 %v3982, %v4060
  %v4062 = vpop.f32.mrb[0].mxu0
  %4063 = vmatprep.mubr.f32.mxu0 0.0
  %4064 = vmatmul.mubr.f32.gmra.mrb[0].mxu0 %v3992
  %v4065 = vpop.f32.mrb[0].mxu0
  %v4066 = vadd.f32 %v3982, %v4065
  %v4067 = vpop.f32.mrb[0].mxu0
  %4068 = vdwg.mxu0
  %4069 = vst.msk [vmem:[%s14] sm:$0xff] %vm253, %v4061
  %4070 = vst.msk [vmem:[%s14 + $0x8] sm:$0xff] %vm253, %v4066
  // Predicated region
  $region58: #{recognizer_forward.1} parent=0 // pred_check
    _
  $region59: #{recognizer_forward.1} parent=0 // pred_check_branch
    %4072 = sbr.rel (0) target = $region61
  $region60: #{recognizer_forward.1} parent=0 // pred_region
    _
  $region61: #{recognizer_forward.1} parent=0 // pred_fallthru
    _
  // Predicated region
  $region62: #{recognizer_forward.1} parent=0 // pred_check
    _
  $region63: #{recognizer_forward.1} parent=0 // pred_check_branch
    %4074 = sbr.rel (0) target = $region65
  $region64: #{recognizer_forward.1} parent=0 // pred_region
    _
  $region65: #{recognizer_forward.1} parent=0 // pred_fallthru
    _

</llo_original>
